<compile_context>
chip_gen: v7x
topology: tpu7x:2x2x1
jax: 0.10.0
libtpu: 0.0.40
codegen_flags: <defaults>
</compile_context>

<pallas_src>
import functools

import jax
import jax.numpy as jnp
from jax import lax
from jax.experimental import pallas as pl
from jax.experimental.pallas import tpu as pltpu

EPS = 1e-5


def _round_up(x, m):
    return ((x + m - 1) // m) * m


# ----------------------------- in-kernel helper (trace-time) -----------------------------
def _bn_act(y, gamma, beta, relu):
    """Training-mode batch norm over rows of an (R, C) tile; single-pass stats, fused scale."""
    inv_n = 1.0 / y.shape[0]
    mean = jnp.sum(y, axis=0, keepdims=True) * inv_n
    var = jnp.sum(y * y, axis=0, keepdims=True) * inv_n - mean * mean
    var = jnp.maximum(var, 0.0)                       # guard E[x^2]-E[x]^2 cancellation
    scale = gamma * lax.rsqrt(var + EPS)              # fold gamma * rsqrt(var+eps)
    out = y * scale + (beta - mean * scale)
    return jnp.maximum(out, 0.0) if relu else out


# ------------------------------------- Pallas kernel --------------------------------------
def block_kernel(x_ref, wA_ref, wB_ref, bn_ref, out_ref, xp_ref, *,
                 N, L, CIN, COUT, GWPAD, CPAD, K1, K2, K3):
    P1, P2, P3 = (K1 - 1) // 2, (K2 - 1) // 2, (K3 - 1) // 2
    PMAX = max(P1, P2, P3)
    NL = N * L

    bn = bn_ref[...]                                  # (8, WB) f32 — one small load
    g1, b1 = bn[0:1, :GWPAD], bn[1:2, :GWPAD]
    g2, b2 = bn[2:3, :GWPAD], bn[3:4, :GWPAD]
    g3, b3 = bn[4:5, :CPAD], bn[5:6, :CPAD]
    gs, bs = bn[6:7, :CPAD], bn[7:8, :CPAD]

    # Zero the halo scratch once; halo rows stay zero for all three convs.
    xp_ref[...] = jnp.zeros(xp_ref.shape, xp_ref.dtype)

    # Stage the input NCL -> NLC in VMEM (transpose fused into the kernel, no wrapper HBM pass).
    for n in range(N):                                # TODO(synk): becomes a grid axis for big N
        xp_ref[n, PMAX:PMAX + L, 0:CIN] = jnp.transpose(x_ref[n])

    def conv_taps(w_ref, row0, K, P, ncols):
        """'same' 1-D conv as K per-tap MXU matmuls: bf16 operands, f32 accumulation."""
        base = PMAX - P
        acc = jnp.zeros((NL, ncols), jnp.float32)
        for k in range(K):                            # K is static (7 / 11 / 7)
            xk = xp_ref[:, base + k:base + k + L, :].reshape(NL, GWPAD)
            wk = w_ref[row0 + k * GWPAD:row0 + (k + 1) * GWPAD, 0:ncols]
            acc = acc + jnp.dot(xk.astype(jnp.bfloat16), wk,
                                preferred_element_type=jnp.float32)
        return acc

    # conv1 + shortcut fused in one matmul chain: cols [0,GWPAD)=conv1, [GWPAD,GWPAD+CPAD)=shortcut.
    acc1 = conv_taps(wA_ref, 0, K1, P1, GWPAD + CPAD)
    h1 = _bn_act(acc1[:, :GWPAD], g1, b1, relu=True)
    sc = _bn_act(acc1[:, GWPAD:], gs, bs, relu=False)

    # conv2 (grouped, block-diagonal dense weights — GW <= 128 so one MXU pass per tap).
    xp_ref[:, PMAX:PMAX + L, :] = h1.reshape(N, L, GWPAD)
    h2 = _bn_act(conv_taps(wB_ref, 0, K2, P2, GWPAD), g2, b2, relu=True)

    # conv3.
    xp_ref[:, PMAX:PMAX + L, :] = h2.reshape(N, L, GWPAD)
    h3 = _bn_act(conv_taps(wB_ref, K2 * GWPAD, K3, P3, CPAD), g3, b3, relu=False)

    # Residual add + ReLU, then write the output directly in its final NCL layout.
    y = jnp.maximum(h3 + sc, 0.0)                     # (N*L, CPAD) f32
    for n in range(N):
        out_ref[n] = jnp.transpose(y[n * L:(n + 1) * L, :COUT])


# ------------------------- one-time weight preprocessing (hoisted) -------------------------
def prepare_block_params(params, *, cardinality, bottleneck_width, in_planes):
    GW = cardinality * bottleneck_width
    COUT = 2 * GW                                     # expansion = 2
    GWPAD = _round_up(GW, 128)                        # lane-dense intermediate width
    CPAD = _round_up(COUT, 128)                       # lane-dense output width
    WB = max(GWPAD, CPAD)
    K1, K2, K3 = 7, 11, 7
    P1 = (K1 - 1) // 2
    cpg = GW // cardinality

    f32 = lambda a: jnp.asarray(a, jnp.float32)

    # conv1 per-tap [k, c_in, c_out], contraction padded to GWPAD, output cols padded to GWPAD.
    w1 = jnp.transpose(f32(params["w1"]), (2, 1, 0))                      # (K1, Cin, GW)
    w1 = jnp.pad(w1, ((0, 0), (0, GWPAD - in_planes), (0, GWPAD - GW)))

    # shortcut 1x1 conv folded into conv1's centre tap, columns [GWPAD, GWPAD+CPAD).
    ws = jnp.transpose(f32(params["ws"])[:, :, 0], (1, 0))                # (Cin, COUT)
    ws = jnp.pad(ws, ((0, GWPAD - in_planes), (0, CPAD - COUT)))
    ws_taps = jnp.zeros((K1, GWPAD, CPAD), jnp.float32).at[P1].set(ws)

    wA = jnp.concatenate([w1, ws_taps], axis=-1)                          # (K1, GWPAD, GWPAD+CPAD)
    wA = wA.reshape(K1 * GWPAD, GWPAD + CPAD).astype(jnp.bfloat16)

    # grouped conv2 -> block-diagonal dense per tap [k, c_in, c_out] (fine while GW <= 128).
    w2g = f32(params["w2"]).reshape(cardinality, cpg, cpg, K2)            # (g, o, i, k)
    w2_dense = jnp.einsum("goik,gh->gohik", w2g,
                          jnp.eye(cardinality, dtype=jnp.float32)).reshape(GW, GW, K2)
    w2 = jnp.transpose(w2_dense, (2, 1, 0))                               # (K2, in, out)
    w2 = jnp.pad(w2, ((0, 0), (0, GWPAD - GW), (0, WB - GW)))

    # conv3 per-tap [k, c_in, c_out].
    w3 = jnp.transpose(f32(params["w3"]), (2, 1, 0))                      # (K3, GW, COUT)
    w3 = jnp.pad(w3, ((0, 0), (0, GWPAD - GW), (0, WB - COUT)))

    wB = jnp.concatenate([w2, w3], axis=0).reshape((K2 + K3) * GWPAD, WB).astype(jnp.bfloat16)

    def row(v, width):
        v = f32(v).reshape(1, -1)
        return jnp.pad(v, ((0, 0), (0, width - v.shape[1])))

    bn = jnp.concatenate([
        row(params["g1"], WB), row(params["b1"], WB),
        row(params["g2"], WB), row(params["b2"], WB),
        row(params["g3"], WB), row(params["b3"], WB),
        row(params["gs"], WB), row(params["bs"], WB)], axis=0)            # (8, WB) f32

    prep = dict(wA=wA, wB=wB, bn=bn)
    meta = dict(GW=GW, COUT=COUT, GWPAD=GWPAD, CPAD=CPAD, WB=WB, K1=K1, K2=K2, K3=K3)
    return prep, meta


# --------------------------------------- forward ------------------------------------------
def block_forward(x_ncl, prep, meta):
    """x_ncl: (N, C_in, L) float32, NCL like PyTorch.  Returns (N, Cout, L)."""
    N, CIN, L = x_ncl.shape
    PMAX = max((meta["K1"] - 1) // 2, (meta["K2"] - 1) // 2, (meta["K3"] - 1) // 2)

    kernel = functools.partial(
        block_kernel, N=N, L=L, CIN=CIN, COUT=meta["COUT"],
        GWPAD=meta["GWPAD"], CPAD=meta["CPAD"],
        K1=meta["K1"], K2=meta["K2"], K3=meta["K3"])

    vmem = pl.BlockSpec(memory_space=pltpu.MemorySpace.VMEM)

    # TODO(synk): add a grid over (N, L) tiles + two-pass BN for production sizes (megacore on
    #             v7x via dimension_semantics=("parallel", ...)); size tiles for 64 MiB VMEM.
    return pl.pallas_call(
        kernel,
        out_shape=jax.ShapeDtypeStruct((N, meta["COUT"], L), jnp.float32),
        in_specs=[vmem] * 4,
        out_specs=vmem,
        scratch_shapes=[pltpu.VMEM((N, L + 2 * PMAX, meta["GWPAD"]), jnp.float32)],
        compiler_params=pltpu.CompilerParams(
            # working set here is ~1.2 MiB; 16 MiB is safe on v5e/v6e/v7x defaults
            vmem_limit_bytes=16 * 1024 * 1024,
        ),
    )(x_ncl.astype(jnp.float32), prep["wA"], prep["wB"], prep["bn"])


# --------------------------- pure-JAX reference (NCL, like PyTorch) ---------------------------
def block_reference(x, params, cardinality):
    def bn(y, g, b):
        mean = y.mean(axis=(0, 2), keepdims=True)
        var = ((y - mean) ** 2).mean(axis=(0, 2), keepdims=True)
        return (y - mean) / jnp.sqrt(var + EPS) * g.reshape(1, -1, 1) + b.reshape(1, -1, 1)

    def conv1d(y, w, pad, groups=1):
        return lax.conv_general_dilated(
            y, w, window_strides=(1,), padding=[(pad, pad)],
            dimension_numbers=("NCH", "OIH", "NCH"), feature_group_count=groups)

    out = jax.nn.relu(bn(conv1d(x, params["w1"], 3), params["g1"], params["b1"]))
    out = jax.nn.relu(bn(conv1d(out, params["w2"], 5, groups=cardinality),
                         params["g2"], params["b2"]))
    out = bn(conv1d(out, params["w3"], 3), params["g3"], params["b3"])
    sc = bn(conv1d(x, params["ws"], 0), params["gs"], params["bs"])
    return jax.nn.relu(out + sc)


if __name__ == "__main__":
    # Small shapes consistent with the module: Block(in_planes=8, cardinality=4, bottleneck_width=4)
    N, Cin, L = 2, 8, 16
    cardinality, bottleneck_width = 4, 4
    GW = cardinality * bottleneck_width          # 16
    Cout = 2 * GW                                # 32

    key = jax.random.PRNGKey(0)
    ks = jax.random.split(key, 16)
    params = {
        "w1": 0.1 * jax.random.normal(ks[0], (GW, Cin, 7), jnp.float32),
        "w2": 0.1 * jax.random.normal(ks[1], (GW, GW // cardinality, 11), jnp.float32),
        "w3": 0.1 * jax.random.normal(ks[2], (Cout, GW, 7), jnp.float32),
        "ws": 0.1 * jax.random.normal(ks[3], (Cout, Cin, 1), jnp.float32),
        "g1": 1.0 + 0.1 * jax.random.normal(ks[4], (GW,), jnp.float32),
        "b1": 0.1 * jax.random.normal(ks[5], (GW,), jnp.float32),
        "g2": 1.0 + 0.1 * jax.random.normal(ks[6], (GW,), jnp.float32),
        "b2": 0.1 * jax.random.normal(ks[7], (GW,), jnp.float32),
        "g3": 1.0 + 0.1 * jax.random.normal(ks[8], (Cout,), jnp.float32),
        "b3": 0.1 * jax.random.normal(ks[9], (Cout,), jnp.float32),
        "gs": 1.0 + 0.1 * jax.random.normal(ks[10], (Cout,), jnp.float32),
        "bs": 0.1 * jax.random.normal(ks[11], (Cout,), jnp.float32),
    }
    x = jax.random.normal(ks[12], (N, Cin, L), jnp.float32)

    # One-time preprocessing (hoisted out of the per-call path), then the jitted forward.
    prep, meta = prepare_block_params(params, cardinality=cardinality,
                                      bottleneck_width=bottleneck_width, in_planes=Cin)
    fwd = jax.jit(functools.partial(block_forward, meta=meta))

    out = jax.block_until_ready(fwd(x, prep))
    ref = jax.block_until_ready(block_reference(x, params, cardinality))

    assert out.shape == (N, Cout, L), out.shape
    # bf16 MXU operands (f32 accumulation) -> looser tolerance than the f32-only variant.
    assert jnp.allclose(out, ref, atol=5e-2, rtol=5e-2), float(jnp.max(jnp.abs(out - ref)))

    print("KERNEL_OK")
</pallas_src>

<mosaic_0001>
module attributes {stable_mosaic.version = 11 : i64} {
  func.func @block_kernel(%arg0: memref<2x8x16xf32, #tpu.memory_space<vmem>>, %arg1: memref<896x256xbf16, #tpu.memory_space<vmem>>, %arg2: memref<2304x128xbf16, #tpu.memory_space<vmem>>, %arg3: memref<8x128xf32, #tpu.memory_space<vmem>>, %arg4: memref<2x32x16xf32, #tpu.memory_space<vmem>>, %arg5: memref<2x26x128xf32, #tpu.memory_space<vmem>>) attributes {dimension_semantics = [], scalar_prefetch = 0 : i64, scratch_operands = 1 : i64, tpu.core_type = #tpu.core_type<tc>} {
    %c0 = arith.constant 0 : index
    %c0_0 = arith.constant 0 : index
    %0 = vector.load %arg3[%c0, %c0_0] : memref<8x128xf32, #tpu.memory_space<vmem>>, vector<8x128xf32>
    %1 = vector.extract_strided_slice %0 {offsets = [0, 0], sizes = [1, 128], strides = [1, 1]} : vector<8x128xf32> to vector<1x128xf32>
    %2 = vector.extract_strided_slice %0 {offsets = [1, 0], sizes = [1, 128], strides = [1, 1]} : vector<8x128xf32> to vector<1x128xf32>
    %3 = vector.extract_strided_slice %0 {offsets = [2, 0], sizes = [1, 128], strides = [1, 1]} : vector<8x128xf32> to vector<1x128xf32>
    %4 = vector.extract_strided_slice %0 {offsets = [3, 0], sizes = [1, 128], strides = [1, 1]} : vector<8x128xf32> to vector<1x128xf32>
    %5 = vector.extract_strided_slice %0 {offsets = [4, 0], sizes = [1, 128], strides = [1, 1]} : vector<8x128xf32> to vector<1x128xf32>
    %6 = vector.extract_strided_slice %0 {offsets = [5, 0], sizes = [1, 128], strides = [1, 1]} : vector<8x128xf32> to vector<1x128xf32>
    %7 = vector.extract_strided_slice %0 {offsets = [6, 0], sizes = [1, 128], strides = [1, 1]} : vector<8x128xf32> to vector<1x128xf32>
    %8 = vector.extract_strided_slice %0 {offsets = [7, 0], sizes = [1, 128], strides = [1, 1]} : vector<8x128xf32> to vector<1x128xf32>
    %cst = arith.constant 0.000000e+00 : f32
    %9 = vector.broadcast %cst : f32 to vector<2x26x128xf32>
    %c0_1 = arith.constant 0 : index
    %c0_2 = arith.constant 0 : index
    %c0_3 = arith.constant 0 : index
    %10 = vector.load %arg5[%c0_1, %c0_2, %c0_3] : memref<2x26x128xf32, #tpu.memory_space<vmem>>, vector<2x26x128xf32>
    tpu.vector_store %arg5[%c0_1, %c0_2, %c0_3], %9 {strides = array<i32>} : memref<2x26x128xf32, #tpu.memory_space<vmem>>, vector<2x26x128xf32>,
    %c0_4 = arith.constant 0 : index
    %c0_5 = arith.constant 0 : index
    %c0_6 = arith.constant 0 : index
    %11 = vector.load %arg0[%c0_4, %c0_5, %c0_6] : memref<2x8x16xf32, #tpu.memory_space<vmem>>, vector<1x8x16xf32>
    %12 = vector.shape_cast %11 : vector<1x8x16xf32> to vector<8x16xf32>
    %13 = tpu.transpose %12, [1, 0] : vector<8x16xf32> -> vector<16x8xf32>
    %c0_7 = arith.constant 0 : index
    %c5 = arith.constant 5 : index
    %c0_8 = arith.constant 0 : index
    %14 = vector.load %arg5[%c0_7, %c5, %c0_8] : memref<2x26x128xf32, #tpu.memory_space<vmem>>, vector<1x16x8xf32>
    %15 = vector.shape_cast %14 : vector<1x16x8xf32> to vector<16x8xf32>
    %16 = vector.shape_cast %13 : vector<16x8xf32> to vector<1x16x8xf32>
    tpu.vector_store %arg5[%c0_7, %c5, %c0_8], %16 {strides = array<i32>} : memref<2x26x128xf32, #tpu.memory_space<vmem>>, vector<1x16x8xf32>,
    %c1 = arith.constant 1 : index
    %c0_9 = arith.constant 0 : index
    %c0_10 = arith.constant 0 : index
    %17 = vector.load %arg0[%c1, %c0_9, %c0_10] : memref<2x8x16xf32, #tpu.memory_space<vmem>>, vector<1x8x16xf32>
    %18 = vector.shape_cast %17 : vector<1x8x16xf32> to vector<8x16xf32>
    %19 = tpu.transpose %18, [1, 0] : vector<8x16xf32> -> vector<16x8xf32>
    %c1_11 = arith.constant 1 : index
    %c5_12 = arith.constant 5 : index
    %c0_13 = arith.constant 0 : index
    %20 = vector.load %arg5[%c1_11, %c5_12, %c0_13] : memref<2x26x128xf32, #tpu.memory_space<vmem>>, vector<1x16x8xf32>
    %21 = vector.shape_cast %20 : vector<1x16x8xf32> to vector<16x8xf32>
    %22 = vector.shape_cast %19 : vector<16x8xf32> to vector<1x16x8xf32>
    tpu.vector_store %arg5[%c1_11, %c5_12, %c0_13], %22 {strides = array<i32>} : memref<2x26x128xf32, #tpu.memory_space<vmem>>, vector<1x16x8xf32>,
    %cst_14 = arith.constant 0.000000e+00 : f32
    %23 = vector.broadcast %cst_14 : f32 to vector<32x256xf32>
    %c0_15 = arith.constant 0 : index
    %c2 = arith.constant 2 : index
    %c0_16 = arith.constant 0 : index
    %24 = vector.load %arg5[%c0_15, %c2, %c0_16] : memref<2x26x128xf32, #tpu.memory_space<vmem>>, vector<2x16x128xf32>
    %25 = vector.shape_cast %24 : vector<2x16x128xf32> to vector<32x128xf32>
    %c0_17 = arith.constant 0 : index
    %c0_18 = arith.constant 0 : index
    %26 = vector.load %arg1[%c0_17, %c0_18] : memref<896x256xbf16, #tpu.memory_space<vmem>>, vector<128x256xbf16>
    %27 = arith.truncf %25 : vector<32x128xf32> to vector<32x128xbf16>
    %cst_19 = arith.constant dense<0.000000e+00> : vector<32x256xf32>
    %28 = tpu.matmul %27, %26, %cst_19 {dimension_numbers = #tpu.dot_dimension_numbers<[1], [0], [0], [1], [0, 0, 1, 1], [], []>} : vector<32x128xbf16>, vector<128x256xbf16>, vector<32x256xf32> -> vector<32x256xf32>
    %29 = arith.addf %23, %28 : vector<32x256xf32>
    %c0_20 = arith.constant 0 : index
    %c3 = arith.constant 3 : index
    %c0_21 = arith.constant 0 : index
    %30 = vector.load %arg5[%c0_20, %c3, %c0_21] : memref<2x26x128xf32, #tpu.memory_space<vmem>>, vector<2x16x128xf32>
    %31 = vector.shape_cast %30 : vector<2x16x128xf32> to vector<32x128xf32>
    %c128 = arith.constant 128 : index
    %c0_22 = arith.constant 0 : index
    %32 = vector.load %arg1[%c128, %c0_22] : memref<896x256xbf16, #tpu.memory_space<vmem>>, vector<128x256xbf16>
    %33 = arith.truncf %31 : vector<32x128xf32> to vector<32x128xbf16>
    %cst_23 = arith.constant dense<0.000000e+00> : vector<32x256xf32>
    %34 = tpu.matmul %33, %32, %cst_23 {dimension_numbers = #tpu.dot_dimension_numbers<[1], [0], [0], [1], [0, 0, 1, 1], [], []>} : vector<32x128xbf16>, vector<128x256xbf16>, vector<32x256xf32> -> vector<32x256xf32>
    %35 = arith.addf %29, %34 : vector<32x256xf32>
    %c0_24 = arith.constant 0 : index
    %c4 = arith.constant 4 : index
    %c0_25 = arith.constant 0 : index
    %36 = vector.load %arg5[%c0_24, %c4, %c0_25] : memref<2x26x128xf32, #tpu.memory_space<vmem>>, vector<2x16x128xf32>
    %37 = vector.shape_cast %36 : vector<2x16x128xf32> to vector<32x128xf32>
    %c256 = arith.constant 256 : index
    %c0_26 = arith.constant 0 : index
    %38 = vector.load %arg1[%c256, %c0_26] : memref<896x256xbf16, #tpu.memory_space<vmem>>, vector<128x256xbf16>
    %39 = arith.truncf %37 : vector<32x128xf32> to vector<32x128xbf16>
    %cst_27 = arith.constant dense<0.000000e+00> : vector<32x256xf32>
    %40 = tpu.matmul %39, %38, %cst_27 {dimension_numbers = #tpu.dot_dimension_numbers<[1], [0], [0], [1], [0, 0, 1, 1], [], []>} : vector<32x128xbf16>, vector<128x256xbf16>, vector<32x256xf32> -> vector<32x256xf32>
    %41 = arith.addf %35, %40 : vector<32x256xf32>
    %c0_28 = arith.constant 0 : index
    %c5_29 = arith.constant 5 : index
    %c0_30 = arith.constant 0 : index
    %42 = vector.load %arg5[%c0_28, %c5_29, %c0_30] : memref<2x26x128xf32, #tpu.memory_space<vmem>>, vector<2x16x128xf32>
    %43 = vector.shape_cast %42 : vector<2x16x128xf32> to vector<32x128xf32>
    %c384 = arith.constant 384 : index
    %c0_31 = arith.constant 0 : index
    %44 = vector.load %arg1[%c384, %c0_31] : memref<896x256xbf16, #tpu.memory_space<vmem>>, vector<128x256xbf16>
    %45 = arith.truncf %43 : vector<32x128xf32> to vector<32x128xbf16>
    %cst_32 = arith.constant dense<0.000000e+00> : vector<32x256xf32>
    %46 = tpu.matmul %45, %44, %cst_32 {dimension_numbers = #tpu.dot_dimension_numbers<[1], [0], [0], [1], [0, 0, 1, 1], [], []>} : vector<32x128xbf16>, vector<128x256xbf16>, vector<32x256xf32> -> vector<32x256xf32>
    %47 = arith.addf %41, %46 : vector<32x256xf32>
    %c0_33 = arith.constant 0 : index
    %c6 = arith.constant 6 : index
    %c0_34 = arith.constant 0 : index
    %48 = vector.load %arg5[%c0_33, %c6, %c0_34] : memref<2x26x128xf32, #tpu.memory_space<vmem>>, vector<2x16x128xf32>
    %49 = vector.shape_cast %48 : vector<2x16x128xf32> to vector<32x128xf32>
    %c512 = arith.constant 512 : index
    %c0_35 = arith.constant 0 : index
    %50 = vector.load %arg1[%c512, %c0_35] : memref<896x256xbf16, #tpu.memory_space<vmem>>, vector<128x256xbf16>
    %51 = arith.truncf %49 : vector<32x128xf32> to vector<32x128xbf16>
    %cst_36 = arith.constant dense<0.000000e+00> : vector<32x256xf32>
    %52 = tpu.matmul %51, %50, %cst_36 {dimension_numbers = #tpu.dot_dimension_numbers<[1], [0], [0], [1], [0, 0, 1, 1], [], []>} : vector<32x128xbf16>, vector<128x256xbf16>, vector<32x256xf32> -> vector<32x256xf32>
    %53 = arith.addf %47, %52 : vector<32x256xf32>
    %c0_37 = arith.constant 0 : index
    %c7 = arith.constant 7 : index
    %c0_38 = arith.constant 0 : index
    %54 = vector.load %arg5[%c0_37, %c7, %c0_38] : memref<2x26x128xf32, #tpu.memory_space<vmem>>, vector<2x16x128xf32>
    %55 = vector.shape_cast %54 : vector<2x16x128xf32> to vector<32x128xf32>
    %c640 = arith.constant 640 : index
    %c0_39 = arith.constant 0 : index
    %56 = vector.load %arg1[%c640, %c0_39] : memref<896x256xbf16, #tpu.memory_space<vmem>>, vector<128x256xbf16>
    %57 = arith.truncf %55 : vector<32x128xf32> to vector<32x128xbf16>
    %cst_40 = arith.constant dense<0.000000e+00> : vector<32x256xf32>
    %58 = tpu.matmul %57, %56, %cst_40 {dimension_numbers = #tpu.dot_dimension_numbers<[1], [0], [0], [1], [0, 0, 1, 1], [], []>} : vector<32x128xbf16>, vector<128x256xbf16>, vector<32x256xf32> -> vector<32x256xf32>
    %59 = arith.addf %53, %58 : vector<32x256xf32>
    %c0_41 = arith.constant 0 : index
    %c8 = arith.constant 8 : index
    %c0_42 = arith.constant 0 : index
    %60 = vector.load %arg5[%c0_41, %c8, %c0_42] : memref<2x26x128xf32, #tpu.memory_space<vmem>>, vector<2x16x128xf32>
    %61 = vector.shape_cast %60 : vector<2x16x128xf32> to vector<32x128xf32>
    %c768 = arith.constant 768 : index
    %c0_43 = arith.constant 0 : index
    %62 = vector.load %arg1[%c768, %c0_43] : memref<896x256xbf16, #tpu.memory_space<vmem>>, vector<128x256xbf16>
    %63 = arith.truncf %61 : vector<32x128xf32> to vector<32x128xbf16>
    %cst_44 = arith.constant dense<0.000000e+00> : vector<32x256xf32>
    %64 = tpu.matmul %63, %62, %cst_44 {dimension_numbers = #tpu.dot_dimension_numbers<[1], [0], [0], [1], [0, 0, 1, 1], [], []>} : vector<32x128xbf16>, vector<128x256xbf16>, vector<32x256xf32> -> vector<32x256xf32>
    %65 = arith.addf %59, %64 : vector<32x256xf32>
    %66 = vector.extract_strided_slice %65 {offsets = [0, 0], sizes = [32, 128], strides = [1, 1]} : vector<32x256xf32> to vector<32x128xf32>
    %cst_45 = arith.constant dense<0.000000e+00> : vector<128xf32>
    %67 = vector.multi_reduction <add>, %66, %cst_45 [0] : vector<32x128xf32> to vector<128xf32>
    %68 = vector.shape_cast %67 : vector<128xf32> to vector<1x128xf32>
    %cst_46 = arith.constant 3.125000e-02 : f32
    %69 = vector.broadcast %cst_46 : f32 to vector<1x128xf32>
    %70 = arith.mulf %68, %69 : vector<1x128xf32>
    %71 = arith.mulf %66, %66 : vector<32x128xf32>
    %cst_47 = arith.constant dense<0.000000e+00> : vector<128xf32>
    %72 = vector.multi_reduction <add>, %71, %cst_47 [0] : vector<32x128xf32> to vector<128xf32>
    %73 = vector.shape_cast %72 : vector<128xf32> to vector<1x128xf32>
    %cst_48 = arith.constant 3.125000e-02 : f32
    %74 = vector.broadcast %cst_48 : f32 to vector<1x128xf32>
    %75 = arith.mulf %73, %74 : vector<1x128xf32>
    %76 = arith.mulf %70, %70 : vector<1x128xf32>
    %77 = arith.subf %75, %76 : vector<1x128xf32>
    %cst_49 = arith.constant 0.000000e+00 : f32
    %78 = vector.broadcast %cst_49 : f32 to vector<1x128xf32>
    %79 = arith.maximumf %77, %78 : vector<1x128xf32>
    %cst_50 = arith.constant 9.99999974E-6 : f32
    %80 = vector.broadcast %cst_50 : f32 to vector<1x128xf32>
    %81 = arith.addf %79, %80 : vector<1x128xf32>
    %82 = math.rsqrt %81 : vector<1x128xf32>
    %83 = arith.mulf %1, %82 : vector<1x128xf32>
    %84 = vector.broadcast %83 : vector<1x128xf32> to vector<32x128xf32>
    %85 = arith.mulf %66, %84 : vector<32x128xf32>
    %86 = arith.mulf %70, %83 : vector<1x128xf32>
    %87 = arith.subf %2, %86 : vector<1x128xf32>
    %88 = vector.broadcast %87 : vector<1x128xf32> to vector<32x128xf32>
    %89 = arith.addf %85, %88 : vector<32x128xf32>
    %cst_51 = arith.constant 0.000000e+00 : f32
    %90 = vector.broadcast %cst_51 : f32 to vector<32x128xf32>
    %91 = arith.maximumf %89, %90 : vector<32x128xf32>
    %92 = vector.extract_strided_slice %65 {offsets = [0, 128], sizes = [32, 128], strides = [1, 1]} : vector<32x256xf32> to vector<32x128xf32>
    %cst_52 = arith.constant dense<0.000000e+00> : vector<128xf32>
    %93 = vector.multi_reduction <add>, %92, %cst_52 [0] : vector<32x128xf32> to vector<128xf32>
    %94 = vector.shape_cast %93 : vector<128xf32> to vector<1x128xf32>
    %cst_53 = arith.constant 3.125000e-02 : f32
    %95 = vector.broadcast %cst_53 : f32 to vector<1x128xf32>
    %96 = arith.mulf %94, %95 : vector<1x128xf32>
    %97 = arith.mulf %92, %92 : vector<32x128xf32>
    %cst_54 = arith.constant dense<0.000000e+00> : vector<128xf32>
    %98 = vector.multi_reduction <add>, %97, %cst_54 [0] : vector<32x128xf32> to vector<128xf32>
    %99 = vector.shape_cast %98 : vector<128xf32> to vector<1x128xf32>
    %cst_55 = arith.constant 3.125000e-02 : f32
    %100 = vector.broadcast %cst_55 : f32 to vector<1x128xf32>
    %101 = arith.mulf %99, %100 : vector<1x128xf32>
    %102 = arith.mulf %96, %96 : vector<1x128xf32>
    %103 = arith.subf %101, %102 : vector<1x128xf32>
    %cst_56 = arith.constant 0.000000e+00 : f32
    %104 = vector.broadcast %cst_56 : f32 to vector<1x128xf32>
    %105 = arith.maximumf %103, %104 : vector<1x128xf32>
    %cst_57 = arith.constant 9.99999974E-6 : f32
    %106 = vector.broadcast %cst_57 : f32 to vector<1x128xf32>
    %107 = arith.addf %105, %106 : vector<1x128xf32>
    %108 = math.rsqrt %107 : vector<1x128xf32>
    %109 = arith.mulf %7, %108 : vector<1x128xf32>
    %110 = vector.broadcast %109 : vector<1x128xf32> to vector<32x128xf32>
    %111 = arith.mulf %92, %110 : vector<32x128xf32>
    %112 = arith.mulf %96, %109 : vector<1x128xf32>
    %113 = arith.subf %8, %112 : vector<1x128xf32>
    %114 = vector.broadcast %113 : vector<1x128xf32> to vector<32x128xf32>
    %115 = arith.addf %111, %114 : vector<32x128xf32>
    %116 = vector.shape_cast %91 : vector<32x128xf32> to vector<2x16x128xf32>
    %c0_58 = arith.constant 0 : index
    %c5_59 = arith.constant 5 : index
    %c0_60 = arith.constant 0 : index
    %117 = vector.load %arg5[%c0_58, %c5_59, %c0_60] : memref<2x26x128xf32, #tpu.memory_space<vmem>>, vector<2x16x128xf32>
    tpu.vector_store %arg5[%c0_58, %c5_59, %c0_60], %116 {strides = array<i32>} : memref<2x26x128xf32, #tpu.memory_space<vmem>>, vector<2x16x128xf32>,
    %cst_61 = arith.constant 0.000000e+00 : f32
    %118 = vector.broadcast %cst_61 : f32 to vector<32x128xf32>
    %c0_62 = arith.constant 0 : index
    %c0_63 = arith.constant 0 : index
    %c0_64 = arith.constant 0 : index
    %119 = vector.load %arg5[%c0_62, %c0_63, %c0_64] : memref<2x26x128xf32, #tpu.memory_space<vmem>>, vector<2x16x128xf32>
    %120 = vector.shape_cast %119 : vector<2x16x128xf32> to vector<32x128xf32>
    %c0_65 = arith.constant 0 : index
    %c0_66 = arith.constant 0 : index
    %121 = vector.load %arg2[%c0_65, %c0_66] : memref<2304x128xbf16, #tpu.memory_space<vmem>>, vector<128x128xbf16>
    %122 = arith.truncf %120 : vector<32x128xf32> to vector<32x128xbf16>
    %cst_67 = arith.constant dense<0.000000e+00> : vector<32x128xf32>
    %123 = tpu.matmul %122, %121, %cst_67 {dimension_numbers = #tpu.dot_dimension_numbers<[1], [0], [0], [1], [0, 0, 1, 1], [], []>} : vector<32x128xbf16>, vector<128x128xbf16>, vector<32x128xf32> -> vector<32x128xf32>
    %124 = arith.addf %118, %123 : vector<32x128xf32>
    %c0_68 = arith.constant 0 : index
    %c1_69 = arith.constant 1 : index
    %c0_70 = arith.constant 0 : index
    %125 = vector.load %arg5[%c0_68, %c1_69, %c0_70] : memref<2x26x128xf32, #tpu.memory_space<vmem>>, vector<2x16x128xf32>
    %126 = vector.shape_cast %125 : vector<2x16x128xf32> to vector<32x128xf32>
    %c128_71 = arith.constant 128 : index
    %c0_72 = arith.constant 0 : index
    %127 = vector.load %arg2[%c128_71, %c0_72] : memref<2304x128xbf16, #tpu.memory_space<vmem>>, vector<128x128xbf16>
    %128 = arith.truncf %126 : vector<32x128xf32> to vector<32x128xbf16>
    %cst_73 = arith.constant dense<0.000000e+00> : vector<32x128xf32>
    %129 = tpu.matmul %128, %127, %cst_73 {dimension_numbers = #tpu.dot_dimension_numbers<[1], [0], [0], [1], [0, 0, 1, 1], [], []>} : vector<32x128xbf16>, vector<128x128xbf16>, vector<32x128xf32> -> vector<32x128xf32>
    %130 = arith.addf %124, %129 : vector<32x128xf32>
    %c0_74 = arith.constant 0 : index
    %c2_75 = arith.constant 2 : index
    %c0_76 = arith.constant 0 : index
    %131 = vector.load %arg5[%c0_74, %c2_75, %c0_76] : memref<2x26x128xf32, #tpu.memory_space<vmem>>, vector<2x16x128xf32>
    %132 = vector.shape_cast %131 : vector<2x16x128xf32> to vector<32x128xf32>
    %c256_77 = arith.constant 256 : index
    %c0_78 = arith.constant 0 : index
    %133 = vector.load %arg2[%c256_77, %c0_78] : memref<2304x128xbf16, #tpu.memory_space<vmem>>, vector<128x128xbf16>
    %134 = arith.truncf %132 : vector<32x128xf32> to vector<32x128xbf16>
    %cst_79 = arith.constant dense<0.000000e+00> : vector<32x128xf32>
    %135 = tpu.matmul %134, %133, %cst_79 {dimension_numbers = #tpu.dot_dimension_numbers<[1], [0], [0], [1], [0, 0, 1, 1], [], []>} : vector<32x128xbf16>, vector<128x128xbf16>, vector<32x128xf32> -> vector<32x128xf32>
    %136 = arith.addf %130, %135 : vector<32x128xf32>
    %c0_80 = arith.constant 0 : index
    %c3_81 = arith.constant 3 : index
    %c0_82 = arith.constant 0 : index
    %137 = vector.load %arg5[%c0_80, %c3_81, %c0_82] : memref<2x26x128xf32, #tpu.memory_space<vmem>>, vector<2x16x128xf32>
    %138 = vector.shape_cast %137 : vector<2x16x128xf32> to vector<32x128xf32>
    %c384_83 = arith.constant 384 : index
    %c0_84 = arith.constant 0 : index
    %139 = vector.load %arg2[%c384_83, %c0_84] : memref<2304x128xbf16, #tpu.memory_space<vmem>>, vector<128x128xbf16>
    %140 = arith.truncf %138 : vector<32x128xf32> to vector<32x128xbf16>
    %cst_85 = arith.constant dense<0.000000e+00> : vector<32x128xf32>
    %141 = tpu.matmul %140, %139, %cst_85 {dimension_numbers = #tpu.dot_dimension_numbers<[1], [0], [0], [1], [0, 0, 1, 1], [], []>} : vector<32x128xbf16>, vector<128x128xbf16>, vector<32x128xf32> -> vector<32x128xf32>
    %142 = arith.addf %136, %141 : vector<32x128xf32>
    %c0_86 = arith.constant 0 : index
    %c4_87 = arith.constant 4 : index
    %c0_88 = arith.constant 0 : index
    %143 = vector.load %arg5[%c0_86, %c4_87, %c0_88] : memref<2x26x128xf32, #tpu.memory_space<vmem>>, vector<2x16x128xf32>
    %144 = vector.shape_cast %143 : vector<2x16x128xf32> to vector<32x128xf32>
    %c512_89 = arith.constant 512 : index
    %c0_90 = arith.constant 0 : index
    %145 = vector.load %arg2[%c512_89, %c0_90] : memref<2304x128xbf16, #tpu.memory_space<vmem>>, vector<128x128xbf16>
    %146 = arith.truncf %144 : vector<32x128xf32> to vector<32x128xbf16>
    %cst_91 = arith.constant dense<0.000000e+00> : vector<32x128xf32>
    %147 = tpu.matmul %146, %145, %cst_91 {dimension_numbers = #tpu.dot_dimension_numbers<[1], [0], [0], [1], [0, 0, 1, 1], [], []>} : vector<32x128xbf16>, vector<128x128xbf16>, vector<32x128xf32> -> vector<32x128xf32>
    %148 = arith.addf %142, %147 : vector<32x128xf32>
    %c0_92 = arith.constant 0 : index
    %c5_93 = arith.constant 5 : index
    %c0_94 = arith.constant 0 : index
    %149 = vector.load %arg5[%c0_92, %c5_93, %c0_94] : memref<2x26x128xf32, #tpu.memory_space<vmem>>, vector<2x16x128xf32>
    %150 = vector.shape_cast %149 : vector<2x16x128xf32> to vector<32x128xf32>
    %c640_95 = arith.constant 640 : index
    %c0_96 = arith.constant 0 : index
    %151 = vector.load %arg2[%c640_95, %c0_96] : memref<2304x128xbf16, #tpu.memory_space<vmem>>, vector<128x128xbf16>
    %152 = arith.truncf %150 : vector<32x128xf32> to vector<32x128xbf16>
    %cst_97 = arith.constant dense<0.000000e+00> : vector<32x128xf32>
    %153 = tpu.matmul %152, %151, %cst_97 {dimension_numbers = #tpu.dot_dimension_numbers<[1], [0], [0], [1], [0, 0, 1, 1], [], []>} : vector<32x128xbf16>, vector<128x128xbf16>, vector<32x128xf32> -> vector<32x128xf32>
    %154 = arith.addf %148, %153 : vector<32x128xf32>
    %c0_98 = arith.constant 0 : index
    %c6_99 = arith.constant 6 : index
    %c0_100 = arith.constant 0 : index
    %155 = vector.load %arg5[%c0_98, %c6_99, %c0_100] : memref<2x26x128xf32, #tpu.memory_space<vmem>>, vector<2x16x128xf32>
    %156 = vector.shape_cast %155 : vector<2x16x128xf32> to vector<32x128xf32>
    %c768_101 = arith.constant 768 : index
    %c0_102 = arith.constant 0 : index
    %157 = vector.load %arg2[%c768_101, %c0_102] : memref<2304x128xbf16, #tpu.memory_space<vmem>>, vector<128x128xbf16>
    %158 = arith.truncf %156 : vector<32x128xf32> to vector<32x128xbf16>
    %cst_103 = arith.constant dense<0.000000e+00> : vector<32x128xf32>
    %159 = tpu.matmul %158, %157, %cst_103 {dimension_numbers = #tpu.dot_dimension_numbers<[1], [0], [0], [1], [0, 0, 1, 1], [], []>} : vector<32x128xbf16>, vector<128x128xbf16>, vector<32x128xf32> -> vector<32x128xf32>
    %160 = arith.addf %154, %159 : vector<32x128xf32>
    %c0_104 = arith.constant 0 : index
    %c7_105 = arith.constant 7 : index
    %c0_106 = arith.constant 0 : index
    %161 = vector.load %arg5[%c0_104, %c7_105, %c0_106] : memref<2x26x128xf32, #tpu.memory_space<vmem>>, vector<2x16x128xf32>
    %162 = vector.shape_cast %161 : vector<2x16x128xf32> to vector<32x128xf32>
    %c896 = arith.constant 896 : index
    %c0_107 = arith.constant 0 : index
    %163 = vector.load %arg2[%c896, %c0_107] : memref<2304x128xbf16, #tpu.memory_space<vmem>>, vector<128x128xbf16>
    %164 = arith.truncf %162 : vector<32x128xf32> to vector<32x128xbf16>
    %cst_108 = arith.constant dense<0.000000e+00> : vector<32x128xf32>
    %165 = tpu.matmul %164, %163, %cst_108 {dimension_numbers = #tpu.dot_dimension_numbers<[1], [0], [0], [1], [0, 0, 1, 1], [], []>} : vector<32x128xbf16>, vector<128x128xbf16>, vector<32x128xf32> -> vector<32x128xf32>
    %166 = arith.addf %160, %165 : vector<32x128xf32>
    %c0_109 = arith.constant 0 : index
    %c8_110 = arith.constant 8 : index
    %c0_111 = arith.constant 0 : index
    %167 = vector.load %arg5[%c0_109, %c8_110, %c0_111] : memref<2x26x128xf32, #tpu.memory_space<vmem>>, vector<2x16x128xf32>
    %168 = vector.shape_cast %167 : vector<2x16x128xf32> to vector<32x128xf32>
    %c1024 = arith.constant 1024 : index
    %c0_112 = arith.constant 0 : index
    %169 = vector.load %arg2[%c1024, %c0_112] : memref<2304x128xbf16, #tpu.memory_space<vmem>>, vector<128x128xbf16>
    %170 = arith.truncf %168 : vector<32x128xf32> to vector<32x128xbf16>
    %cst_113 = arith.constant dense<0.000000e+00> : vector<32x128xf32>
    %171 = tpu.matmul %170, %169, %cst_113 {dimension_numbers = #tpu.dot_dimension_numbers<[1], [0], [0], [1], [0, 0, 1, 1], [], []>} : vector<32x128xbf16>, vector<128x128xbf16>, vector<32x128xf32> -> vector<32x128xf32>
    %172 = arith.addf %166, %171 : vector<32x128xf32>
    %c0_114 = arith.constant 0 : index
    %c9 = arith.constant 9 : index
    %c0_115 = arith.constant 0 : index
    %173 = vector.load %arg5[%c0_114, %c9, %c0_115] : memref<2x26x128xf32, #tpu.memory_space<vmem>>, vector<2x16x128xf32>
    %174 = vector.shape_cast %173 : vector<2x16x128xf32> to vector<32x128xf32>
    %c1152 = arith.constant 1152 : index
    %c0_116 = arith.constant 0 : index
    %175 = vector.load %arg2[%c1152, %c0_116] : memref<2304x128xbf16, #tpu.memory_space<vmem>>, vector<128x128xbf16>
    %176 = arith.truncf %174 : vector<32x128xf32> to vector<32x128xbf16>
    %cst_117 = arith.constant dense<0.000000e+00> : vector<32x128xf32>
    %177 = tpu.matmul %176, %175, %cst_117 {dimension_numbers = #tpu.dot_dimension_numbers<[1], [0], [0], [1], [0, 0, 1, 1], [], []>} : vector<32x128xbf16>, vector<128x128xbf16>, vector<32x128xf32> -> vector<32x128xf32>
    %178 = arith.addf %172, %177 : vector<32x128xf32>
    %c0_118 = arith.constant 0 : index
    %c10 = arith.constant 10 : index
    %c0_119 = arith.constant 0 : index
    %179 = vector.load %arg5[%c0_118, %c10, %c0_119] : memref<2x26x128xf32, #tpu.memory_space<vmem>>, vector<2x16x128xf32>
    %180 = vector.shape_cast %179 : vector<2x16x128xf32> to vector<32x128xf32>
    %c1280 = arith.constant 1280 : index
    %c0_120 = arith.constant 0 : index
    %181 = vector.load %arg2[%c1280, %c0_120] : memref<2304x128xbf16, #tpu.memory_space<vmem>>, vector<128x128xbf16>
    %182 = arith.truncf %180 : vector<32x128xf32> to vector<32x128xbf16>
    %cst_121 = arith.constant dense<0.000000e+00> : vector<32x128xf32>
    %183 = tpu.matmul %182, %181, %cst_121 {dimension_numbers = #tpu.dot_dimension_numbers<[1], [0], [0], [1], [0, 0, 1, 1], [], []>} : vector<32x128xbf16>, vector<128x128xbf16>, vector<32x128xf32> -> vector<32x128xf32>
    %184 = arith.addf %178, %183 : vector<32x128xf32>
    %cst_122 = arith.constant dense<0.000000e+00> : vector<128xf32>
    %185 = vector.multi_reduction <add>, %184, %cst_122 [0] : vector<32x128xf32> to vector<128xf32>
    %186 = vector.shape_cast %185 : vector<128xf32> to vector<1x128xf32>
    %cst_123 = arith.constant 3.125000e-02 : f32
    %187 = vector.broadcast %cst_123 : f32 to vector<1x128xf32>
    %188 = arith.mulf %186, %187 : vector<1x128xf32>
    %189 = arith.mulf %184, %184 : vector<32x128xf32>
    %cst_124 = arith.constant dense<0.000000e+00> : vector<128xf32>
    %190 = vector.multi_reduction <add>, %189, %cst_124 [0] : vector<32x128xf32> to vector<128xf32>
    %191 = vector.shape_cast %190 : vector<128xf32> to vector<1x128xf32>
    %cst_125 = arith.constant 3.125000e-02 : f32
    %192 = vector.broadcast %cst_125 : f32 to vector<1x128xf32>
    %193 = arith.mulf %191, %192 : vector<1x128xf32>
    %194 = arith.mulf %188, %188 : vector<1x128xf32>
    %195 = arith.subf %193, %194 : vector<1x128xf32>
    %cst_126 = arith.constant 0.000000e+00 : f32
    %196 = vector.broadcast %cst_126 : f32 to vector<1x128xf32>
    %197 = arith.maximumf %195, %196 : vector<1x128xf32>
    %cst_127 = arith.constant 9.99999974E-6 : f32
    %198 = vector.broadcast %cst_127 : f32 to vector<1x128xf32>
    %199 = arith.addf %197, %198 : vector<1x128xf32>
    %200 = math.rsqrt %199 : vector<1x128xf32>
    %201 = arith.mulf %3, %200 : vector<1x128xf32>
    %202 = vector.broadcast %201 : vector<1x128xf32> to vector<32x128xf32>
    %203 = arith.mulf %184, %202 : vector<32x128xf32>
    %204 = arith.mulf %188, %201 : vector<1x128xf32>
    %205 = arith.subf %4, %204 : vector<1x128xf32>
    %206 = vector.broadcast %205 : vector<1x128xf32> to vector<32x128xf32>
    %207 = arith.addf %203, %206 : vector<32x128xf32>
    %cst_128 = arith.constant 0.000000e+00 : f32
    %208 = vector.broadcast %cst_128 : f32 to vector<32x128xf32>
    %209 = arith.maximumf %207, %208 : vector<32x128xf32>
    %210 = vector.shape_cast %209 : vector<32x128xf32> to vector<2x16x128xf32>
    %c0_129 = arith.constant 0 : index
    %c5_130 = arith.constant 5 : index
    %c0_131 = arith.constant 0 : index
    %211 = vector.load %arg5[%c0_129, %c5_130, %c0_131] : memref<2x26x128xf32, #tpu.memory_space<vmem>>, vector<2x16x128xf32>
    tpu.vector_store %arg5[%c0_129, %c5_130, %c0_131], %210 {strides = array<i32>} : memref<2x26x128xf32, #tpu.memory_space<vmem>>, vector<2x16x128xf32>,
    %cst_132 = arith.constant 0.000000e+00 : f32
    %212 = vector.broadcast %cst_132 : f32 to vector<32x128xf32>
    %c0_133 = arith.constant 0 : index
    %c2_134 = arith.constant 2 : index
    %c0_135 = arith.constant 0 : index
    %213 = vector.load %arg5[%c0_133, %c2_134, %c0_135] : memref<2x26x128xf32, #tpu.memory_space<vmem>>, vector<2x16x128xf32>
    %214 = vector.shape_cast %213 : vector<2x16x128xf32> to vector<32x128xf32>
    %c1408 = arith.constant 1408 : index
    %c0_136 = arith.constant 0 : index
    %215 = vector.load %arg2[%c1408, %c0_136] : memref<2304x128xbf16, #tpu.memory_space<vmem>>, vector<128x128xbf16>
    %216 = arith.truncf %214 : vector<32x128xf32> to vector<32x128xbf16>
    %cst_137 = arith.constant dense<0.000000e+00> : vector<32x128xf32>
    %217 = tpu.matmul %216, %215, %cst_137 {dimension_numbers = #tpu.dot_dimension_numbers<[1], [0], [0], [1], [0, 0, 1, 1], [], []>} : vector<32x128xbf16>, vector<128x128xbf16>, vector<32x128xf32> -> vector<32x128xf32>
    %218 = arith.addf %212, %217 : vector<32x128xf32>
    %c0_138 = arith.constant 0 : index
    %c3_139 = arith.constant 3 : index
    %c0_140 = arith.constant 0 : index
    %219 = vector.load %arg5[%c0_138, %c3_139, %c0_140] : memref<2x26x128xf32, #tpu.memory_space<vmem>>, vector<2x16x128xf32>
    %220 = vector.shape_cast %219 : vector<2x16x128xf32> to vector<32x128xf32>
    %c1536 = arith.constant 1536 : index
    %c0_141 = arith.constant 0 : index
    %221 = vector.load %arg2[%c1536, %c0_141] : memref<2304x128xbf16, #tpu.memory_space<vmem>>, vector<128x128xbf16>
    %222 = arith.truncf %220 : vector<32x128xf32> to vector<32x128xbf16>
    %cst_142 = arith.constant dense<0.000000e+00> : vector<32x128xf32>
    %223 = tpu.matmul %222, %221, %cst_142 {dimension_numbers = #tpu.dot_dimension_numbers<[1], [0], [0], [1], [0, 0, 1, 1], [], []>} : vector<32x128xbf16>, vector<128x128xbf16>, vector<32x128xf32> -> vector<32x128xf32>
    %224 = arith.addf %218, %223 : vector<32x128xf32>
    %c0_143 = arith.constant 0 : index
    %c4_144 = arith.constant 4 : index
    %c0_145 = arith.constant 0 : index
    %225 = vector.load %arg5[%c0_143, %c4_144, %c0_145] : memref<2x26x128xf32, #tpu.memory_space<vmem>>, vector<2x16x128xf32>
    %226 = vector.shape_cast %225 : vector<2x16x128xf32> to vector<32x128xf32>
    %c1664 = arith.constant 1664 : index
    %c0_146 = arith.constant 0 : index
    %227 = vector.load %arg2[%c1664, %c0_146] : memref<2304x128xbf16, #tpu.memory_space<vmem>>, vector<128x128xbf16>
    %228 = arith.truncf %226 : vector<32x128xf32> to vector<32x128xbf16>
    %cst_147 = arith.constant dense<0.000000e+00> : vector<32x128xf32>
    %229 = tpu.matmul %228, %227, %cst_147 {dimension_numbers = #tpu.dot_dimension_numbers<[1], [0], [0], [1], [0, 0, 1, 1], [], []>} : vector<32x128xbf16>, vector<128x128xbf16>, vector<32x128xf32> -> vector<32x128xf32>
    %230 = arith.addf %224, %229 : vector<32x128xf32>
    %c0_148 = arith.constant 0 : index
    %c5_149 = arith.constant 5 : index
    %c0_150 = arith.constant 0 : index
    %231 = vector.load %arg5[%c0_148, %c5_149, %c0_150] : memref<2x26x128xf32, #tpu.memory_space<vmem>>, vector<2x16x128xf32>
    %232 = vector.shape_cast %231 : vector<2x16x128xf32> to vector<32x128xf32>
    %c1792 = arith.constant 1792 : index
    %c0_151 = arith.constant 0 : index
    %233 = vector.load %arg2[%c1792, %c0_151] : memref<2304x128xbf16, #tpu.memory_space<vmem>>, vector<128x128xbf16>
    %234 = arith.truncf %232 : vector<32x128xf32> to vector<32x128xbf16>
    %cst_152 = arith.constant dense<0.000000e+00> : vector<32x128xf32>
    %235 = tpu.matmul %234, %233, %cst_152 {dimension_numbers = #tpu.dot_dimension_numbers<[1], [0], [0], [1], [0, 0, 1, 1], [], []>} : vector<32x128xbf16>, vector<128x128xbf16>, vector<32x128xf32> -> vector<32x128xf32>
    %236 = arith.addf %230, %235 : vector<32x128xf32>
    %c0_153 = arith.constant 0 : index
    %c6_154 = arith.constant 6 : index
    %c0_155 = arith.constant 0 : index
    %237 = vector.load %arg5[%c0_153, %c6_154, %c0_155] : memref<2x26x128xf32, #tpu.memory_space<vmem>>, vector<2x16x128xf32>
    %238 = vector.shape_cast %237 : vector<2x16x128xf32> to vector<32x128xf32>
    %c1920 = arith.constant 1920 : index
    %c0_156 = arith.constant 0 : index
    %239 = vector.load %arg2[%c1920, %c0_156] : memref<2304x128xbf16, #tpu.memory_space<vmem>>, vector<128x128xbf16>
    %240 = arith.truncf %238 : vector<32x128xf32> to vector<32x128xbf16>
    %cst_157 = arith.constant dense<0.000000e+00> : vector<32x128xf32>
    %241 = tpu.matmul %240, %239, %cst_157 {dimension_numbers = #tpu.dot_dimension_numbers<[1], [0], [0], [1], [0, 0, 1, 1], [], []>} : vector<32x128xbf16>, vector<128x128xbf16>, vector<32x128xf32> -> vector<32x128xf32>
    %242 = arith.addf %236, %241 : vector<32x128xf32>
    %c0_158 = arith.constant 0 : index
    %c7_159 = arith.constant 7 : index
    %c0_160 = arith.constant 0 : index
    %243 = vector.load %arg5[%c0_158, %c7_159, %c0_160] : memref<2x26x128xf32, #tpu.memory_space<vmem>>, vector<2x16x128xf32>
    %244 = vector.shape_cast %243 : vector<2x16x128xf32> to vector<32x128xf32>
    %c2048 = arith.constant 2048 : index
    %c0_161 = arith.constant 0 : index
    %245 = vector.load %arg2[%c2048, %c0_161] : memref<2304x128xbf16, #tpu.memory_space<vmem>>, vector<128x128xbf16>
    %246 = arith.truncf %244 : vector<32x128xf32> to vector<32x128xbf16>
    %cst_162 = arith.constant dense<0.000000e+00> : vector<32x128xf32>
    %247 = tpu.matmul %246, %245, %cst_162 {dimension_numbers = #tpu.dot_dimension_numbers<[1], [0], [0], [1], [0, 0, 1, 1], [], []>} : vector<32x128xbf16>, vector<128x128xbf16>, vector<32x128xf32> -> vector<32x128xf32>
    %248 = arith.addf %242, %247 : vector<32x128xf32>
    %c0_163 = arith.constant 0 : index
    %c8_164 = arith.constant 8 : index
    %c0_165 = arith.constant 0 : index
    %249 = vector.load %arg5[%c0_163, %c8_164, %c0_165] : memref<2x26x128xf32, #tpu.memory_space<vmem>>, vector<2x16x128xf32>
    %250 = vector.shape_cast %249 : vector<2x16x128xf32> to vector<32x128xf32>
    %c2176 = arith.constant 2176 : index
    %c0_166 = arith.constant 0 : index
    %251 = vector.load %arg2[%c2176, %c0_166] : memref<2304x128xbf16, #tpu.memory_space<vmem>>, vector<128x128xbf16>
    %252 = arith.truncf %250 : vector<32x128xf32> to vector<32x128xbf16>
    %cst_167 = arith.constant dense<0.000000e+00> : vector<32x128xf32>
    %253 = tpu.matmul %252, %251, %cst_167 {dimension_numbers = #tpu.dot_dimension_numbers<[1], [0], [0], [1], [0, 0, 1, 1], [], []>} : vector<32x128xbf16>, vector<128x128xbf16>, vector<32x128xf32> -> vector<32x128xf32>
    %254 = arith.addf %248, %253 : vector<32x128xf32>
    %cst_168 = arith.constant dense<0.000000e+00> : vector<128xf32>
    %255 = vector.multi_reduction <add>, %254, %cst_168 [0] : vector<32x128xf32> to vector<128xf32>
    %256 = vector.shape_cast %255 : vector<128xf32> to vector<1x128xf32>
    %cst_169 = arith.constant 3.125000e-02 : f32
    %257 = vector.broadcast %cst_169 : f32 to vector<1x128xf32>
    %258 = arith.mulf %256, %257 : vector<1x128xf32>
    %259 = arith.mulf %254, %254 : vector<32x128xf32>
    %cst_170 = arith.constant dense<0.000000e+00> : vector<128xf32>
    %260 = vector.multi_reduction <add>, %259, %cst_170 [0] : vector<32x128xf32> to vector<128xf32>
    %261 = vector.shape_cast %260 : vector<128xf32> to vector<1x128xf32>
    %cst_171 = arith.constant 3.125000e-02 : f32
    %262 = vector.broadcast %cst_171 : f32 to vector<1x128xf32>
    %263 = arith.mulf %261, %262 : vector<1x128xf32>
    %264 = arith.mulf %258, %258 : vector<1x128xf32>
    %265 = arith.subf %263, %264 : vector<1x128xf32>
    %cst_172 = arith.constant 0.000000e+00 : f32
    %266 = vector.broadcast %cst_172 : f32 to vector<1x128xf32>
    %267 = arith.maximumf %265, %266 : vector<1x128xf32>
    %cst_173 = arith.constant 9.99999974E-6 : f32
    %268 = vector.broadcast %cst_173 : f32 to vector<1x128xf32>
    %269 = arith.addf %267, %268 : vector<1x128xf32>
    %270 = math.rsqrt %269 : vector<1x128xf32>
    %271 = arith.mulf %5, %270 : vector<1x128xf32>
    %272 = vector.broadcast %271 : vector<1x128xf32> to vector<32x128xf32>
    %273 = arith.mulf %254, %272 : vector<32x128xf32>
    %274 = arith.mulf %258, %271 : vector<1x128xf32>
    %275 = arith.subf %6, %274 : vector<1x128xf32>
    %276 = vector.broadcast %275 : vector<1x128xf32> to vector<32x128xf32>
    %277 = arith.addf %273, %276 : vector<32x128xf32>
    %278 = arith.addf %277, %115 : vector<32x128xf32>
    %cst_174 = arith.constant 0.000000e+00 : f32
    %279 = vector.broadcast %cst_174 : f32 to vector<32x128xf32>
    %280 = arith.maximumf %278, %279 : vector<32x128xf32>
    %281 = vector.extract_strided_slice %280 {offsets = [0, 0], sizes = [16, 32], strides = [1, 1]} : vector<32x128xf32> to vector<16x32xf32>
    %282 = tpu.transpose %281, [1, 0] : vector<16x32xf32> -> vector<32x16xf32>
    %c0_175 = arith.constant 0 : index
    %c0_176 = arith.constant 0 : index
    %c0_177 = arith.constant 0 : index
    %283 = vector.load %arg4[%c0_175, %c0_176, %c0_177] : memref<2x32x16xf32, #tpu.memory_space<vmem>>, vector<1x32x16xf32>
    %284 = vector.shape_cast %283 : vector<1x32x16xf32> to vector<32x16xf32>
    %285 = vector.shape_cast %282 : vector<32x16xf32> to vector<1x32x16xf32>
    tpu.vector_store %arg4[%c0_175, %c0_176, %c0_177], %285 {strides = array<i32>} : memref<2x32x16xf32, #tpu.memory_space<vmem>>, vector<1x32x16xf32>,
    %286 = vector.extract_strided_slice %280 {offsets = [16, 0], sizes = [16, 32], strides = [1, 1]} : vector<32x128xf32> to vector<16x32xf32>
    %287 = tpu.transpose %286, [1, 0] : vector<16x32xf32> -> vector<32x16xf32>
    %c1_178 = arith.constant 1 : index
    %c0_179 = arith.constant 0 : index
    %c0_180 = arith.constant 0 : index
    %288 = vector.load %arg4[%c1_178, %c0_179, %c0_180] : memref<2x32x16xf32, #tpu.memory_space<vmem>>, vector<1x32x16xf32>
    %289 = vector.shape_cast %288 : vector<1x32x16xf32> to vector<32x16xf32>
    %290 = vector.shape_cast %287 : vector<32x16xf32> to vector<1x32x16xf32>
    tpu.vector_store %arg4[%c1_178, %c0_179, %c0_180], %290 {strides = array<i32>} : memref<2x32x16xf32, #tpu.memory_space<vmem>>, vector<1x32x16xf32>,
    return
  }
}

</mosaic_0001>

<llo_original>
// kernel: block_forward.1
$region0: #{block_forward.1}
  #allocation0 [shape = 'u32[]', space=smem, size = 0x4, offset = 0x4, fixed_abs, tag = 'smem constant byte address 0x4 - core index']
  #allocation1 [shape = 'u32[144,128]{1,0:T(1,128)}', space=vmem, size = 0x12000, scoped, tag = 'internal scratch']
  #allocation2 [shape = 'f32[2,26,128]{2,1,0:T(8,128)}', space=vmem, size = 0x8000, scoped, tag = 'scratch operand']
  %s0 = inlined_call_operand.hbm [shape: f32[2,8,16], index: 0, kind: input, shape index: {}]
  %s1 = inlined_call_operand.hbm [shape: bf16[896,256], index: 1, kind: input, shape index: {}]
  %s2 = inlined_call_operand.hbm [shape: bf16[2304,128], index: 2, kind: input, shape index: {}]
  %s3 = inlined_call_operand.hbm [shape: f32[8,128], index: 3, kind: input, shape index: {}]
  %s4 = inlined_call_operand.vmem [shape: f32[2,32,16], index: 4, kind: output, shape index: {}]
  %s5 = sld [smem:[#allocation0]]
  $region42: #{block_forward.1} parent=0
    _
  %s7 = ssub.s32 1, %s5
  %s8 = scalar_select 0, %s7, %s5
  $region1: #{block_forward.1} parent=0
    #allocation3 [shape = 'u8[8192]{0}', space=vmem, size = 0x2000, scoped, tag = 'input window, operand 0, single buffered']
    #allocation4 [shape = 's32[1]{0}', space=sflag, size = 0x4, scoped, tag = 'scoped memory for block_forward.1']
    #allocation5 [shape = 'u8[458752]{0}', space=vmem, size = 0x70000, scoped, tag = 'input window, operand 1, single buffered']
    #allocation6 [shape = 's32[1]{0}', space=sflag, size = 0x4, scoped, tag = 'scoped memory for block_forward.1']
    #allocation7 [shape = 'u8[589824]{0}', space=vmem, size = 0x90000, scoped, tag = 'input window, operand 2, single buffered']
    #allocation8 [shape = 'u8[4096]{0}', space=vmem, size = 0x1000, scoped, tag = 'input window, operand 3, single buffered']
    #allocation9 [shape = 's32[1]{0}', space=sflag, size = 0x4, scoped, tag = 'scoped memory for block_forward.1']
    %9 = vsyncpa [#allocation4], 0
    %10 = vsyncpa [#allocation6], 0
    %11 = vsyncpa [#allocation9], 0
    // Predicated region
    $region2: #{block_forward.1} parent=1 // pred_check
      _
    $region3: #{block_forward.1} parent=1 // pred_check_branch
      %13 = sbr.rel (0) target = $region5
    $region4: #{block_forward.1} parent=1 // pred_region
      %s15 = ssub.s32 256, 256
      %16 = vsyncadd [#allocation4], %s15
      %s17 = sshll.u32 [#allocation3], 4
      %s18 = int_to_ptr.vmem [resolvable:$true] %s17
      %23 = dma.hbm_to_vmem [thread:$0]  %s0, 256, %s18, [#allocation4], 128, 128, 8
    $region5: #{block_forward.1} parent=1 // pred_fallthru
      _
    // Predicated region
    $region6: #{block_forward.1} parent=1 // pred_check
      _
    $region7: #{block_forward.1} parent=1 // pred_check_branch
      %25 = sbr.rel (0) target = $region9
    $region8: #{block_forward.1} parent=1 // pred_region
      %s27 = ssub.s32 14336, 14336
      %28 = vsyncadd [#allocation6], %s27
      %s29 = sshll.u32 [#allocation5], 4
      %s30 = int_to_ptr.vmem [resolvable:$true] %s29
      %35 = dma.hbm_to_vmem [thread:$0]  %s1, 14336, %s30, [#allocation6], 128, 128, 8
    $region9: #{block_forward.1} parent=1 // pred_fallthru
      _
    // Predicated region
    $region10: #{block_forward.1} parent=1 // pred_check
      _
    $region11: #{block_forward.1} parent=1 // pred_check_branch
      %37 = sbr.rel (0) target = $region13
    $region12: #{block_forward.1} parent=1 // pred_region
      %s39 = ssub.s32 18432, 18432
      %40 = vsyncadd [#allocation6], %s39
      %s41 = sshll.u32 [#allocation7], 4
      %s42 = int_to_ptr.vmem [resolvable:$true] %s41
      %47 = dma.hbm_to_vmem [thread:$0]  %s2, 18432, %s42, [#allocation6], 64, 64, 4
    $region13: #{block_forward.1} parent=1 // pred_fallthru
      _
    // Predicated region
    $region14: #{block_forward.1} parent=1 // pred_check
      _
    $region15: #{block_forward.1} parent=1 // pred_check_branch
      %49 = sbr.rel (0) target = $region17
    $region16: #{block_forward.1} parent=1 // pred_region
      %s51 = ssub.s32 128, 128
      %52 = vsyncadd [#allocation9], %s51
      %s54 = sshll.u32 [#allocation8], 4
      %s55 = int_to_ptr.vmem [resolvable:$true] %s54
      %57 = dma.hbm_to_vmem [thread:$0]  %s3, 128, %s55, [#allocation9]
    $region17: #{block_forward.1} parent=1 // pred_fallthru
      _
    // Predicated region
    $region18: #{block_forward.1} parent=1 // pred_check
      _
    $region19: #{block_forward.1} parent=1 // pred_check_branch
      %59 = sbr.rel (0) target = $region21
    $region20: #{block_forward.1} parent=1 // pred_region
      %60 = dma.done [#allocation4], 256
    $region21: #{block_forward.1} parent=1 // pred_fallthru
      _
    // Predicated region
    $region22: #{block_forward.1} parent=1 // pred_check
      _
    $region23: #{block_forward.1} parent=1 // pred_check_branch
      %62 = sbr.rel (0) target = $region25
    $region24: #{block_forward.1} parent=1 // pred_region
      %63 = dma.done [#allocation6], 14336
    $region25: #{block_forward.1} parent=1 // pred_fallthru
      _
    // Predicated region
    $region26: #{block_forward.1} parent=1 // pred_check
      _
    $region27: #{block_forward.1} parent=1 // pred_check_branch
      %65 = sbr.rel (0) target = $region29
    $region28: #{block_forward.1} parent=1 // pred_region
      %66 = dma.done [#allocation6], 18432
    $region29: #{block_forward.1} parent=1 // pred_fallthru
      _
    // Predicated region
    $region30: #{block_forward.1} parent=1 // pred_check
      _
    $region31: #{block_forward.1} parent=1 // pred_check_branch
      %68 = sbr.rel (0) target = $region33
    $region32: #{block_forward.1} parent=1 // pred_region
      %69 = dma.done [#allocation9], 128
    $region33: #{block_forward.1} parent=1 // pred_fallthru
      _
    %v71 = vld [vmem:[#allocation8] sm:$0xff]
    %72 = vst [vmem:[#allocation2] sm:$0xff] 0.0
    %73 = vst [vmem:[#allocation2 + $0x8] sm:$0xff] 0.0
    %74 = vst [vmem:[#allocation2 + $0x10] sm:$0xff] 0.0
    %75 = vst [vmem:[#allocation2 + $0x18] sm:$0x3] 0.0
    %76 = vst [vmem:[#allocation2 + $0x20] sm:$0xff] 0.0
    %77 = vst [vmem:[#allocation2 + $0x28] sm:$0xff] 0.0
    %78 = vst [vmem:[#allocation2 + $0x30] sm:$0xff] 0.0
    %79 = vst [vmem:[#allocation2 + $0x38] sm:$0x3] 0.0
    %v80 = vld [vmem:[#allocation3] sm:$0xff]
    %81 = vxpose.xlu0.b32.start [1/16] %v80, 128
    %82 = vxpose.xlu0.b32.cont [2/16] 0.0, 128
    %83 = vxpose.xlu0.b32.cont [3/16] 0.0, 128
    %84 = vxpose.xlu0.b32.cont [4/16] 0.0, 128
    %85 = vxpose.xlu0.b32.cont [5/16] 0.0, 128
    %86 = vxpose.xlu0.b32.cont [6/16] 0.0, 128
    %87 = vxpose.xlu0.b32.cont [7/16] 0.0, 128
    %88 = vxpose.xlu0.b32.cont [8/16] 0.0, 128
    %89 = vxpose.xlu0.b32.cont [9/16] 0.0, 128
    %90 = vxpose.xlu0.b32.cont [10/16] 0.0, 128
    %91 = vxpose.xlu0.b32.cont [11/16] 0.0, 128
    %92 = vxpose.xlu0.b32.cont [12/16] 0.0, 128
    %93 = vxpose.xlu0.b32.cont [13/16] 0.0, 128
    %94 = vxpose.xlu0.b32.cont [14/16] 0.0, 128
    %95 = vxpose.xlu0.b32.cont [15/16] 0.0, 128
    %96 = vxpose.xlu0.b32.end [16/16] 0.0, 128
    %v97 = vpop.trf.xlu0
    %v98 = vpop.trf.xlu0
    %v99 = vpop.trf.xlu0
    %v100 = vpop.trf.xlu0
    %v101 = vpop.trf.xlu0
    %v102 = vpop.trf.xlu0
    %v103 = vpop.trf.xlu0
    %v104 = vpop.trf.xlu0
    %v105 = vpop.trf.xlu0
    %v106 = vpop.trf.xlu0
    %v107 = vpop.trf.xlu0
    %v108 = vpop.trf.xlu0
    %v109 = vpop.trf.xlu0
    %v110 = vpop.trf.xlu0
    %v111 = vpop.trf.xlu0
    %v112 = vpop.trf.xlu0
    %vm113 = vcmask 64512
    %114 = vst.msk [vmem:[#allocation2 + $0x5] sm:$0xff] %vm113, %v97
    %115 = vst.msk [vmem:[#allocation2 + $0xd] sm:$0xff] %vm113, %v98
    %s116 = scalar_lea.vmem [#allocation3], 8
    %v117 = vld [vmem:[%s116] sm:$0xff]
    %118 = vxpose.xlu0.b32.start [1/16] %v117, 128
    %119 = vxpose.xlu0.b32.cont [2/16] 0.0, 128
    %120 = vxpose.xlu0.b32.cont [3/16] 0.0, 128
    %121 = vxpose.xlu0.b32.cont [4/16] 0.0, 128
    %122 = vxpose.xlu0.b32.cont [5/16] 0.0, 128
    %123 = vxpose.xlu0.b32.cont [6/16] 0.0, 128
    %124 = vxpose.xlu0.b32.cont [7/16] 0.0, 128
    %125 = vxpose.xlu0.b32.cont [8/16] 0.0, 128
    %126 = vxpose.xlu0.b32.cont [9/16] 0.0, 128
    %127 = vxpose.xlu0.b32.cont [10/16] 0.0, 128
    %128 = vxpose.xlu0.b32.cont [11/16] 0.0, 128
    %129 = vxpose.xlu0.b32.cont [12/16] 0.0, 128
    %130 = vxpose.xlu0.b32.cont [13/16] 0.0, 128
    %131 = vxpose.xlu0.b32.cont [14/16] 0.0, 128
    %132 = vxpose.xlu0.b32.cont [15/16] 0.0, 128
    %133 = vxpose.xlu0.b32.end [16/16] 0.0, 128
    %v134 = vpop.trf.xlu0
    %v135 = vpop.trf.xlu0
    %v136 = vpop.trf.xlu0
    %v137 = vpop.trf.xlu0
    %v138 = vpop.trf.xlu0
    %v139 = vpop.trf.xlu0
    %v140 = vpop.trf.xlu0
    %v141 = vpop.trf.xlu0
    %v142 = vpop.trf.xlu0
    %v143 = vpop.trf.xlu0
    %v144 = vpop.trf.xlu0
    %v145 = vpop.trf.xlu0
    %v146 = vpop.trf.xlu0
    %v147 = vpop.trf.xlu0
    %v148 = vpop.trf.xlu0
    %v149 = vpop.trf.xlu0
    %s150 = scalar_lea.vmem [#allocation2], 32
    %151 = vst.msk [vmem:[%s150 + $0x5] sm:$0xff] %vm113, %v134
    %152 = vst.msk [vmem:[%s150 + $0xd] sm:$0xff] %vm113, %v135
    %v153 = vld [vmem:[#allocation2 + $0x2] sm:$0xff]
    %v154 = vld [vmem:[#allocation2 + $0xa] sm:$0xff]
    %v155 = vld [vmem:[#allocation2 + $0x22] sm:$0xff]
    %v156 = vld [vmem:[#allocation2 + $0x2a] sm:$0xff]
    %v157 = vld [vmem:[#allocation5] sm:$0xff]
    %v158 = vld [vmem:[#allocation5 + $0x8] sm:$0xff]
    %v159 = vld [vmem:[#allocation5 + $0x10] sm:$0xff]
    %v160 = vld [vmem:[#allocation5 + $0x18] sm:$0xff]
    %v161 = vld [vmem:[#allocation5 + $0x20] sm:$0xff]
    %v162 = vld [vmem:[#allocation5 + $0x28] sm:$0xff]
    %v163 = vld [vmem:[#allocation5 + $0x30] sm:$0xff]
    %v164 = vld [vmem:[#allocation5 + $0x38] sm:$0xff]
    %v165 = vld [vmem:[#allocation5 + $0x40] sm:$0xff]
    %v166 = vld [vmem:[#allocation5 + $0x48] sm:$0xff]
    %v167 = vld [vmem:[#allocation5 + $0x50] sm:$0xff]
    %v168 = vld [vmem:[#allocation5 + $0x58] sm:$0xff]
    %v169 = vld [vmem:[#allocation5 + $0x60] sm:$0xff]
    %v170 = vld [vmem:[#allocation5 + $0x68] sm:$0xff]
    %v171 = vld [vmem:[#allocation5 + $0x70] sm:$0xff]
    %v172 = vld [vmem:[#allocation5 + $0x78] sm:$0xff]
    %v173 = vpack.c.bf16 %v154, %v153
    %v174 = vpack.c.bf16 %v156, %v155
    %v175 = vld [vmem:[#allocation2 + $0x3] sm:$0xff]
    %v176 = vld [vmem:[#allocation2 + $0xb] sm:$0xff]
    %v177 = vld [vmem:[#allocation2 + $0x23] sm:$0xff]
    %v178 = vld [vmem:[#allocation2 + $0x2b] sm:$0xff]
    %v179 = vld [vmem:[#allocation5 + $0x80] sm:$0xff]
    %v180 = vld [vmem:[#allocation5 + $0x88] sm:$0xff]
    %v181 = vld [vmem:[#allocation5 + $0x90] sm:$0xff]
    %v182 = vld [vmem:[#allocation5 + $0x98] sm:$0xff]
    %v183 = vld [vmem:[#allocation5 + $0xa0] sm:$0xff]
    %v184 = vld [vmem:[#allocation5 + $0xa8] sm:$0xff]
    %v185 = vld [vmem:[#allocation5 + $0xb0] sm:$0xff]
    %v186 = vld [vmem:[#allocation5 + $0xb8] sm:$0xff]
    %v187 = vld [vmem:[#allocation5 + $0xc0] sm:$0xff]
    %v188 = vld [vmem:[#allocation5 + $0xc8] sm:$0xff]
    %v189 = vld [vmem:[#allocation5 + $0xd0] sm:$0xff]
    %v190 = vld [vmem:[#allocation5 + $0xd8] sm:$0xff]
    %v191 = vld [vmem:[#allocation5 + $0xe0] sm:$0xff]
    %v192 = vld [vmem:[#allocation5 + $0xe8] sm:$0xff]
    %v193 = vld [vmem:[#allocation5 + $0xf0] sm:$0xff]
    %v194 = vld [vmem:[#allocation5 + $0xf8] sm:$0xff]
    %v195 = vpack.c.bf16 %v176, %v175
    %v196 = vpack.c.bf16 %v178, %v177
    %v213 = vunpack.c.l.b16 %v179
    %v214 = vunpack.c.h.b16 %v179
    %v215 = vunpack.c.l.b16 %v180
    %v216 = vunpack.c.h.b16 %v180
    %v217 = vunpack.c.l.b16 %v181
    %v218 = vunpack.c.h.b16 %v181
    %v219 = vunpack.c.l.b16 %v182
    %v220 = vunpack.c.h.b16 %v182
    %v221 = vunpack.c.l.b16 %v183
    %v222 = vunpack.c.h.b16 %v183
    %v223 = vunpack.c.l.b16 %v184
    %v224 = vunpack.c.h.b16 %v184
    %v225 = vunpack.c.l.b16 %v185
    %v226 = vunpack.c.h.b16 %v185
    %v227 = vunpack.c.l.b16 %v186
    %v228 = vunpack.c.h.b16 %v186
    %v229 = vunpack.c.l.b16 %v187
    %v230 = vunpack.c.h.b16 %v187
    %v231 = vunpack.c.l.b16 %v188
    %v232 = vunpack.c.h.b16 %v188
    %v233 = vunpack.c.l.b16 %v189
    %v234 = vunpack.c.h.b16 %v189
    %v235 = vunpack.c.l.b16 %v190
    %v236 = vunpack.c.h.b16 %v190
    %v237 = vunpack.c.l.b16 %v191
    %v238 = vunpack.c.h.b16 %v191
    %v239 = vunpack.c.l.b16 %v192
    %v240 = vunpack.c.h.b16 %v192
    %v241 = vunpack.c.l.b16 %v193
    %v242 = vunpack.c.h.b16 %v193
    %v243 = vunpack.c.l.b16 %v194
    %v244 = vunpack.c.h.b16 %v194
    %v245 = vpack.c.b16 %v215, %v213
    %v246 = vpack.c.b16 %v216, %v214
    %v247 = vpack.c.b16 %v219, %v217
    %v248 = vpack.c.b16 %v220, %v218
    %v249 = vpack.c.b16 %v223, %v221
    %v250 = vpack.c.b16 %v224, %v222
    %v251 = vpack.c.b16 %v227, %v225
    %v252 = vpack.c.b16 %v228, %v226
    %v253 = vpack.c.b16 %v231, %v229
    %v254 = vpack.c.b16 %v232, %v230
    %v255 = vpack.c.b16 %v235, %v233
    %v256 = vpack.c.b16 %v236, %v234
    %v257 = vpack.c.b16 %v239, %v237
    %v258 = vpack.c.b16 %v240, %v238
    %v259 = vpack.c.b16 %v243, %v241
    %v260 = vpack.c.b16 %v244, %v242
    %277 = vmatprep.subr.bf16.mxu0 %v246
    %278 = vmatpush1.bf16.msra.mxu0 %v245
    %279 = vmatprep.subr.bf16.mxu0 %v248
    %280 = vmatpush1.bf16.msra.mxu0 %v247
    %281 = vmatprep.subr.bf16.mxu0 %v250
    %282 = vmatpush1.bf16.msra.mxu0 %v249
    %283 = vmatprep.subr.bf16.mxu0 %v252
    %284 = vmatpush1.bf16.msra.mxu0 %v251
    %285 = vmatprep.subr.bf16.mxu0 %v254
    %286 = vmatpush1.bf16.msra.mxu0 %v253
    %287 = vmatprep.subr.bf16.mxu0 %v256
    %288 = vmatpush1.bf16.msra.mxu0 %v255
    %289 = vmatprep.subr.bf16.mxu0 %v258
    %290 = vmatpush1.bf16.msra.mxu0 %v257
    %291 = vmatprep.subr.bf16.mxu0 %v260
    %292 = vmatpush1.bf16.msra.mxu0 %v259
    %293 = vmatprep.subr.bf16.mxu0 0
    %294 = vmatpush1.bf16.msra.mxu0 0
    %295 = vmatprep.subr.bf16.mxu0 0
    %296 = vmatpush1.bf16.msra.mxu0 0
    %297 = vmatprep.subr.bf16.mxu0 0
    %298 = vmatpush1.bf16.msra.mxu0 0
    %299 = vmatprep.subr.bf16.mxu0 0
    %300 = vmatpush1.bf16.msra.mxu0 0
    %301 = vmatprep.subr.bf16.mxu0 0
    %302 = vmatpush1.bf16.msra.mxu0 0
    %303 = vmatprep.subr.bf16.mxu0 0
    %304 = vmatpush1.bf16.msra.mxu0 0
    %305 = vmatprep.subr.bf16.mxu0 0
    %306 = vmatpush1.bf16.msra.mxu0 0
    %307 = vmatprep.subr.bf16.mxu0 0
    %308 = vmatpush1.bf16.msra.mxu0 0
    %309 = vmatprep.mubr.bf16.mxu0 0
    %310 = vmatmul.mubr.bf16.gmra.mrb[0].mxu0 %v195
    %v311 = vpop.f32.mrb[0].mxu0
    %v312 = vadd.f32 0.0, %v311
    %v313 = vpop.f32.mrb[0].mxu0
    %v314 = vadd.f32 0.0, %v313
    %v315 = vpop.f32.mrb[0].mxu0
    %v316 = vadd.f32 0.0, %v315
    %v317 = vpop.f32.mrb[0].mxu0
    %v318 = vadd.f32 0.0, %v317
    %319 = vmatprep.mubr.bf16.mxu0 0
    %320 = vmatmul.mubr.bf16.gmra.mrb[0].mxu0 %v196
    %v321 = vpop.f32.mrb[0].mxu0
    %v322 = vadd.f32 0.0, %v321
    %v323 = vpop.f32.mrb[0].mxu0
    %v324 = vadd.f32 0.0, %v323
    %v325 = vpop.f32.mrb[0].mxu0
    %v326 = vadd.f32 0.0, %v325
    %v327 = vpop.f32.mrb[0].mxu0
    %v328 = vadd.f32 0.0, %v327
    %329 = vdwg.mxu0
    %v346 = vunpack.c.l.b16 %v157
    %v347 = vunpack.c.h.b16 %v157
    %v348 = vunpack.c.l.b16 %v158
    %v349 = vunpack.c.h.b16 %v158
    %v350 = vunpack.c.l.b16 %v159
    %v351 = vunpack.c.h.b16 %v159
    %v352 = vunpack.c.l.b16 %v160
    %v353 = vunpack.c.h.b16 %v160
    %v354 = vunpack.c.l.b16 %v161
    %v355 = vunpack.c.h.b16 %v161
    %v356 = vunpack.c.l.b16 %v162
    %v357 = vunpack.c.h.b16 %v162
    %v358 = vunpack.c.l.b16 %v163
    %v359 = vunpack.c.h.b16 %v163
    %v360 = vunpack.c.l.b16 %v164
    %v361 = vunpack.c.h.b16 %v164
    %v362 = vunpack.c.l.b16 %v165
    %v363 = vunpack.c.h.b16 %v165
    %v364 = vunpack.c.l.b16 %v166
    %v365 = vunpack.c.h.b16 %v166
    %v366 = vunpack.c.l.b16 %v167
    %v367 = vunpack.c.h.b16 %v167
    %v368 = vunpack.c.l.b16 %v168
    %v369 = vunpack.c.h.b16 %v168
    %v370 = vunpack.c.l.b16 %v169
    %v371 = vunpack.c.h.b16 %v169
    %v372 = vunpack.c.l.b16 %v170
    %v373 = vunpack.c.h.b16 %v170
    %v374 = vunpack.c.l.b16 %v171
    %v375 = vunpack.c.h.b16 %v171
    %v376 = vunpack.c.l.b16 %v172
    %v377 = vunpack.c.h.b16 %v172
    %v378 = vpack.c.b16 %v348, %v346
    %v379 = vpack.c.b16 %v349, %v347
    %v380 = vpack.c.b16 %v352, %v350
    %v381 = vpack.c.b16 %v353, %v351
    %v382 = vpack.c.b16 %v356, %v354
    %v383 = vpack.c.b16 %v357, %v355
    %v384 = vpack.c.b16 %v360, %v358
    %v385 = vpack.c.b16 %v361, %v359
    %v386 = vpack.c.b16 %v364, %v362
    %v387 = vpack.c.b16 %v365, %v363
    %v388 = vpack.c.b16 %v368, %v366
    %v389 = vpack.c.b16 %v369, %v367
    %v390 = vpack.c.b16 %v372, %v370
    %v391 = vpack.c.b16 %v373, %v371
    %v392 = vpack.c.b16 %v376, %v374
    %v393 = vpack.c.b16 %v377, %v375
    %410 = vmatprep.subr.bf16.mxu0 %v379
    %411 = vmatpush1.bf16.msra.mxu0 %v378
    %412 = vmatprep.subr.bf16.mxu0 %v381
    %413 = vmatpush1.bf16.msra.mxu0 %v380
    %414 = vmatprep.subr.bf16.mxu0 %v383
    %415 = vmatpush1.bf16.msra.mxu0 %v382
    %416 = vmatprep.subr.bf16.mxu0 %v385
    %417 = vmatpush1.bf16.msra.mxu0 %v384
    %418 = vmatprep.subr.bf16.mxu0 %v387
    %419 = vmatpush1.bf16.msra.mxu0 %v386
    %420 = vmatprep.subr.bf16.mxu0 %v389
    %421 = vmatpush1.bf16.msra.mxu0 %v388
    %422 = vmatprep.subr.bf16.mxu0 %v391
    %423 = vmatpush1.bf16.msra.mxu0 %v390
    %424 = vmatprep.subr.bf16.mxu0 %v393
    %425 = vmatpush1.bf16.msra.mxu0 %v392
    %426 = vmatprep.subr.bf16.mxu0 0
    %427 = vmatpush1.bf16.msra.mxu0 0
    %428 = vmatprep.subr.bf16.mxu0 0
    %429 = vmatpush1.bf16.msra.mxu0 0
    %430 = vmatprep.subr.bf16.mxu0 0
    %431 = vmatpush1.bf16.msra.mxu0 0
    %432 = vmatprep.subr.bf16.mxu0 0
    %433 = vmatpush1.bf16.msra.mxu0 0
    %434 = vmatprep.subr.bf16.mxu0 0
    %435 = vmatpush1.bf16.msra.mxu0 0
    %436 = vmatprep.subr.bf16.mxu0 0
    %437 = vmatpush1.bf16.msra.mxu0 0
    %438 = vmatprep.subr.bf16.mxu0 0
    %439 = vmatpush1.bf16.msra.mxu0 0
    %440 = vmatprep.subr.bf16.mxu0 0
    %441 = vmatpush1.bf16.msra.mxu0 0
    %442 = vmatprep.mubr.bf16.mxu0 0
    %443 = vmatmul.mubr.bf16.gmra.mrb[0].mxu0 %v173
    %v444 = vpop.f32.mrb[0].mxu0
    %v445 = vadd.f32 %v312, %v444
    %v446 = vpop.f32.mrb[0].mxu0
    %v447 = vadd.f32 %v314, %v446
    %v448 = vpop.f32.mrb[0].mxu0
    %v449 = vadd.f32 %v316, %v448
    %v450 = vpop.f32.mrb[0].mxu0
    %v451 = vadd.f32 %v318, %v450
    %452 = vmatprep.mubr.bf16.mxu0 0
    %453 = vmatmul.mubr.bf16.gmra.mrb[0].mxu0 %v174
    %v454 = vpop.f32.mrb[0].mxu0
    %v455 = vadd.f32 %v322, %v454
    %v456 = vpop.f32.mrb[0].mxu0
    %v457 = vadd.f32 %v324, %v456
    %v458 = vpop.f32.mrb[0].mxu0
    %v459 = vadd.f32 %v326, %v458
    %v460 = vpop.f32.mrb[0].mxu0
    %v461 = vadd.f32 %v328, %v460
    %462 = vdwg.mxu0
    %v463 = vld [vmem:[#allocation2 + $0x4] sm:$0xff]
    %v464 = vld [vmem:[#allocation2 + $0xc] sm:$0xff]
    %v465 = vld [vmem:[#allocation2 + $0x24] sm:$0xff]
    %v466 = vld [vmem:[#allocation2 + $0x2c] sm:$0xff]
    %v467 = vld [vmem:[#allocation5 + $0x100] sm:$0xff]
    %v468 = vld [vmem:[#allocation5 + $0x108] sm:$0xff]
    %v469 = vld [vmem:[#allocation5 + $0x110] sm:$0xff]
    %v470 = vld [vmem:[#allocation5 + $0x118] sm:$0xff]
    %v471 = vld [vmem:[#allocation5 + $0x120] sm:$0xff]
    %v472 = vld [vmem:[#allocation5 + $0x128] sm:$0xff]
    %v473 = vld [vmem:[#allocation5 + $0x130] sm:$0xff]
    %v474 = vld [vmem:[#allocation5 + $0x138] sm:$0xff]
    %v475 = vld [vmem:[#allocation5 + $0x140] sm:$0xff]
    %v476 = vld [vmem:[#allocation5 + $0x148] sm:$0xff]
    %v477 = vld [vmem:[#allocation5 + $0x150] sm:$0xff]
    %v478 = vld [vmem:[#allocation5 + $0x158] sm:$0xff]
    %v479 = vld [vmem:[#allocation5 + $0x160] sm:$0xff]
    %v480 = vld [vmem:[#allocation5 + $0x168] sm:$0xff]
    %v481 = vld [vmem:[#allocation5 + $0x170] sm:$0xff]
    %v482 = vld [vmem:[#allocation5 + $0x178] sm:$0xff]
    %v483 = vpack.c.bf16 %v464, %v463
    %v484 = vpack.c.bf16 %v466, %v465
    %v501 = vunpack.c.l.b16 %v467
    %v502 = vunpack.c.h.b16 %v467
    %v503 = vunpack.c.l.b16 %v468
    %v504 = vunpack.c.h.b16 %v468
    %v505 = vunpack.c.l.b16 %v469
    %v506 = vunpack.c.h.b16 %v469
    %v507 = vunpack.c.l.b16 %v470
    %v508 = vunpack.c.h.b16 %v470
    %v509 = vunpack.c.l.b16 %v471
    %v510 = vunpack.c.h.b16 %v471
    %v511 = vunpack.c.l.b16 %v472
    %v512 = vunpack.c.h.b16 %v472
    %v513 = vunpack.c.l.b16 %v473
    %v514 = vunpack.c.h.b16 %v473
    %v515 = vunpack.c.l.b16 %v474
    %v516 = vunpack.c.h.b16 %v474
    %v517 = vunpack.c.l.b16 %v475
    %v518 = vunpack.c.h.b16 %v475
    %v519 = vunpack.c.l.b16 %v476
    %v520 = vunpack.c.h.b16 %v476
    %v521 = vunpack.c.l.b16 %v477
    %v522 = vunpack.c.h.b16 %v477
    %v523 = vunpack.c.l.b16 %v478
    %v524 = vunpack.c.h.b16 %v478
    %v525 = vunpack.c.l.b16 %v479
    %v526 = vunpack.c.h.b16 %v479
    %v527 = vunpack.c.l.b16 %v480
    %v528 = vunpack.c.h.b16 %v480
    %v529 = vunpack.c.l.b16 %v481
    %v530 = vunpack.c.h.b16 %v481
    %v531 = vunpack.c.l.b16 %v482
    %v532 = vunpack.c.h.b16 %v482
    %v533 = vpack.c.b16 %v503, %v501
    %v534 = vpack.c.b16 %v504, %v502
    %v535 = vpack.c.b16 %v507, %v505
    %v536 = vpack.c.b16 %v508, %v506
    %v537 = vpack.c.b16 %v511, %v509
    %v538 = vpack.c.b16 %v512, %v510
    %v539 = vpack.c.b16 %v515, %v513
    %v540 = vpack.c.b16 %v516, %v514
    %v541 = vpack.c.b16 %v519, %v517
    %v542 = vpack.c.b16 %v520, %v518
    %v543 = vpack.c.b16 %v523, %v521
    %v544 = vpack.c.b16 %v524, %v522
    %v545 = vpack.c.b16 %v527, %v525
    %v546 = vpack.c.b16 %v528, %v526
    %v547 = vpack.c.b16 %v531, %v529
    %v548 = vpack.c.b16 %v532, %v530
    %565 = vmatprep.subr.bf16.mxu0 %v534
    %566 = vmatpush1.bf16.msra.mxu0 %v533
    %567 = vmatprep.subr.bf16.mxu0 %v536
    %568 = vmatpush1.bf16.msra.mxu0 %v535
    %569 = vmatprep.subr.bf16.mxu0 %v538
    %570 = vmatpush1.bf16.msra.mxu0 %v537
    %571 = vmatprep.subr.bf16.mxu0 %v540
    %572 = vmatpush1.bf16.msra.mxu0 %v539
    %573 = vmatprep.subr.bf16.mxu0 %v542
    %574 = vmatpush1.bf16.msra.mxu0 %v541
    %575 = vmatprep.subr.bf16.mxu0 %v544
    %576 = vmatpush1.bf16.msra.mxu0 %v543
    %577 = vmatprep.subr.bf16.mxu0 %v546
    %578 = vmatpush1.bf16.msra.mxu0 %v545
    %579 = vmatprep.subr.bf16.mxu0 %v548
    %580 = vmatpush1.bf16.msra.mxu0 %v547
    %581 = vmatprep.subr.bf16.mxu0 0
    %582 = vmatpush1.bf16.msra.mxu0 0
    %583 = vmatprep.subr.bf16.mxu0 0
    %584 = vmatpush1.bf16.msra.mxu0 0
    %585 = vmatprep.subr.bf16.mxu0 0
    %586 = vmatpush1.bf16.msra.mxu0 0
    %587 = vmatprep.subr.bf16.mxu0 0
    %588 = vmatpush1.bf16.msra.mxu0 0
    %589 = vmatprep.subr.bf16.mxu0 0
    %590 = vmatpush1.bf16.msra.mxu0 0
    %591 = vmatprep.subr.bf16.mxu0 0
    %592 = vmatpush1.bf16.msra.mxu0 0
    %593 = vmatprep.subr.bf16.mxu0 0
    %594 = vmatpush1.bf16.msra.mxu0 0
    %595 = vmatprep.subr.bf16.mxu0 0
    %596 = vmatpush1.bf16.msra.mxu0 0
    %597 = vmatprep.mubr.bf16.mxu0 0
    %598 = vmatmul.mubr.bf16.gmra.mrb[0].mxu0 %v483
    %v599 = vpop.f32.mrb[0].mxu0
    %v600 = vadd.f32 0.0, %v599
    %v601 = vpop.f32.mrb[0].mxu0
    %v602 = vadd.f32 0.0, %v601
    %v603 = vpop.f32.mrb[0].mxu0
    %v604 = vadd.f32 0.0, %v603
    %v605 = vpop.f32.mrb[0].mxu0
    %v606 = vadd.f32 0.0, %v605
    %607 = vmatprep.mubr.bf16.mxu0 0
    %608 = vmatmul.mubr.bf16.gmra.mrb[0].mxu0 %v484
    %v609 = vpop.f32.mrb[0].mxu0
    %v610 = vadd.f32 0.0, %v609
    %v611 = vpop.f32.mrb[0].mxu0
    %v612 = vadd.f32 0.0, %v611
    %v613 = vpop.f32.mrb[0].mxu0
    %v614 = vadd.f32 0.0, %v613
    %v615 = vpop.f32.mrb[0].mxu0
    %v616 = vadd.f32 0.0, %v615
    %617 = vdwg.mxu0
    %v618 = vadd.f32 %v445, %v600
    %v619 = vadd.f32 %v447, %v602
    %v620 = vadd.f32 %v449, %v604
    %v621 = vadd.f32 %v451, %v606
    %v622 = vadd.f32 %v455, %v610
    %v623 = vadd.f32 %v457, %v612
    %v624 = vadd.f32 %v459, %v614
    %v625 = vadd.f32 %v461, %v616
    %v626 = vld [vmem:[#allocation2 + $0x5] sm:$0xff]
    %v627 = vld [vmem:[#allocation2 + $0xd] sm:$0xff]
    %v628 = vld [vmem:[#allocation2 + $0x25] sm:$0xff]
    %v629 = vld [vmem:[#allocation2 + $0x2d] sm:$0xff]
    %v630 = vld [vmem:[#allocation5 + $0x180] sm:$0xff]
    %v631 = vld [vmem:[#allocation5 + $0x188] sm:$0xff]
    %v632 = vld [vmem:[#allocation5 + $0x190] sm:$0xff]
    %v633 = vld [vmem:[#allocation5 + $0x198] sm:$0xff]
    %v634 = vld [vmem:[#allocation5 + $0x1a0] sm:$0xff]
    %v635 = vld [vmem:[#allocation5 + $0x1a8] sm:$0xff]
    %v636 = vld [vmem:[#allocation5 + $0x1b0] sm:$0xff]
    %v637 = vld [vmem:[#allocation5 + $0x1b8] sm:$0xff]
    %v638 = vld [vmem:[#allocation5 + $0x1c0] sm:$0xff]
    %v639 = vld [vmem:[#allocation5 + $0x1c8] sm:$0xff]
    %v640 = vld [vmem:[#allocation5 + $0x1d0] sm:$0xff]
    %v641 = vld [vmem:[#allocation5 + $0x1d8] sm:$0xff]
    %v642 = vld [vmem:[#allocation5 + $0x1e0] sm:$0xff]
    %v643 = vld [vmem:[#allocation5 + $0x1e8] sm:$0xff]
    %v644 = vld [vmem:[#allocation5 + $0x1f0] sm:$0xff]
    %v645 = vld [vmem:[#allocation5 + $0x1f8] sm:$0xff]
    %v646 = vpack.c.bf16 %v627, %v626
    %v647 = vpack.c.bf16 %v629, %v628
    %v664 = vunpack.c.l.b16 %v630
    %v665 = vunpack.c.h.b16 %v630
    %v666 = vunpack.c.l.b16 %v631
    %v667 = vunpack.c.h.b16 %v631
    %v668 = vunpack.c.l.b16 %v632
    %v669 = vunpack.c.h.b16 %v632
    %v670 = vunpack.c.l.b16 %v633
    %v671 = vunpack.c.h.b16 %v633
    %v672 = vunpack.c.l.b16 %v634
    %v673 = vunpack.c.h.b16 %v634
    %v674 = vunpack.c.l.b16 %v635
    %v675 = vunpack.c.h.b16 %v635
    %v676 = vunpack.c.l.b16 %v636
    %v677 = vunpack.c.h.b16 %v636
    %v678 = vunpack.c.l.b16 %v637
    %v679 = vunpack.c.h.b16 %v637
    %v680 = vunpack.c.l.b16 %v638
    %v681 = vunpack.c.h.b16 %v638
    %v682 = vunpack.c.l.b16 %v639
    %v683 = vunpack.c.h.b16 %v639
    %v684 = vunpack.c.l.b16 %v640
    %v685 = vunpack.c.h.b16 %v640
    %v686 = vunpack.c.l.b16 %v641
    %v687 = vunpack.c.h.b16 %v641
    %v688 = vunpack.c.l.b16 %v642
    %v689 = vunpack.c.h.b16 %v642
    %v690 = vunpack.c.l.b16 %v643
    %v691 = vunpack.c.h.b16 %v643
    %v692 = vunpack.c.l.b16 %v644
    %v693 = vunpack.c.h.b16 %v644
    %v694 = vunpack.c.l.b16 %v645
    %v695 = vunpack.c.h.b16 %v645
    %v696 = vpack.c.b16 %v666, %v664
    %v697 = vpack.c.b16 %v667, %v665
    %v698 = vpack.c.b16 %v670, %v668
    %v699 = vpack.c.b16 %v671, %v669
    %v700 = vpack.c.b16 %v674, %v672
    %v701 = vpack.c.b16 %v675, %v673
    %v702 = vpack.c.b16 %v678, %v676
    %v703 = vpack.c.b16 %v679, %v677
    %v704 = vpack.c.b16 %v682, %v680
    %v705 = vpack.c.b16 %v683, %v681
    %v706 = vpack.c.b16 %v686, %v684
    %v707 = vpack.c.b16 %v687, %v685
    %v708 = vpack.c.b16 %v690, %v688
    %v709 = vpack.c.b16 %v691, %v689
    %v710 = vpack.c.b16 %v694, %v692
    %v711 = vpack.c.b16 %v695, %v693
    %728 = vmatprep.subr.bf16.mxu0 %v697
    %729 = vmatpush1.bf16.msra.mxu0 %v696
    %730 = vmatprep.subr.bf16.mxu0 %v699
    %731 = vmatpush1.bf16.msra.mxu0 %v698
    %732 = vmatprep.subr.bf16.mxu0 %v701
    %733 = vmatpush1.bf16.msra.mxu0 %v700
    %734 = vmatprep.subr.bf16.mxu0 %v703
    %735 = vmatpush1.bf16.msra.mxu0 %v702
    %736 = vmatprep.subr.bf16.mxu0 %v705
    %737 = vmatpush1.bf16.msra.mxu0 %v704
    %738 = vmatprep.subr.bf16.mxu0 %v707
    %739 = vmatpush1.bf16.msra.mxu0 %v706
    %740 = vmatprep.subr.bf16.mxu0 %v709
    %741 = vmatpush1.bf16.msra.mxu0 %v708
    %742 = vmatprep.subr.bf16.mxu0 %v711
    %743 = vmatpush1.bf16.msra.mxu0 %v710
    %744 = vmatprep.subr.bf16.mxu0 0
    %745 = vmatpush1.bf16.msra.mxu0 0
    %746 = vmatprep.subr.bf16.mxu0 0
    %747 = vmatpush1.bf16.msra.mxu0 0
    %748 = vmatprep.subr.bf16.mxu0 0
    %749 = vmatpush1.bf16.msra.mxu0 0
    %750 = vmatprep.subr.bf16.mxu0 0
    %751 = vmatpush1.bf16.msra.mxu0 0
    %752 = vmatprep.subr.bf16.mxu0 0
    %753 = vmatpush1.bf16.msra.mxu0 0
    %754 = vmatprep.subr.bf16.mxu0 0
    %755 = vmatpush1.bf16.msra.mxu0 0
    %756 = vmatprep.subr.bf16.mxu0 0
    %757 = vmatpush1.bf16.msra.mxu0 0
    %758 = vmatprep.subr.bf16.mxu0 0
    %759 = vmatpush1.bf16.msra.mxu0 0
    %760 = vmatprep.mubr.bf16.mxu0 0
    %761 = vmatmul.mubr.bf16.gmra.mrb[0].mxu0 %v646
    %v762 = vpop.f32.mrb[0].mxu0
    %v763 = vadd.f32 0.0, %v762
    %v764 = vpop.f32.mrb[0].mxu0
    %v765 = vadd.f32 0.0, %v764
    %v766 = vpop.f32.mrb[0].mxu0
    %v767 = vadd.f32 0.0, %v766
    %v768 = vpop.f32.mrb[0].mxu0
    %v769 = vadd.f32 0.0, %v768
    %770 = vmatprep.mubr.bf16.mxu0 0
    %771 = vmatmul.mubr.bf16.gmra.mrb[0].mxu0 %v647
    %v772 = vpop.f32.mrb[0].mxu0
    %v773 = vadd.f32 0.0, %v772
    %v774 = vpop.f32.mrb[0].mxu0
    %v775 = vadd.f32 0.0, %v774
    %v776 = vpop.f32.mrb[0].mxu0
    %v777 = vadd.f32 0.0, %v776
    %v778 = vpop.f32.mrb[0].mxu0
    %v779 = vadd.f32 0.0, %v778
    %780 = vdwg.mxu0
    %v781 = vadd.f32 %v618, %v763
    %v782 = vadd.f32 %v619, %v765
    %v783 = vadd.f32 %v620, %v767
    %v784 = vadd.f32 %v621, %v769
    %v785 = vadd.f32 %v622, %v773
    %v786 = vadd.f32 %v623, %v775
    %v787 = vadd.f32 %v624, %v777
    %v788 = vadd.f32 %v625, %v779
    %v789 = vld [vmem:[#allocation2 + $0x6] sm:$0xff]
    %v790 = vld [vmem:[#allocation2 + $0xe] sm:$0xff]
    %v791 = vld [vmem:[#allocation2 + $0x26] sm:$0xff]
    %v792 = vld [vmem:[#allocation2 + $0x2e] sm:$0xff]
    %v793 = vld [vmem:[#allocation5 + $0x200] sm:$0xff]
    %v794 = vld [vmem:[#allocation5 + $0x208] sm:$0xff]
    %v795 = vld [vmem:[#allocation5 + $0x210] sm:$0xff]
    %v796 = vld [vmem:[#allocation5 + $0x218] sm:$0xff]
    %v797 = vld [vmem:[#allocation5 + $0x220] sm:$0xff]
    %v798 = vld [vmem:[#allocation5 + $0x228] sm:$0xff]
    %v799 = vld [vmem:[#allocation5 + $0x230] sm:$0xff]
    %v800 = vld [vmem:[#allocation5 + $0x238] sm:$0xff]
    %v801 = vld [vmem:[#allocation5 + $0x240] sm:$0xff]
    %v802 = vld [vmem:[#allocation5 + $0x248] sm:$0xff]
    %v803 = vld [vmem:[#allocation5 + $0x250] sm:$0xff]
    %v804 = vld [vmem:[#allocation5 + $0x258] sm:$0xff]
    %v805 = vld [vmem:[#allocation5 + $0x260] sm:$0xff]
    %v806 = vld [vmem:[#allocation5 + $0x268] sm:$0xff]
    %v807 = vld [vmem:[#allocation5 + $0x270] sm:$0xff]
    %v808 = vld [vmem:[#allocation5 + $0x278] sm:$0xff]
    %v809 = vpack.c.bf16 %v790, %v789
    %v810 = vpack.c.bf16 %v792, %v791
    %v827 = vunpack.c.l.b16 %v793
    %v828 = vunpack.c.h.b16 %v793
    %v829 = vunpack.c.l.b16 %v794
    %v830 = vunpack.c.h.b16 %v794
    %v831 = vunpack.c.l.b16 %v795
    %v832 = vunpack.c.h.b16 %v795
    %v833 = vunpack.c.l.b16 %v796
    %v834 = vunpack.c.h.b16 %v796
    %v835 = vunpack.c.l.b16 %v797
    %v836 = vunpack.c.h.b16 %v797
    %v837 = vunpack.c.l.b16 %v798
    %v838 = vunpack.c.h.b16 %v798
    %v839 = vunpack.c.l.b16 %v799
    %v840 = vunpack.c.h.b16 %v799
    %v841 = vunpack.c.l.b16 %v800
    %v842 = vunpack.c.h.b16 %v800
    %v843 = vunpack.c.l.b16 %v801
    %v844 = vunpack.c.h.b16 %v801
    %v845 = vunpack.c.l.b16 %v802
    %v846 = vunpack.c.h.b16 %v802
    %v847 = vunpack.c.l.b16 %v803
    %v848 = vunpack.c.h.b16 %v803
    %v849 = vunpack.c.l.b16 %v804
    %v850 = vunpack.c.h.b16 %v804
    %v851 = vunpack.c.l.b16 %v805
    %v852 = vunpack.c.h.b16 %v805
    %v853 = vunpack.c.l.b16 %v806
    %v854 = vunpack.c.h.b16 %v806
    %v855 = vunpack.c.l.b16 %v807
    %v856 = vunpack.c.h.b16 %v807
    %v857 = vunpack.c.l.b16 %v808
    %v858 = vunpack.c.h.b16 %v808
    %v859 = vpack.c.b16 %v829, %v827
    %v860 = vpack.c.b16 %v830, %v828
    %v861 = vpack.c.b16 %v833, %v831
    %v862 = vpack.c.b16 %v834, %v832
    %v863 = vpack.c.b16 %v837, %v835
    %v864 = vpack.c.b16 %v838, %v836
    %v865 = vpack.c.b16 %v841, %v839
    %v866 = vpack.c.b16 %v842, %v840
    %v867 = vpack.c.b16 %v845, %v843
    %v868 = vpack.c.b16 %v846, %v844
    %v869 = vpack.c.b16 %v849, %v847
    %v870 = vpack.c.b16 %v850, %v848
    %v871 = vpack.c.b16 %v853, %v851
    %v872 = vpack.c.b16 %v854, %v852
    %v873 = vpack.c.b16 %v857, %v855
    %v874 = vpack.c.b16 %v858, %v856
    %891 = vmatprep.subr.bf16.mxu0 %v860
    %892 = vmatpush1.bf16.msra.mxu0 %v859
    %893 = vmatprep.subr.bf16.mxu0 %v862
    %894 = vmatpush1.bf16.msra.mxu0 %v861
    %895 = vmatprep.subr.bf16.mxu0 %v864
    %896 = vmatpush1.bf16.msra.mxu0 %v863
    %897 = vmatprep.subr.bf16.mxu0 %v866
    %898 = vmatpush1.bf16.msra.mxu0 %v865
    %899 = vmatprep.subr.bf16.mxu0 %v868
    %900 = vmatpush1.bf16.msra.mxu0 %v867
    %901 = vmatprep.subr.bf16.mxu0 %v870
    %902 = vmatpush1.bf16.msra.mxu0 %v869
    %903 = vmatprep.subr.bf16.mxu0 %v872
    %904 = vmatpush1.bf16.msra.mxu0 %v871
    %905 = vmatprep.subr.bf16.mxu0 %v874
    %906 = vmatpush1.bf16.msra.mxu0 %v873
    %907 = vmatprep.subr.bf16.mxu0 0
    %908 = vmatpush1.bf16.msra.mxu0 0
    %909 = vmatprep.subr.bf16.mxu0 0
    %910 = vmatpush1.bf16.msra.mxu0 0
    %911 = vmatprep.subr.bf16.mxu0 0
    %912 = vmatpush1.bf16.msra.mxu0 0
    %913 = vmatprep.subr.bf16.mxu0 0
    %914 = vmatpush1.bf16.msra.mxu0 0
    %915 = vmatprep.subr.bf16.mxu0 0
    %916 = vmatpush1.bf16.msra.mxu0 0
    %917 = vmatprep.subr.bf16.mxu0 0
    %918 = vmatpush1.bf16.msra.mxu0 0
    %919 = vmatprep.subr.bf16.mxu0 0
    %920 = vmatpush1.bf16.msra.mxu0 0
    %921 = vmatprep.subr.bf16.mxu0 0
    %922 = vmatpush1.bf16.msra.mxu0 0
    %923 = vmatprep.mubr.bf16.mxu0 0
    %924 = vmatmul.mubr.bf16.gmra.mrb[0].mxu0 %v809
    %v925 = vpop.f32.mrb[0].mxu0
    %v926 = vadd.f32 0.0, %v925
    %v927 = vpop.f32.mrb[0].mxu0
    %v928 = vadd.f32 0.0, %v927
    %v929 = vpop.f32.mrb[0].mxu0
    %v930 = vadd.f32 0.0, %v929
    %v931 = vpop.f32.mrb[0].mxu0
    %v932 = vadd.f32 0.0, %v931
    %933 = vmatprep.mubr.bf16.mxu0 0
    %934 = vmatmul.mubr.bf16.gmra.mrb[0].mxu0 %v810
    %v935 = vpop.f32.mrb[0].mxu0
    %v936 = vadd.f32 0.0, %v935
    %v937 = vpop.f32.mrb[0].mxu0
    %v938 = vadd.f32 0.0, %v937
    %v939 = vpop.f32.mrb[0].mxu0
    %v940 = vadd.f32 0.0, %v939
    %v941 = vpop.f32.mrb[0].mxu0
    %v942 = vadd.f32 0.0, %v941
    %943 = vdwg.mxu0
    %v944 = vadd.f32 %v781, %v926
    %v945 = vadd.f32 %v782, %v928
    %v946 = vadd.f32 %v783, %v930
    %v947 = vadd.f32 %v784, %v932
    %v948 = vadd.f32 %v785, %v936
    %v949 = vadd.f32 %v786, %v938
    %v950 = vadd.f32 %v787, %v940
    %v951 = vadd.f32 %v788, %v942
    %v952 = vld [vmem:[#allocation2 + $0x7] sm:$0xff]
    %v953 = vld [vmem:[#allocation2 + $0xf] sm:$0xff]
    %v954 = vld [vmem:[#allocation2 + $0x27] sm:$0xff]
    %v955 = vld [vmem:[#allocation2 + $0x2f] sm:$0xff]
    %v956 = vld [vmem:[#allocation5 + $0x280] sm:$0xff]
    %v957 = vld [vmem:[#allocation5 + $0x288] sm:$0xff]
    %v958 = vld [vmem:[#allocation5 + $0x290] sm:$0xff]
    %v959 = vld [vmem:[#allocation5 + $0x298] sm:$0xff]
    %v960 = vld [vmem:[#allocation5 + $0x2a0] sm:$0xff]
    %v961 = vld [vmem:[#allocation5 + $0x2a8] sm:$0xff]
    %v962 = vld [vmem:[#allocation5 + $0x2b0] sm:$0xff]
    %v963 = vld [vmem:[#allocation5 + $0x2b8] sm:$0xff]
    %v964 = vld [vmem:[#allocation5 + $0x2c0] sm:$0xff]
    %v965 = vld [vmem:[#allocation5 + $0x2c8] sm:$0xff]
    %v966 = vld [vmem:[#allocation5 + $0x2d0] sm:$0xff]
    %v967 = vld [vmem:[#allocation5 + $0x2d8] sm:$0xff]
    %v968 = vld [vmem:[#allocation5 + $0x2e0] sm:$0xff]
    %v969 = vld [vmem:[#allocation5 + $0x2e8] sm:$0xff]
    %v970 = vld [vmem:[#allocation5 + $0x2f0] sm:$0xff]
    %v971 = vld [vmem:[#allocation5 + $0x2f8] sm:$0xff]
    %v972 = vpack.c.bf16 %v953, %v952
    %v973 = vpack.c.bf16 %v955, %v954
    %v990 = vunpack.c.l.b16 %v956
    %v991 = vunpack.c.h.b16 %v956
    %v992 = vunpack.c.l.b16 %v957
    %v993 = vunpack.c.h.b16 %v957
    %v994 = vunpack.c.l.b16 %v958
    %v995 = vunpack.c.h.b16 %v958
    %v996 = vunpack.c.l.b16 %v959
    %v997 = vunpack.c.h.b16 %v959
    %v998 = vunpack.c.l.b16 %v960
    %v999 = vunpack.c.h.b16 %v960
    %v1000 = vunpack.c.l.b16 %v961
    %v1001 = vunpack.c.h.b16 %v961
    %v1002 = vunpack.c.l.b16 %v962
    %v1003 = vunpack.c.h.b16 %v962
    %v1004 = vunpack.c.l.b16 %v963
    %v1005 = vunpack.c.h.b16 %v963
    %v1006 = vunpack.c.l.b16 %v964
    %v1007 = vunpack.c.h.b16 %v964
    %v1008 = vunpack.c.l.b16 %v965
    %v1009 = vunpack.c.h.b16 %v965
    %v1010 = vunpack.c.l.b16 %v966
    %v1011 = vunpack.c.h.b16 %v966
    %v1012 = vunpack.c.l.b16 %v967
    %v1013 = vunpack.c.h.b16 %v967
    %v1014 = vunpack.c.l.b16 %v968
    %v1015 = vunpack.c.h.b16 %v968
    %v1016 = vunpack.c.l.b16 %v969
    %v1017 = vunpack.c.h.b16 %v969
    %v1018 = vunpack.c.l.b16 %v970
    %v1019 = vunpack.c.h.b16 %v970
    %v1020 = vunpack.c.l.b16 %v971
    %v1021 = vunpack.c.h.b16 %v971
    %v1022 = vpack.c.b16 %v992, %v990
    %v1023 = vpack.c.b16 %v993, %v991
    %v1024 = vpack.c.b16 %v996, %v994
    %v1025 = vpack.c.b16 %v997, %v995
    %v1026 = vpack.c.b16 %v1000, %v998
    %v1027 = vpack.c.b16 %v1001, %v999
    %v1028 = vpack.c.b16 %v1004, %v1002
    %v1029 = vpack.c.b16 %v1005, %v1003
    %v1030 = vpack.c.b16 %v1008, %v1006
    %v1031 = vpack.c.b16 %v1009, %v1007
    %v1032 = vpack.c.b16 %v1012, %v1010
    %v1033 = vpack.c.b16 %v1013, %v1011
    %v1034 = vpack.c.b16 %v1016, %v1014
    %v1035 = vpack.c.b16 %v1017, %v1015
    %v1036 = vpack.c.b16 %v1020, %v1018
    %v1037 = vpack.c.b16 %v1021, %v1019
    %1054 = vmatprep.subr.bf16.mxu0 %v1023
    %1055 = vmatpush1.bf16.msra.mxu0 %v1022
    %1056 = vmatprep.subr.bf16.mxu0 %v1025
    %1057 = vmatpush1.bf16.msra.mxu0 %v1024
    %1058 = vmatprep.subr.bf16.mxu0 %v1027
    %1059 = vmatpush1.bf16.msra.mxu0 %v1026
    %1060 = vmatprep.subr.bf16.mxu0 %v1029
    %1061 = vmatpush1.bf16.msra.mxu0 %v1028
    %1062 = vmatprep.subr.bf16.mxu0 %v1031
    %1063 = vmatpush1.bf16.msra.mxu0 %v1030
    %1064 = vmatprep.subr.bf16.mxu0 %v1033
    %1065 = vmatpush1.bf16.msra.mxu0 %v1032
    %1066 = vmatprep.subr.bf16.mxu0 %v1035
    %1067 = vmatpush1.bf16.msra.mxu0 %v1034
    %1068 = vmatprep.subr.bf16.mxu0 %v1037
    %1069 = vmatpush1.bf16.msra.mxu0 %v1036
    %1070 = vmatprep.subr.bf16.mxu0 0
    %1071 = vmatpush1.bf16.msra.mxu0 0
    %1072 = vmatprep.subr.bf16.mxu0 0
    %1073 = vmatpush1.bf16.msra.mxu0 0
    %1074 = vmatprep.subr.bf16.mxu0 0
    %1075 = vmatpush1.bf16.msra.mxu0 0
    %1076 = vmatprep.subr.bf16.mxu0 0
    %1077 = vmatpush1.bf16.msra.mxu0 0
    %1078 = vmatprep.subr.bf16.mxu0 0
    %1079 = vmatpush1.bf16.msra.mxu0 0
    %1080 = vmatprep.subr.bf16.mxu0 0
    %1081 = vmatpush1.bf16.msra.mxu0 0
    %1082 = vmatprep.subr.bf16.mxu0 0
    %1083 = vmatpush1.bf16.msra.mxu0 0
    %1084 = vmatprep.subr.bf16.mxu0 0
    %1085 = vmatpush1.bf16.msra.mxu0 0
    %1086 = vmatprep.mubr.bf16.mxu0 0
    %1087 = vmatmul.mubr.bf16.gmra.mrb[0].mxu0 %v972
    %v1088 = vpop.f32.mrb[0].mxu0
    %v1089 = vadd.f32 0.0, %v1088
    %v1090 = vpop.f32.mrb[0].mxu0
    %v1091 = vadd.f32 0.0, %v1090
    %v1092 = vpop.f32.mrb[0].mxu0
    %v1093 = vadd.f32 0.0, %v1092
    %v1094 = vpop.f32.mrb[0].mxu0
    %v1095 = vadd.f32 0.0, %v1094
    %1096 = vmatprep.mubr.bf16.mxu0 0
    %1097 = vmatmul.mubr.bf16.gmra.mrb[0].mxu0 %v973
    %v1098 = vpop.f32.mrb[0].mxu0
    %v1099 = vadd.f32 0.0, %v1098
    %v1100 = vpop.f32.mrb[0].mxu0
    %v1101 = vadd.f32 0.0, %v1100
    %v1102 = vpop.f32.mrb[0].mxu0
    %v1103 = vadd.f32 0.0, %v1102
    %v1104 = vpop.f32.mrb[0].mxu0
    %v1105 = vadd.f32 0.0, %v1104
    %1106 = vdwg.mxu0
    %v1107 = vadd.f32 %v944, %v1089
    %v1108 = vadd.f32 %v945, %v1091
    %v1109 = vadd.f32 %v946, %v1093
    %v1110 = vadd.f32 %v947, %v1095
    %v1111 = vadd.f32 %v948, %v1099
    %v1112 = vadd.f32 %v949, %v1101
    %v1113 = vadd.f32 %v950, %v1103
    %v1114 = vadd.f32 %v951, %v1105
    %v1115 = vld [vmem:[#allocation2 + $0x8] sm:$0xff]
    %v1116 = vld [vmem:[#allocation2 + $0x10] sm:$0xff]
    %v1117 = vld [vmem:[#allocation2 + $0x28] sm:$0xff]
    %v1118 = vld [vmem:[#allocation2 + $0x30] sm:$0xff]
    %v1119 = vld [vmem:[#allocation5 + $0x300] sm:$0xff]
    %v1120 = vld [vmem:[#allocation5 + $0x308] sm:$0xff]
    %v1121 = vld [vmem:[#allocation5 + $0x310] sm:$0xff]
    %v1122 = vld [vmem:[#allocation5 + $0x318] sm:$0xff]
    %v1123 = vld [vmem:[#allocation5 + $0x320] sm:$0xff]
    %v1124 = vld [vmem:[#allocation5 + $0x328] sm:$0xff]
    %v1125 = vld [vmem:[#allocation5 + $0x330] sm:$0xff]
    %v1126 = vld [vmem:[#allocation5 + $0x338] sm:$0xff]
    %v1127 = vld [vmem:[#allocation5 + $0x340] sm:$0xff]
    %v1128 = vld [vmem:[#allocation5 + $0x348] sm:$0xff]
    %v1129 = vld [vmem:[#allocation5 + $0x350] sm:$0xff]
    %v1130 = vld [vmem:[#allocation5 + $0x358] sm:$0xff]
    %v1131 = vld [vmem:[#allocation5 + $0x360] sm:$0xff]
    %v1132 = vld [vmem:[#allocation5 + $0x368] sm:$0xff]
    %v1133 = vld [vmem:[#allocation5 + $0x370] sm:$0xff]
    %v1134 = vld [vmem:[#allocation5 + $0x378] sm:$0xff]
    %v1135 = vpack.c.bf16 %v1116, %v1115
    %v1136 = vpack.c.bf16 %v1118, %v1117
    %v1153 = vunpack.c.l.b16 %v1119
    %v1154 = vunpack.c.h.b16 %v1119
    %v1155 = vunpack.c.l.b16 %v1120
    %v1156 = vunpack.c.h.b16 %v1120
    %v1157 = vunpack.c.l.b16 %v1121
    %v1158 = vunpack.c.h.b16 %v1121
    %v1159 = vunpack.c.l.b16 %v1122
    %v1160 = vunpack.c.h.b16 %v1122
    %v1161 = vunpack.c.l.b16 %v1123
    %v1162 = vunpack.c.h.b16 %v1123
    %v1163 = vunpack.c.l.b16 %v1124
    %v1164 = vunpack.c.h.b16 %v1124
    %v1165 = vunpack.c.l.b16 %v1125
    %v1166 = vunpack.c.h.b16 %v1125
    %v1167 = vunpack.c.l.b16 %v1126
    %v1168 = vunpack.c.h.b16 %v1126
    %v1169 = vunpack.c.l.b16 %v1127
    %v1170 = vunpack.c.h.b16 %v1127
    %v1171 = vunpack.c.l.b16 %v1128
    %v1172 = vunpack.c.h.b16 %v1128
    %v1173 = vunpack.c.l.b16 %v1129
    %v1174 = vunpack.c.h.b16 %v1129
    %v1175 = vunpack.c.l.b16 %v1130
    %v1176 = vunpack.c.h.b16 %v1130
    %v1177 = vunpack.c.l.b16 %v1131
    %v1178 = vunpack.c.h.b16 %v1131
    %v1179 = vunpack.c.l.b16 %v1132
    %v1180 = vunpack.c.h.b16 %v1132
    %v1181 = vunpack.c.l.b16 %v1133
    %v1182 = vunpack.c.h.b16 %v1133
    %v1183 = vunpack.c.l.b16 %v1134
    %v1184 = vunpack.c.h.b16 %v1134
    %v1185 = vpack.c.b16 %v1155, %v1153
    %v1186 = vpack.c.b16 %v1156, %v1154
    %v1187 = vpack.c.b16 %v1159, %v1157
    %v1188 = vpack.c.b16 %v1160, %v1158
    %v1189 = vpack.c.b16 %v1163, %v1161
    %v1190 = vpack.c.b16 %v1164, %v1162
    %v1191 = vpack.c.b16 %v1167, %v1165
    %v1192 = vpack.c.b16 %v1168, %v1166
    %v1193 = vpack.c.b16 %v1171, %v1169
    %v1194 = vpack.c.b16 %v1172, %v1170
    %v1195 = vpack.c.b16 %v1175, %v1173
    %v1196 = vpack.c.b16 %v1176, %v1174
    %v1197 = vpack.c.b16 %v1179, %v1177
    %v1198 = vpack.c.b16 %v1180, %v1178
    %v1199 = vpack.c.b16 %v1183, %v1181
    %v1200 = vpack.c.b16 %v1184, %v1182
    %1217 = vmatprep.subr.bf16.mxu0 %v1186
    %1218 = vmatpush1.bf16.msra.mxu0 %v1185
    %1219 = vmatprep.subr.bf16.mxu0 %v1188
    %1220 = vmatpush1.bf16.msra.mxu0 %v1187
    %1221 = vmatprep.subr.bf16.mxu0 %v1190
    %1222 = vmatpush1.bf16.msra.mxu0 %v1189
    %1223 = vmatprep.subr.bf16.mxu0 %v1192
    %1224 = vmatpush1.bf16.msra.mxu0 %v1191
    %1225 = vmatprep.subr.bf16.mxu0 %v1194
    %1226 = vmatpush1.bf16.msra.mxu0 %v1193
    %1227 = vmatprep.subr.bf16.mxu0 %v1196
    %1228 = vmatpush1.bf16.msra.mxu0 %v1195
    %1229 = vmatprep.subr.bf16.mxu0 %v1198
    %1230 = vmatpush1.bf16.msra.mxu0 %v1197
    %1231 = vmatprep.subr.bf16.mxu0 %v1200
    %1232 = vmatpush1.bf16.msra.mxu0 %v1199
    %1233 = vmatprep.subr.bf16.mxu0 0
    %1234 = vmatpush1.bf16.msra.mxu0 0
    %1235 = vmatprep.subr.bf16.mxu0 0
    %1236 = vmatpush1.bf16.msra.mxu0 0
    %1237 = vmatprep.subr.bf16.mxu0 0
    %1238 = vmatpush1.bf16.msra.mxu0 0
    %1239 = vmatprep.subr.bf16.mxu0 0
    %1240 = vmatpush1.bf16.msra.mxu0 0
    %1241 = vmatprep.subr.bf16.mxu0 0
    %1242 = vmatpush1.bf16.msra.mxu0 0
    %1243 = vmatprep.subr.bf16.mxu0 0
    %1244 = vmatpush1.bf16.msra.mxu0 0
    %1245 = vmatprep.subr.bf16.mxu0 0
    %1246 = vmatpush1.bf16.msra.mxu0 0
    %1247 = vmatprep.subr.bf16.mxu0 0
    %1248 = vmatpush1.bf16.msra.mxu0 0
    %1249 = vmatprep.mubr.bf16.mxu0 0
    %1250 = vmatmul.mubr.bf16.gmra.mrb[0].mxu0 %v1135
    %v1251 = vpop.f32.mrb[0].mxu0
    %v1252 = vadd.f32 0.0, %v1251
    %v1253 = vpop.f32.mrb[0].mxu0
    %v1254 = vadd.f32 0.0, %v1253
    %v1255 = vpop.f32.mrb[0].mxu0
    %v1256 = vadd.f32 0.0, %v1255
    %v1257 = vpop.f32.mrb[0].mxu0
    %v1258 = vadd.f32 0.0, %v1257
    %1259 = vmatprep.mubr.bf16.mxu0 0
    %1260 = vmatmul.mubr.bf16.gmra.mrb[0].mxu0 %v1136
    %v1261 = vpop.f32.mrb[0].mxu0
    %v1262 = vadd.f32 0.0, %v1261
    %v1263 = vpop.f32.mrb[0].mxu0
    %v1264 = vadd.f32 0.0, %v1263
    %v1265 = vpop.f32.mrb[0].mxu0
    %v1266 = vadd.f32 0.0, %v1265
    %v1267 = vpop.f32.mrb[0].mxu0
    %v1268 = vadd.f32 0.0, %v1267
    %1269 = vdwg.mxu0
    %v1270 = vadd.f32 %v1107, %v1252
    %v1271 = vadd.f32 %v1108, %v1254
    %v1272 = vadd.f32 %v1109, %v1256
    %v1273 = vadd.f32 %v1110, %v1258
    %v1274 = vadd.f32 %v1111, %v1262
    %v1275 = vadd.f32 %v1112, %v1264
    %v1276 = vadd.f32 %v1113, %v1266
    %v1277 = vadd.f32 %v1114, %v1268
    %v1278 = vadd.f32 %v1270, %v1272
    %v1279 = vadd.f32 %v1278, %v1274
    %v1280 = vadd.f32 %v1279, %v1276
    %v1281 = vrot.slane %v1280, 4
    %v1282 = vadd.f32 %v1280, %v1281
    %v1283 = vrot.slane %v1282, 2
    %v1284 = vadd.f32 %v1282, %v1283
    %v1285 = vrot.slane %v1284, 1
    %v1286 = vadd.f32 %v1284, %v1285
    %v1287 = vmul.f32 %v1286, 0.03125
    %v1288 = vmul.f32 %v1270, %v1270
    %v1289 = vmul.f32 %v1272, %v1272
    %v1290 = vmul.f32 %v1274, %v1274
    %v1291 = vmul.f32 %v1276, %v1276
    %v1292 = vadd.f32 %v1288, %v1289
    %v1293 = vadd.f32 %v1292, %v1290
    %v1294 = vadd.f32 %v1293, %v1291
    %v1295 = vrot.slane %v1294, 4
    %v1296 = vadd.f32 %v1294, %v1295
    %v1297 = vrot.slane %v1296, 2
    %v1298 = vadd.f32 %v1296, %v1297
    %v1299 = vrot.slane %v1298, 1
    %v1300 = vadd.f32 %v1298, %v1299
    %v1301 = vmul.f32 %v1300, 0.03125
    %v1302 = vmul.f32 %v1287, %v1287
    %v1303 = vsub.f32 %v1301, %v1302
    %v1304 = vmax.f32 %v1303, 0.0
    %v1305 = vadd.f32 %v1304, 1e-05
    %v1306 = vrsqrt.pop %v1305
    %v1307 = vmul.f32 %v71, %v1306
    %v1308 = vlaneseq
    %v1309 = vshrl.u32 %v1308, 7
    %v1310 = vsub.s32 0, %v1309
    %v1311 = vrot.slane %v1307, %v1310
    %v1312 = vmul.f32 %v1270, %v1311
    %v1313 = vmul.f32 %v1272, %v1311
    %v1314 = vmul.f32 %v1274, %v1311
    %v1315 = vmul.f32 %v1276, %v1311
    %v1316 = vmul.f32 %v1287, %v1307
    %v1318 = vrot.slane %v1316, 7
    %v1320 = vsub.f32 %v71, %v1318
    %v1321 = vlaneseq
    %v1322 = vshrl.u32 %v1321, 7
    %v1323 = vsub.s32 1, %v1322
    %v1324 = vrot.slane %v1320, %v1323
    %v1325 = vadd.f32 %v1312, %v1324
    %v1326 = vadd.f32 %v1313, %v1324
    %v1327 = vadd.f32 %v1314, %v1324
    %v1328 = vadd.f32 %v1315, %v1324
    %v1329 = vmax.f32 %v1325, 0.0
    %v1330 = vmax.f32 %v1326, 0.0
    %v1331 = vmax.f32 %v1327, 0.0
    %v1332 = vmax.f32 %v1328, 0.0
    %v1333 = vadd.f32 %v1271, %v1273
    %v1334 = vadd.f32 %v1333, %v1275
    %v1335 = vadd.f32 %v1334, %v1277
    %v1336 = vrot.slane %v1335, 4
    %v1337 = vadd.f32 %v1335, %v1336
    %v1338 = vrot.slane %v1337, 2
    %v1339 = vadd.f32 %v1337, %v1338
    %v1340 = vrot.slane %v1339, 1
    %v1341 = vadd.f32 %v1339, %v1340
    %v1342 = vmul.f32 %v1341, 0.03125
    %v1343 = vmul.f32 %v1271, %v1271
    %v1344 = vmul.f32 %v1273, %v1273
    %v1345 = vmul.f32 %v1275, %v1275
    %v1346 = vmul.f32 %v1277, %v1277
    %v1347 = vadd.f32 %v1343, %v1344
    %v1348 = vadd.f32 %v1347, %v1345
    %v1349 = vadd.f32 %v1348, %v1346
    %v1350 = vrot.slane %v1349, 4
    %v1351 = vadd.f32 %v1349, %v1350
    %v1352 = vrot.slane %v1351, 2
    %v1353 = vadd.f32 %v1351, %v1352
    %v1354 = vrot.slane %v1353, 1
    %v1355 = vadd.f32 %v1353, %v1354
    %v1356 = vmul.f32 %v1355, 0.03125
    %v1357 = vmul.f32 %v1342, %v1342
    %v1358 = vsub.f32 %v1356, %v1357
    %v1359 = vmax.f32 %v1358, 0.0
    %v1360 = vadd.f32 %v1359, 1e-05
    %v1361 = vrsqrt.pop %v1360
    %v1362 = vmul.f32 %v71, %v1361
    %v1363 = vlaneseq
    %v1364 = vshrl.u32 %v1363, 7
    %v1365 = vsub.s32 6, %v1364
    %v1366 = vrot.slane %v1362, %v1365
    %v1367 = vmul.f32 %v1271, %v1366
    %v1368 = vmul.f32 %v1273, %v1366
    %v1369 = vmul.f32 %v1275, %v1366
    %v1370 = vmul.f32 %v1277, %v1366
    %v1371 = vmul.f32 %v1342, %v1362
    %v1373 = vrot.slane %v1371, 7
    %v1375 = vsub.f32 %v71, %v1373
    %v1376 = vlaneseq
    %v1377 = vshrl.u32 %v1376, 7
    %v1378 = vsub.s32 7, %v1377
    %v1379 = vrot.slane %v1375, %v1378
    %v1380 = vadd.f32 %v1367, %v1379
    %v1381 = vadd.f32 %v1368, %v1379
    %v1382 = vadd.f32 %v1369, %v1379
    %v1383 = vadd.f32 %v1370, %v1379
    %1384 = vst [vmem:[#allocation2 + $0x5] sm:$0xff] %v1329
    %1385 = vst [vmem:[#allocation2 + $0xd] sm:$0xff] %v1330
    %1386 = vst [vmem:[#allocation2 + $0x25] sm:$0xff] %v1331
    %1387 = vst [vmem:[#allocation2 + $0x2d] sm:$0xff] %v1332
    %v1388 = vld [vmem:[#allocation2] sm:$0xff]
    %v1389 = vld [vmem:[#allocation2 + $0x8] sm:$0xff]
    %v1390 = vld [vmem:[#allocation2 + $0x20] sm:$0xff]
    %v1391 = vld [vmem:[#allocation2 + $0x28] sm:$0xff]
    %v1392 = vld [vmem:[#allocation7] sm:$0xf]
    %v1393 = vld [vmem:[#allocation7 + $0x4] sm:$0xf]
    %v1394 = vld [vmem:[#allocation7 + $0x8] sm:$0xf]
    %v1395 = vld [vmem:[#allocation7 + $0xc] sm:$0xf]
    %v1396 = vld [vmem:[#allocation7 + $0x10] sm:$0xf]
    %v1397 = vld [vmem:[#allocation7 + $0x14] sm:$0xf]
    %v1398 = vld [vmem:[#allocation7 + $0x18] sm:$0xf]
    %v1399 = vld [vmem:[#allocation7 + $0x1c] sm:$0xf]
    %v1400 = vld [vmem:[#allocation7 + $0x20] sm:$0xf]
    %v1401 = vld [vmem:[#allocation7 + $0x24] sm:$0xf]
    %v1402 = vld [vmem:[#allocation7 + $0x28] sm:$0xf]
    %v1403 = vld [vmem:[#allocation7 + $0x2c] sm:$0xf]
    %v1404 = vld [vmem:[#allocation7 + $0x30] sm:$0xf]
    %v1405 = vld [vmem:[#allocation7 + $0x34] sm:$0xf]
    %v1406 = vld [vmem:[#allocation7 + $0x38] sm:$0xf]
    %v1407 = vld [vmem:[#allocation7 + $0x3c] sm:$0xf]
    %v1408 = vpack.c.bf16 %v1389, %v1388
    %v1409 = vpack.c.bf16 %v1391, %v1390
    %v1410 = vld [vmem:[#allocation2 + $0x1] sm:$0xff]
    %v1411 = vld [vmem:[#allocation2 + $0x9] sm:$0xff]
    %v1412 = vld [vmem:[#allocation2 + $0x21] sm:$0xff]
    %v1413 = vld [vmem:[#allocation2 + $0x29] sm:$0xff]
    %v1414 = vld [vmem:[#allocation7 + $0x40] sm:$0xf]
    %v1415 = vld [vmem:[#allocation7 + $0x44] sm:$0xf]
    %v1416 = vld [vmem:[#allocation7 + $0x48] sm:$0xf]
    %v1417 = vld [vmem:[#allocation7 + $0x4c] sm:$0xf]
    %v1418 = vld [vmem:[#allocation7 + $0x50] sm:$0xf]
    %v1419 = vld [vmem:[#allocation7 + $0x54] sm:$0xf]
    %v1420 = vld [vmem:[#allocation7 + $0x58] sm:$0xf]
    %v1421 = vld [vmem:[#allocation7 + $0x5c] sm:$0xf]
    %v1422 = vld [vmem:[#allocation7 + $0x60] sm:$0xf]
    %v1423 = vld [vmem:[#allocation7 + $0x64] sm:$0xf]
    %v1424 = vld [vmem:[#allocation7 + $0x68] sm:$0xf]
    %v1425 = vld [vmem:[#allocation7 + $0x6c] sm:$0xf]
    %v1426 = vld [vmem:[#allocation7 + $0x70] sm:$0xf]
    %v1427 = vld [vmem:[#allocation7 + $0x74] sm:$0xf]
    %v1428 = vld [vmem:[#allocation7 + $0x78] sm:$0xf]
    %v1429 = vld [vmem:[#allocation7 + $0x7c] sm:$0xf]
    %v1430 = vpack.c.bf16 %v1411, %v1410
    %v1431 = vpack.c.bf16 %v1413, %v1412
    %v1448 = vunpack.c.l.b16 %v1414
    %v1449 = vunpack.c.l.b16 %v1415
    %v1450 = vunpack.c.l.b16 %v1416
    %v1451 = vunpack.c.l.b16 %v1417
    %v1452 = vunpack.c.l.b16 %v1418
    %v1453 = vunpack.c.l.b16 %v1419
    %v1454 = vunpack.c.l.b16 %v1420
    %v1455 = vunpack.c.l.b16 %v1421
    %v1456 = vunpack.c.l.b16 %v1422
    %v1457 = vunpack.c.l.b16 %v1423
    %v1458 = vunpack.c.l.b16 %v1424
    %v1459 = vunpack.c.l.b16 %v1425
    %v1460 = vunpack.c.l.b16 %v1426
    %v1461 = vunpack.c.l.b16 %v1427
    %v1462 = vunpack.c.l.b16 %v1428
    %v1463 = vunpack.c.l.b16 %v1429
    %v1464 = vpack.c.b16 %v1449, %v1448
    %v1465 = vpack.c.b16 %v1451, %v1450
    %v1466 = vpack.c.b16 %v1453, %v1452
    %v1467 = vpack.c.b16 %v1455, %v1454
    %v1468 = vpack.c.b16 %v1457, %v1456
    %v1469 = vpack.c.b16 %v1459, %v1458
    %v1470 = vpack.c.b16 %v1461, %v1460
    %v1471 = vpack.c.b16 %v1463, %v1462
    %1480 = vmatprep.subr.bf16.mxu0 0
    %1481 = vmatpush1.bf16.msra.mxu0 %v1464
    %1482 = vmatprep.subr.bf16.mxu0 0
    %1483 = vmatpush1.bf16.msra.mxu0 %v1465
    %1484 = vmatprep.subr.bf16.mxu0 0
    %1485 = vmatpush1.bf16.msra.mxu0 %v1466
    %1486 = vmatprep.subr.bf16.mxu0 0
    %1487 = vmatpush1.bf16.msra.mxu0 %v1467
    %1488 = vmatprep.subr.bf16.mxu0 0
    %1489 = vmatpush1.bf16.msra.mxu0 %v1468
    %1490 = vmatprep.subr.bf16.mxu0 0
    %1491 = vmatpush1.bf16.msra.mxu0 %v1469
    %1492 = vmatprep.subr.bf16.mxu0 0
    %1493 = vmatpush1.bf16.msra.mxu0 %v1470
    %1494 = vmatprep.subr.bf16.mxu0 0
    %1495 = vmatpush1.bf16.msra.mxu0 %v1471
    %1496 = vmatprep.subr.bf16.mxu0 0
    %1497 = vmatpush1.bf16.msra.mxu0 0
    %1498 = vmatprep.subr.bf16.mxu0 0
    %1499 = vmatpush1.bf16.msra.mxu0 0
    %1500 = vmatprep.subr.bf16.mxu0 0
    %1501 = vmatpush1.bf16.msra.mxu0 0
    %1502 = vmatprep.subr.bf16.mxu0 0
    %1503 = vmatpush1.bf16.msra.mxu0 0
    %1504 = vmatprep.subr.bf16.mxu0 0
    %1505 = vmatpush1.bf16.msra.mxu0 0
    %1506 = vmatprep.subr.bf16.mxu0 0
    %1507 = vmatpush1.bf16.msra.mxu0 0
    %1508 = vmatprep.subr.bf16.mxu0 0
    %1509 = vmatpush1.bf16.msra.mxu0 0
    %1510 = vmatprep.subr.bf16.mxu0 0
    %1511 = vmatpush1.bf16.msra.mxu0 0
    %1512 = vmatprep.mubr.bf16.mxu0 0
    %1513 = vmatmul.mubr.bf16.gmra.mrb[0].mxu0 %v1430
    %v1514 = vpop.f32.mrb[0].mxu0
    %v1515 = vadd.f32 0.0, %v1514
    %v1516 = vpop.f32.mrb[0].mxu0
    %v1517 = vpop.f32.mrb[0].mxu0
    %v1518 = vadd.f32 0.0, %v1517
    %v1519 = vpop.f32.mrb[0].mxu0
    %1520 = vmatprep.mubr.bf16.mxu0 0
    %1521 = vmatmul.mubr.bf16.gmra.mrb[0].mxu0 %v1431
    %v1522 = vpop.f32.mrb[0].mxu0
    %v1523 = vadd.f32 0.0, %v1522
    %v1524 = vpop.f32.mrb[0].mxu0
    %v1525 = vpop.f32.mrb[0].mxu0
    %v1526 = vadd.f32 0.0, %v1525
    %v1527 = vpop.f32.mrb[0].mxu0
    %1528 = vdwg.mxu0
    %v1545 = vunpack.c.l.b16 %v1392
    %v1546 = vunpack.c.l.b16 %v1393
    %v1547 = vunpack.c.l.b16 %v1394
    %v1548 = vunpack.c.l.b16 %v1395
    %v1549 = vunpack.c.l.b16 %v1396
    %v1550 = vunpack.c.l.b16 %v1397
    %v1551 = vunpack.c.l.b16 %v1398
    %v1552 = vunpack.c.l.b16 %v1399
    %v1553 = vunpack.c.l.b16 %v1400
    %v1554 = vunpack.c.l.b16 %v1401
    %v1555 = vunpack.c.l.b16 %v1402
    %v1556 = vunpack.c.l.b16 %v1403
    %v1557 = vunpack.c.l.b16 %v1404
    %v1558 = vunpack.c.l.b16 %v1405
    %v1559 = vunpack.c.l.b16 %v1406
    %v1560 = vunpack.c.l.b16 %v1407
    %v1561 = vpack.c.b16 %v1546, %v1545
    %v1562 = vpack.c.b16 %v1548, %v1547
    %v1563 = vpack.c.b16 %v1550, %v1549
    %v1564 = vpack.c.b16 %v1552, %v1551
    %v1565 = vpack.c.b16 %v1554, %v1553
    %v1566 = vpack.c.b16 %v1556, %v1555
    %v1567 = vpack.c.b16 %v1558, %v1557
    %v1568 = vpack.c.b16 %v1560, %v1559
    %1577 = vmatprep.subr.bf16.mxu0 0
    %1578 = vmatpush1.bf16.msra.mxu0 %v1561
    %1579 = vmatprep.subr.bf16.mxu0 0
    %1580 = vmatpush1.bf16.msra.mxu0 %v1562
    %1581 = vmatprep.subr.bf16.mxu0 0
    %1582 = vmatpush1.bf16.msra.mxu0 %v1563
    %1583 = vmatprep.subr.bf16.mxu0 0
    %1584 = vmatpush1.bf16.msra.mxu0 %v1564
    %1585 = vmatprep.subr.bf16.mxu0 0
    %1586 = vmatpush1.bf16.msra.mxu0 %v1565
    %1587 = vmatprep.subr.bf16.mxu0 0
    %1588 = vmatpush1.bf16.msra.mxu0 %v1566
    %1589 = vmatprep.subr.bf16.mxu0 0
    %1590 = vmatpush1.bf16.msra.mxu0 %v1567
    %1591 = vmatprep.subr.bf16.mxu0 0
    %1592 = vmatpush1.bf16.msra.mxu0 %v1568
    %1593 = vmatprep.subr.bf16.mxu0 0
    %1594 = vmatpush1.bf16.msra.mxu0 0
    %1595 = vmatprep.subr.bf16.mxu0 0
    %1596 = vmatpush1.bf16.msra.mxu0 0
    %1597 = vmatprep.subr.bf16.mxu0 0
    %1598 = vmatpush1.bf16.msra.mxu0 0
    %1599 = vmatprep.subr.bf16.mxu0 0
    %1600 = vmatpush1.bf16.msra.mxu0 0
    %1601 = vmatprep.subr.bf16.mxu0 0
    %1602 = vmatpush1.bf16.msra.mxu0 0
    %1603 = vmatprep.subr.bf16.mxu0 0
    %1604 = vmatpush1.bf16.msra.mxu0 0
    %1605 = vmatprep.subr.bf16.mxu0 0
    %1606 = vmatpush1.bf16.msra.mxu0 0
    %1607 = vmatprep.subr.bf16.mxu0 0
    %1608 = vmatpush1.bf16.msra.mxu0 0
    %1609 = vmatprep.mubr.bf16.mxu0 0
    %1610 = vmatmul.mubr.bf16.gmra.mrb[0].mxu0 %v1408
    %v1611 = vpop.f32.mrb[0].mxu0
    %v1612 = vadd.f32 %v1515, %v1611
    %v1613 = vpop.f32.mrb[0].mxu0
    %v1614 = vpop.f32.mrb[0].mxu0
    %v1615 = vadd.f32 %v1518, %v1614
    %v1616 = vpop.f32.mrb[0].mxu0
    %1617 = vmatprep.mubr.bf16.mxu0 0
    %1618 = vmatmul.mubr.bf16.gmra.mrb[0].mxu0 %v1409
    %v1619 = vpop.f32.mrb[0].mxu0
    %v1620 = vadd.f32 %v1523, %v1619
    %v1621 = vpop.f32.mrb[0].mxu0
    %v1622 = vpop.f32.mrb[0].mxu0
    %v1623 = vadd.f32 %v1526, %v1622
    %v1624 = vpop.f32.mrb[0].mxu0
    %1625 = vdwg.mxu0
    %v1626 = vld [vmem:[#allocation2 + $0x2] sm:$0xff]
    %v1627 = vld [vmem:[#allocation2 + $0xa] sm:$0xff]
    %v1628 = vld [vmem:[#allocation2 + $0x22] sm:$0xff]
    %v1629 = vld [vmem:[#allocation2 + $0x2a] sm:$0xff]
    %v1630 = vld [vmem:[#allocation7 + $0x80] sm:$0xf]
    %v1631 = vld [vmem:[#allocation7 + $0x84] sm:$0xf]
    %v1632 = vld [vmem:[#allocation7 + $0x88] sm:$0xf]
    %v1633 = vld [vmem:[#allocation7 + $0x8c] sm:$0xf]
    %v1634 = vld [vmem:[#allocation7 + $0x90] sm:$0xf]
    %v1635 = vld [vmem:[#allocation7 + $0x94] sm:$0xf]
    %v1636 = vld [vmem:[#allocation7 + $0x98] sm:$0xf]
    %v1637 = vld [vmem:[#allocation7 + $0x9c] sm:$0xf]
    %v1638 = vld [vmem:[#allocation7 + $0xa0] sm:$0xf]
    %v1639 = vld [vmem:[#allocation7 + $0xa4] sm:$0xf]
    %v1640 = vld [vmem:[#allocation7 + $0xa8] sm:$0xf]
    %v1641 = vld [vmem:[#allocation7 + $0xac] sm:$0xf]
    %v1642 = vld [vmem:[#allocation7 + $0xb0] sm:$0xf]
    %v1643 = vld [vmem:[#allocation7 + $0xb4] sm:$0xf]
    %v1644 = vld [vmem:[#allocation7 + $0xb8] sm:$0xf]
    %v1645 = vld [vmem:[#allocation7 + $0xbc] sm:$0xf]
    %v1646 = vpack.c.bf16 %v1627, %v1626
    %v1647 = vpack.c.bf16 %v1629, %v1628
    %v1664 = vunpack.c.l.b16 %v1630
    %v1665 = vunpack.c.l.b16 %v1631
    %v1666 = vunpack.c.l.b16 %v1632
    %v1667 = vunpack.c.l.b16 %v1633
    %v1668 = vunpack.c.l.b16 %v1634
    %v1669 = vunpack.c.l.b16 %v1635
    %v1670 = vunpack.c.l.b16 %v1636
    %v1671 = vunpack.c.l.b16 %v1637
    %v1672 = vunpack.c.l.b16 %v1638
    %v1673 = vunpack.c.l.b16 %v1639
    %v1674 = vunpack.c.l.b16 %v1640
    %v1675 = vunpack.c.l.b16 %v1641
    %v1676 = vunpack.c.l.b16 %v1642
    %v1677 = vunpack.c.l.b16 %v1643
    %v1678 = vunpack.c.l.b16 %v1644
    %v1679 = vunpack.c.l.b16 %v1645
    %v1680 = vpack.c.b16 %v1665, %v1664
    %v1681 = vpack.c.b16 %v1667, %v1666
    %v1682 = vpack.c.b16 %v1669, %v1668
    %v1683 = vpack.c.b16 %v1671, %v1670
    %v1684 = vpack.c.b16 %v1673, %v1672
    %v1685 = vpack.c.b16 %v1675, %v1674
    %v1686 = vpack.c.b16 %v1677, %v1676
    %v1687 = vpack.c.b16 %v1679, %v1678
    %1696 = vmatprep.subr.bf16.mxu0 0
    %1697 = vmatpush1.bf16.msra.mxu0 %v1680
    %1698 = vmatprep.subr.bf16.mxu0 0
    %1699 = vmatpush1.bf16.msra.mxu0 %v1681
    %1700 = vmatprep.subr.bf16.mxu0 0
    %1701 = vmatpush1.bf16.msra.mxu0 %v1682
    %1702 = vmatprep.subr.bf16.mxu0 0
    %1703 = vmatpush1.bf16.msra.mxu0 %v1683
    %1704 = vmatprep.subr.bf16.mxu0 0
    %1705 = vmatpush1.bf16.msra.mxu0 %v1684
    %1706 = vmatprep.subr.bf16.mxu0 0
    %1707 = vmatpush1.bf16.msra.mxu0 %v1685
    %1708 = vmatprep.subr.bf16.mxu0 0
    %1709 = vmatpush1.bf16.msra.mxu0 %v1686
    %1710 = vmatprep.subr.bf16.mxu0 0
    %1711 = vmatpush1.bf16.msra.mxu0 %v1687
    %1712 = vmatprep.subr.bf16.mxu0 0
    %1713 = vmatpush1.bf16.msra.mxu0 0
    %1714 = vmatprep.subr.bf16.mxu0 0
    %1715 = vmatpush1.bf16.msra.mxu0 0
    %1716 = vmatprep.subr.bf16.mxu0 0
    %1717 = vmatpush1.bf16.msra.mxu0 0
    %1718 = vmatprep.subr.bf16.mxu0 0
    %1719 = vmatpush1.bf16.msra.mxu0 0
    %1720 = vmatprep.subr.bf16.mxu0 0
    %1721 = vmatpush1.bf16.msra.mxu0 0
    %1722 = vmatprep.subr.bf16.mxu0 0
    %1723 = vmatpush1.bf16.msra.mxu0 0
    %1724 = vmatprep.subr.bf16.mxu0 0
    %1725 = vmatpush1.bf16.msra.mxu0 0
    %1726 = vmatprep.subr.bf16.mxu0 0
    %1727 = vmatpush1.bf16.msra.mxu0 0
    %1728 = vmatprep.mubr.bf16.mxu0 0
    %1729 = vmatmul.mubr.bf16.gmra.mrb[0].mxu0 %v1646
    %v1730 = vpop.f32.mrb[0].mxu0
    %v1731 = vadd.f32 0.0, %v1730
    %v1732 = vpop.f32.mrb[0].mxu0
    %v1733 = vpop.f32.mrb[0].mxu0
    %v1734 = vadd.f32 0.0, %v1733
    %v1735 = vpop.f32.mrb[0].mxu0
    %1736 = vmatprep.mubr.bf16.mxu0 0
    %1737 = vmatmul.mubr.bf16.gmra.mrb[0].mxu0 %v1647
    %v1738 = vpop.f32.mrb[0].mxu0
    %v1739 = vadd.f32 0.0, %v1738
    %v1740 = vpop.f32.mrb[0].mxu0
    %v1741 = vpop.f32.mrb[0].mxu0
    %v1742 = vadd.f32 0.0, %v1741
    %v1743 = vpop.f32.mrb[0].mxu0
    %1744 = vdwg.mxu0
    %v1745 = vadd.f32 %v1612, %v1731
    %v1746 = vadd.f32 %v1615, %v1734
    %v1747 = vadd.f32 %v1620, %v1739
    %v1748 = vadd.f32 %v1623, %v1742
    %v1749 = vld [vmem:[#allocation2 + $0x3] sm:$0xff]
    %v1750 = vld [vmem:[#allocation2 + $0xb] sm:$0xff]
    %v1751 = vld [vmem:[#allocation2 + $0x23] sm:$0xff]
    %v1752 = vld [vmem:[#allocation2 + $0x2b] sm:$0xff]
    %v1753 = vld [vmem:[#allocation7 + $0xc0] sm:$0xf]
    %v1754 = vld [vmem:[#allocation7 + $0xc4] sm:$0xf]
    %v1755 = vld [vmem:[#allocation7 + $0xc8] sm:$0xf]
    %v1756 = vld [vmem:[#allocation7 + $0xcc] sm:$0xf]
    %v1757 = vld [vmem:[#allocation7 + $0xd0] sm:$0xf]
    %v1758 = vld [vmem:[#allocation7 + $0xd4] sm:$0xf]
    %v1759 = vld [vmem:[#allocation7 + $0xd8] sm:$0xf]
    %v1760 = vld [vmem:[#allocation7 + $0xdc] sm:$0xf]
    %v1761 = vld [vmem:[#allocation7 + $0xe0] sm:$0xf]
    %v1762 = vld [vmem:[#allocation7 + $0xe4] sm:$0xf]
    %v1763 = vld [vmem:[#allocation7 + $0xe8] sm:$0xf]
    %v1764 = vld [vmem:[#allocation7 + $0xec] sm:$0xf]
    %v1765 = vld [vmem:[#allocation7 + $0xf0] sm:$0xf]
    %v1766 = vld [vmem:[#allocation7 + $0xf4] sm:$0xf]
    %v1767 = vld [vmem:[#allocation7 + $0xf8] sm:$0xf]
    %v1768 = vld [vmem:[#allocation7 + $0xfc] sm:$0xf]
    %v1769 = vpack.c.bf16 %v1750, %v1749
    %v1770 = vpack.c.bf16 %v1752, %v1751
    %v1787 = vunpack.c.l.b16 %v1753
    %v1788 = vunpack.c.l.b16 %v1754
    %v1789 = vunpack.c.l.b16 %v1755
    %v1790 = vunpack.c.l.b16 %v1756
    %v1791 = vunpack.c.l.b16 %v1757
    %v1792 = vunpack.c.l.b16 %v1758
    %v1793 = vunpack.c.l.b16 %v1759
    %v1794 = vunpack.c.l.b16 %v1760
    %v1795 = vunpack.c.l.b16 %v1761
    %v1796 = vunpack.c.l.b16 %v1762
    %v1797 = vunpack.c.l.b16 %v1763
    %v1798 = vunpack.c.l.b16 %v1764
    %v1799 = vunpack.c.l.b16 %v1765
    %v1800 = vunpack.c.l.b16 %v1766
    %v1801 = vunpack.c.l.b16 %v1767
    %v1802 = vunpack.c.l.b16 %v1768
    %v1803 = vpack.c.b16 %v1788, %v1787
    %v1804 = vpack.c.b16 %v1790, %v1789
    %v1805 = vpack.c.b16 %v1792, %v1791
    %v1806 = vpack.c.b16 %v1794, %v1793
    %v1807 = vpack.c.b16 %v1796, %v1795
    %v1808 = vpack.c.b16 %v1798, %v1797
    %v1809 = vpack.c.b16 %v1800, %v1799
    %v1810 = vpack.c.b16 %v1802, %v1801
    %1819 = vmatprep.subr.bf16.mxu0 0
    %1820 = vmatpush1.bf16.msra.mxu0 %v1803
    %1821 = vmatprep.subr.bf16.mxu0 0
    %1822 = vmatpush1.bf16.msra.mxu0 %v1804
    %1823 = vmatprep.subr.bf16.mxu0 0
    %1824 = vmatpush1.bf16.msra.mxu0 %v1805
    %1825 = vmatprep.subr.bf16.mxu0 0
    %1826 = vmatpush1.bf16.msra.mxu0 %v1806
    %1827 = vmatprep.subr.bf16.mxu0 0
    %1828 = vmatpush1.bf16.msra.mxu0 %v1807
    %1829 = vmatprep.subr.bf16.mxu0 0
    %1830 = vmatpush1.bf16.msra.mxu0 %v1808
    %1831 = vmatprep.subr.bf16.mxu0 0
    %1832 = vmatpush1.bf16.msra.mxu0 %v1809
    %1833 = vmatprep.subr.bf16.mxu0 0
    %1834 = vmatpush1.bf16.msra.mxu0 %v1810
    %1835 = vmatprep.subr.bf16.mxu0 0
    %1836 = vmatpush1.bf16.msra.mxu0 0
    %1837 = vmatprep.subr.bf16.mxu0 0
    %1838 = vmatpush1.bf16.msra.mxu0 0
    %1839 = vmatprep.subr.bf16.mxu0 0
    %1840 = vmatpush1.bf16.msra.mxu0 0
    %1841 = vmatprep.subr.bf16.mxu0 0
    %1842 = vmatpush1.bf16.msra.mxu0 0
    %1843 = vmatprep.subr.bf16.mxu0 0
    %1844 = vmatpush1.bf16.msra.mxu0 0
    %1845 = vmatprep.subr.bf16.mxu0 0
    %1846 = vmatpush1.bf16.msra.mxu0 0
    %1847 = vmatprep.subr.bf16.mxu0 0
    %1848 = vmatpush1.bf16.msra.mxu0 0
    %1849 = vmatprep.subr.bf16.mxu0 0
    %1850 = vmatpush1.bf16.msra.mxu0 0
    %1851 = vmatprep.mubr.bf16.mxu0 0
    %1852 = vmatmul.mubr.bf16.gmra.mrb[0].mxu0 %v1769
    %v1853 = vpop.f32.mrb[0].mxu0
    %v1854 = vadd.f32 0.0, %v1853
    %v1855 = vpop.f32.mrb[0].mxu0
    %v1856 = vpop.f32.mrb[0].mxu0
    %v1857 = vadd.f32 0.0, %v1856
    %v1858 = vpop.f32.mrb[0].mxu0
    %1859 = vmatprep.mubr.bf16.mxu0 0
    %1860 = vmatmul.mubr.bf16.gmra.mrb[0].mxu0 %v1770
    %v1861 = vpop.f32.mrb[0].mxu0
    %v1862 = vadd.f32 0.0, %v1861
    %v1863 = vpop.f32.mrb[0].mxu0
    %v1864 = vpop.f32.mrb[0].mxu0
    %v1865 = vadd.f32 0.0, %v1864
    %v1866 = vpop.f32.mrb[0].mxu0
    %1867 = vdwg.mxu0
    %v1868 = vadd.f32 %v1745, %v1854
    %v1869 = vadd.f32 %v1746, %v1857
    %v1870 = vadd.f32 %v1747, %v1862
    %v1871 = vadd.f32 %v1748, %v1865
    %v1872 = vld [vmem:[#allocation2 + $0x4] sm:$0xff]
    %v1873 = vld [vmem:[#allocation2 + $0xc] sm:$0xff]
    %v1874 = vld [vmem:[#allocation2 + $0x24] sm:$0xff]
    %v1875 = vld [vmem:[#allocation2 + $0x2c] sm:$0xff]
    %v1876 = vld [vmem:[#allocation7 + $0x100] sm:$0xf]
    %v1877 = vld [vmem:[#allocation7 + $0x104] sm:$0xf]
    %v1878 = vld [vmem:[#allocation7 + $0x108] sm:$0xf]
    %v1879 = vld [vmem:[#allocation7 + $0x10c] sm:$0xf]
    %v1880 = vld [vmem:[#allocation7 + $0x110] sm:$0xf]
    %v1881 = vld [vmem:[#allocation7 + $0x114] sm:$0xf]
    %v1882 = vld [vmem:[#allocation7 + $0x118] sm:$0xf]
    %v1883 = vld [vmem:[#allocation7 + $0x11c] sm:$0xf]
    %v1884 = vld [vmem:[#allocation7 + $0x120] sm:$0xf]
    %v1885 = vld [vmem:[#allocation7 + $0x124] sm:$0xf]
    %v1886 = vld [vmem:[#allocation7 + $0x128] sm:$0xf]
    %v1887 = vld [vmem:[#allocation7 + $0x12c] sm:$0xf]
    %v1888 = vld [vmem:[#allocation7 + $0x130] sm:$0xf]
    %v1889 = vld [vmem:[#allocation7 + $0x134] sm:$0xf]
    %v1890 = vld [vmem:[#allocation7 + $0x138] sm:$0xf]
    %v1891 = vld [vmem:[#allocation7 + $0x13c] sm:$0xf]
    %v1892 = vpack.c.bf16 %v1873, %v1872
    %v1893 = vpack.c.bf16 %v1875, %v1874
    %v1910 = vunpack.c.l.b16 %v1876
    %v1911 = vunpack.c.l.b16 %v1877
    %v1912 = vunpack.c.l.b16 %v1878
    %v1913 = vunpack.c.l.b16 %v1879
    %v1914 = vunpack.c.l.b16 %v1880
    %v1915 = vunpack.c.l.b16 %v1881
    %v1916 = vunpack.c.l.b16 %v1882
    %v1917 = vunpack.c.l.b16 %v1883
    %v1918 = vunpack.c.l.b16 %v1884
    %v1919 = vunpack.c.l.b16 %v1885
    %v1920 = vunpack.c.l.b16 %v1886
    %v1921 = vunpack.c.l.b16 %v1887
    %v1922 = vunpack.c.l.b16 %v1888
    %v1923 = vunpack.c.l.b16 %v1889
    %v1924 = vunpack.c.l.b16 %v1890
    %v1925 = vunpack.c.l.b16 %v1891
    %v1926 = vpack.c.b16 %v1911, %v1910
    %v1927 = vpack.c.b16 %v1913, %v1912
    %v1928 = vpack.c.b16 %v1915, %v1914
    %v1929 = vpack.c.b16 %v1917, %v1916
    %v1930 = vpack.c.b16 %v1919, %v1918
    %v1931 = vpack.c.b16 %v1921, %v1920
    %v1932 = vpack.c.b16 %v1923, %v1922
    %v1933 = vpack.c.b16 %v1925, %v1924
    %1942 = vmatprep.subr.bf16.mxu0 0
    %1943 = vmatpush1.bf16.msra.mxu0 %v1926
    %1944 = vmatprep.subr.bf16.mxu0 0
    %1945 = vmatpush1.bf16.msra.mxu0 %v1927
    %1946 = vmatprep.subr.bf16.mxu0 0
    %1947 = vmatpush1.bf16.msra.mxu0 %v1928
    %1948 = vmatprep.subr.bf16.mxu0 0
    %1949 = vmatpush1.bf16.msra.mxu0 %v1929
    %1950 = vmatprep.subr.bf16.mxu0 0
    %1951 = vmatpush1.bf16.msra.mxu0 %v1930
    %1952 = vmatprep.subr.bf16.mxu0 0
    %1953 = vmatpush1.bf16.msra.mxu0 %v1931
    %1954 = vmatprep.subr.bf16.mxu0 0
    %1955 = vmatpush1.bf16.msra.mxu0 %v1932
    %1956 = vmatprep.subr.bf16.mxu0 0
    %1957 = vmatpush1.bf16.msra.mxu0 %v1933
    %1958 = vmatprep.subr.bf16.mxu0 0
    %1959 = vmatpush1.bf16.msra.mxu0 0
    %1960 = vmatprep.subr.bf16.mxu0 0
    %1961 = vmatpush1.bf16.msra.mxu0 0
    %1962 = vmatprep.subr.bf16.mxu0 0
    %1963 = vmatpush1.bf16.msra.mxu0 0
    %1964 = vmatprep.subr.bf16.mxu0 0
    %1965 = vmatpush1.bf16.msra.mxu0 0
    %1966 = vmatprep.subr.bf16.mxu0 0
    %1967 = vmatpush1.bf16.msra.mxu0 0
    %1968 = vmatprep.subr.bf16.mxu0 0
    %1969 = vmatpush1.bf16.msra.mxu0 0
    %1970 = vmatprep.subr.bf16.mxu0 0
    %1971 = vmatpush1.bf16.msra.mxu0 0
    %1972 = vmatprep.subr.bf16.mxu0 0
    %1973 = vmatpush1.bf16.msra.mxu0 0
    %1974 = vmatprep.mubr.bf16.mxu0 0
    %1975 = vmatmul.mubr.bf16.gmra.mrb[0].mxu0 %v1892
    %v1976 = vpop.f32.mrb[0].mxu0
    %v1977 = vadd.f32 0.0, %v1976
    %v1978 = vpop.f32.mrb[0].mxu0
    %v1979 = vpop.f32.mrb[0].mxu0
    %v1980 = vadd.f32 0.0, %v1979
    %v1981 = vpop.f32.mrb[0].mxu0
    %1982 = vmatprep.mubr.bf16.mxu0 0
    %1983 = vmatmul.mubr.bf16.gmra.mrb[0].mxu0 %v1893
    %v1984 = vpop.f32.mrb[0].mxu0
    %v1985 = vadd.f32 0.0, %v1984
    %v1986 = vpop.f32.mrb[0].mxu0
    %v1987 = vpop.f32.mrb[0].mxu0
    %v1988 = vadd.f32 0.0, %v1987
    %v1989 = vpop.f32.mrb[0].mxu0
    %1990 = vdwg.mxu0
    %v1991 = vadd.f32 %v1868, %v1977
    %v1992 = vadd.f32 %v1869, %v1980
    %v1993 = vadd.f32 %v1870, %v1985
    %v1994 = vadd.f32 %v1871, %v1988
    %v1995 = vld [vmem:[#allocation2 + $0x5] sm:$0xff]
    %v1996 = vld [vmem:[#allocation2 + $0xd] sm:$0xff]
    %v1997 = vld [vmem:[#allocation2 + $0x25] sm:$0xff]
    %v1998 = vld [vmem:[#allocation2 + $0x2d] sm:$0xff]
    %v1999 = vld [vmem:[#allocation7 + $0x140] sm:$0xf]
    %v2000 = vld [vmem:[#allocation7 + $0x144] sm:$0xf]
    %v2001 = vld [vmem:[#allocation7 + $0x148] sm:$0xf]
    %v2002 = vld [vmem:[#allocation7 + $0x14c] sm:$0xf]
    %v2003 = vld [vmem:[#allocation7 + $0x150] sm:$0xf]
    %v2004 = vld [vmem:[#allocation7 + $0x154] sm:$0xf]
    %v2005 = vld [vmem:[#allocation7 + $0x158] sm:$0xf]
    %v2006 = vld [vmem:[#allocation7 + $0x15c] sm:$0xf]
    %v2007 = vld [vmem:[#allocation7 + $0x160] sm:$0xf]
    %v2008 = vld [vmem:[#allocation7 + $0x164] sm:$0xf]
    %v2009 = vld [vmem:[#allocation7 + $0x168] sm:$0xf]
    %v2010 = vld [vmem:[#allocation7 + $0x16c] sm:$0xf]
    %v2011 = vld [vmem:[#allocation7 + $0x170] sm:$0xf]
    %v2012 = vld [vmem:[#allocation7 + $0x174] sm:$0xf]
    %v2013 = vld [vmem:[#allocation7 + $0x178] sm:$0xf]
    %v2014 = vld [vmem:[#allocation7 + $0x17c] sm:$0xf]
    %v2015 = vpack.c.bf16 %v1996, %v1995
    %v2016 = vpack.c.bf16 %v1998, %v1997
    %v2033 = vunpack.c.l.b16 %v1999
    %v2034 = vunpack.c.l.b16 %v2000
    %v2035 = vunpack.c.l.b16 %v2001
    %v2036 = vunpack.c.l.b16 %v2002
    %v2037 = vunpack.c.l.b16 %v2003
    %v2038 = vunpack.c.l.b16 %v2004
    %v2039 = vunpack.c.l.b16 %v2005
    %v2040 = vunpack.c.l.b16 %v2006
    %v2041 = vunpack.c.l.b16 %v2007
    %v2042 = vunpack.c.l.b16 %v2008
    %v2043 = vunpack.c.l.b16 %v2009
    %v2044 = vunpack.c.l.b16 %v2010
    %v2045 = vunpack.c.l.b16 %v2011
    %v2046 = vunpack.c.l.b16 %v2012
    %v2047 = vunpack.c.l.b16 %v2013
    %v2048 = vunpack.c.l.b16 %v2014
    %v2049 = vpack.c.b16 %v2034, %v2033
    %v2050 = vpack.c.b16 %v2036, %v2035
    %v2051 = vpack.c.b16 %v2038, %v2037
    %v2052 = vpack.c.b16 %v2040, %v2039
    %v2053 = vpack.c.b16 %v2042, %v2041
    %v2054 = vpack.c.b16 %v2044, %v2043
    %v2055 = vpack.c.b16 %v2046, %v2045
    %v2056 = vpack.c.b16 %v2048, %v2047
    %2065 = vmatprep.subr.bf16.mxu0 0
    %2066 = vmatpush1.bf16.msra.mxu0 %v2049
    %2067 = vmatprep.subr.bf16.mxu0 0
    %2068 = vmatpush1.bf16.msra.mxu0 %v2050
    %2069 = vmatprep.subr.bf16.mxu0 0
    %2070 = vmatpush1.bf16.msra.mxu0 %v2051
    %2071 = vmatprep.subr.bf16.mxu0 0
    %2072 = vmatpush1.bf16.msra.mxu0 %v2052
    %2073 = vmatprep.subr.bf16.mxu0 0
    %2074 = vmatpush1.bf16.msra.mxu0 %v2053
    %2075 = vmatprep.subr.bf16.mxu0 0
    %2076 = vmatpush1.bf16.msra.mxu0 %v2054
    %2077 = vmatprep.subr.bf16.mxu0 0
    %2078 = vmatpush1.bf16.msra.mxu0 %v2055
    %2079 = vmatprep.subr.bf16.mxu0 0
    %2080 = vmatpush1.bf16.msra.mxu0 %v2056
    %2081 = vmatprep.subr.bf16.mxu0 0
    %2082 = vmatpush1.bf16.msra.mxu0 0
    %2083 = vmatprep.subr.bf16.mxu0 0
    %2084 = vmatpush1.bf16.msra.mxu0 0
    %2085 = vmatprep.subr.bf16.mxu0 0
    %2086 = vmatpush1.bf16.msra.mxu0 0
    %2087 = vmatprep.subr.bf16.mxu0 0
    %2088 = vmatpush1.bf16.msra.mxu0 0
    %2089 = vmatprep.subr.bf16.mxu0 0
    %2090 = vmatpush1.bf16.msra.mxu0 0
    %2091 = vmatprep.subr.bf16.mxu0 0
    %2092 = vmatpush1.bf16.msra.mxu0 0
    %2093 = vmatprep.subr.bf16.mxu0 0
    %2094 = vmatpush1.bf16.msra.mxu0 0
    %2095 = vmatprep.subr.bf16.mxu0 0
    %2096 = vmatpush1.bf16.msra.mxu0 0
    %2097 = vmatprep.mubr.bf16.mxu0 0
    %2098 = vmatmul.mubr.bf16.gmra.mrb[0].mxu0 %v2015
    %v2099 = vpop.f32.mrb[0].mxu0
    %v2100 = vadd.f32 0.0, %v2099
    %v2101 = vpop.f32.mrb[0].mxu0
    %v2102 = vpop.f32.mrb[0].mxu0
    %v2103 = vadd.f32 0.0, %v2102
    %v2104 = vpop.f32.mrb[0].mxu0
    %2105 = vmatprep.mubr.bf16.mxu0 0
    %2106 = vmatmul.mubr.bf16.gmra.mrb[0].mxu0 %v2016
    %v2107 = vpop.f32.mrb[0].mxu0
    %v2108 = vadd.f32 0.0, %v2107
    %v2109 = vpop.f32.mrb[0].mxu0
    %v2110 = vpop.f32.mrb[0].mxu0
    %v2111 = vadd.f32 0.0, %v2110
    %v2112 = vpop.f32.mrb[0].mxu0
    %2113 = vdwg.mxu0
    %v2114 = vadd.f32 %v1991, %v2100
    %v2115 = vadd.f32 %v1992, %v2103
    %v2116 = vadd.f32 %v1993, %v2108
    %v2117 = vadd.f32 %v1994, %v2111
    %v2118 = vld [vmem:[#allocation2 + $0x6] sm:$0xff]
    %v2119 = vld [vmem:[#allocation2 + $0xe] sm:$0xff]
    %v2120 = vld [vmem:[#allocation2 + $0x26] sm:$0xff]
    %v2121 = vld [vmem:[#allocation2 + $0x2e] sm:$0xff]
    %v2122 = vld [vmem:[#allocation7 + $0x180] sm:$0xf]
    %v2123 = vld [vmem:[#allocation7 + $0x184] sm:$0xf]
    %v2124 = vld [vmem:[#allocation7 + $0x188] sm:$0xf]
    %v2125 = vld [vmem:[#allocation7 + $0x18c] sm:$0xf]
    %v2126 = vld [vmem:[#allocation7 + $0x190] sm:$0xf]
    %v2127 = vld [vmem:[#allocation7 + $0x194] sm:$0xf]
    %v2128 = vld [vmem:[#allocation7 + $0x198] sm:$0xf]
    %v2129 = vld [vmem:[#allocation7 + $0x19c] sm:$0xf]
    %v2130 = vld [vmem:[#allocation7 + $0x1a0] sm:$0xf]
    %v2131 = vld [vmem:[#allocation7 + $0x1a4] sm:$0xf]
    %v2132 = vld [vmem:[#allocation7 + $0x1a8] sm:$0xf]
    %v2133 = vld [vmem:[#allocation7 + $0x1ac] sm:$0xf]
    %v2134 = vld [vmem:[#allocation7 + $0x1b0] sm:$0xf]
    %v2135 = vld [vmem:[#allocation7 + $0x1b4] sm:$0xf]
    %v2136 = vld [vmem:[#allocation7 + $0x1b8] sm:$0xf]
    %v2137 = vld [vmem:[#allocation7 + $0x1bc] sm:$0xf]
    %v2138 = vpack.c.bf16 %v2119, %v2118
    %v2139 = vpack.c.bf16 %v2121, %v2120
    %v2156 = vunpack.c.l.b16 %v2122
    %v2157 = vunpack.c.l.b16 %v2123
    %v2158 = vunpack.c.l.b16 %v2124
    %v2159 = vunpack.c.l.b16 %v2125
    %v2160 = vunpack.c.l.b16 %v2126
    %v2161 = vunpack.c.l.b16 %v2127
    %v2162 = vunpack.c.l.b16 %v2128
    %v2163 = vunpack.c.l.b16 %v2129
    %v2164 = vunpack.c.l.b16 %v2130
    %v2165 = vunpack.c.l.b16 %v2131
    %v2166 = vunpack.c.l.b16 %v2132
    %v2167 = vunpack.c.l.b16 %v2133
    %v2168 = vunpack.c.l.b16 %v2134
    %v2169 = vunpack.c.l.b16 %v2135
    %v2170 = vunpack.c.l.b16 %v2136
    %v2171 = vunpack.c.l.b16 %v2137
    %v2172 = vpack.c.b16 %v2157, %v2156
    %v2173 = vpack.c.b16 %v2159, %v2158
    %v2174 = vpack.c.b16 %v2161, %v2160
    %v2175 = vpack.c.b16 %v2163, %v2162
    %v2176 = vpack.c.b16 %v2165, %v2164
    %v2177 = vpack.c.b16 %v2167, %v2166
    %v2178 = vpack.c.b16 %v2169, %v2168
    %v2179 = vpack.c.b16 %v2171, %v2170
    %2188 = vmatprep.subr.bf16.mxu0 0
    %2189 = vmatpush1.bf16.msra.mxu0 %v2172
    %2190 = vmatprep.subr.bf16.mxu0 0
    %2191 = vmatpush1.bf16.msra.mxu0 %v2173
    %2192 = vmatprep.subr.bf16.mxu0 0
    %2193 = vmatpush1.bf16.msra.mxu0 %v2174
    %2194 = vmatprep.subr.bf16.mxu0 0
    %2195 = vmatpush1.bf16.msra.mxu0 %v2175
    %2196 = vmatprep.subr.bf16.mxu0 0
    %2197 = vmatpush1.bf16.msra.mxu0 %v2176
    %2198 = vmatprep.subr.bf16.mxu0 0
    %2199 = vmatpush1.bf16.msra.mxu0 %v2177
    %2200 = vmatprep.subr.bf16.mxu0 0
    %2201 = vmatpush1.bf16.msra.mxu0 %v2178
    %2202 = vmatprep.subr.bf16.mxu0 0
    %2203 = vmatpush1.bf16.msra.mxu0 %v2179
    %2204 = vmatprep.subr.bf16.mxu0 0
    %2205 = vmatpush1.bf16.msra.mxu0 0
    %2206 = vmatprep.subr.bf16.mxu0 0
    %2207 = vmatpush1.bf16.msra.mxu0 0
    %2208 = vmatprep.subr.bf16.mxu0 0
    %2209 = vmatpush1.bf16.msra.mxu0 0
    %2210 = vmatprep.subr.bf16.mxu0 0
    %2211 = vmatpush1.bf16.msra.mxu0 0
    %2212 = vmatprep.subr.bf16.mxu0 0
    %2213 = vmatpush1.bf16.msra.mxu0 0
    %2214 = vmatprep.subr.bf16.mxu0 0
    %2215 = vmatpush1.bf16.msra.mxu0 0
    %2216 = vmatprep.subr.bf16.mxu0 0
    %2217 = vmatpush1.bf16.msra.mxu0 0
    %2218 = vmatprep.subr.bf16.mxu0 0
    %2219 = vmatpush1.bf16.msra.mxu0 0
    %2220 = vmatprep.mubr.bf16.mxu0 0
    %2221 = vmatmul.mubr.bf16.gmra.mrb[0].mxu0 %v2138
    %v2222 = vpop.f32.mrb[0].mxu0
    %v2223 = vadd.f32 0.0, %v2222
    %v2224 = vpop.f32.mrb[0].mxu0
    %v2225 = vpop.f32.mrb[0].mxu0
    %v2226 = vadd.f32 0.0, %v2225
    %v2227 = vpop.f32.mrb[0].mxu0
    %2228 = vmatprep.mubr.bf16.mxu0 0
    %2229 = vmatmul.mubr.bf16.gmra.mrb[0].mxu0 %v2139
    %v2230 = vpop.f32.mrb[0].mxu0
    %v2231 = vadd.f32 0.0, %v2230
    %v2232 = vpop.f32.mrb[0].mxu0
    %v2233 = vpop.f32.mrb[0].mxu0
    %v2234 = vadd.f32 0.0, %v2233
    %v2235 = vpop.f32.mrb[0].mxu0
    %2236 = vdwg.mxu0
    %v2237 = vadd.f32 %v2114, %v2223
    %v2238 = vadd.f32 %v2115, %v2226
    %v2239 = vadd.f32 %v2116, %v2231
    %v2240 = vadd.f32 %v2117, %v2234
    %v2241 = vld [vmem:[#allocation2 + $0x7] sm:$0xff]
    %v2242 = vld [vmem:[#allocation2 + $0xf] sm:$0xff]
    %v2243 = vld [vmem:[#allocation2 + $0x27] sm:$0xff]
    %v2244 = vld [vmem:[#allocation2 + $0x2f] sm:$0xff]
    %v2245 = vld [vmem:[#allocation7 + $0x1c0] sm:$0xf]
    %v2246 = vld [vmem:[#allocation7 + $0x1c4] sm:$0xf]
    %v2247 = vld [vmem:[#allocation7 + $0x1c8] sm:$0xf]
    %v2248 = vld [vmem:[#allocation7 + $0x1cc] sm:$0xf]
    %v2249 = vld [vmem:[#allocation7 + $0x1d0] sm:$0xf]
    %v2250 = vld [vmem:[#allocation7 + $0x1d4] sm:$0xf]
    %v2251 = vld [vmem:[#allocation7 + $0x1d8] sm:$0xf]
    %v2252 = vld [vmem:[#allocation7 + $0x1dc] sm:$0xf]
    %v2253 = vld [vmem:[#allocation7 + $0x1e0] sm:$0xf]
    %v2254 = vld [vmem:[#allocation7 + $0x1e4] sm:$0xf]
    %v2255 = vld [vmem:[#allocation7 + $0x1e8] sm:$0xf]
    %v2256 = vld [vmem:[#allocation7 + $0x1ec] sm:$0xf]
    %v2257 = vld [vmem:[#allocation7 + $0x1f0] sm:$0xf]
    %v2258 = vld [vmem:[#allocation7 + $0x1f4] sm:$0xf]
    %v2259 = vld [vmem:[#allocation7 + $0x1f8] sm:$0xf]
    %v2260 = vld [vmem:[#allocation7 + $0x1fc] sm:$0xf]
    %v2261 = vpack.c.bf16 %v2242, %v2241
    %v2262 = vpack.c.bf16 %v2244, %v2243
    %v2279 = vunpack.c.l.b16 %v2245
    %v2280 = vunpack.c.l.b16 %v2246
    %v2281 = vunpack.c.l.b16 %v2247
    %v2282 = vunpack.c.l.b16 %v2248
    %v2283 = vunpack.c.l.b16 %v2249
    %v2284 = vunpack.c.l.b16 %v2250
    %v2285 = vunpack.c.l.b16 %v2251
    %v2286 = vunpack.c.l.b16 %v2252
    %v2287 = vunpack.c.l.b16 %v2253
    %v2288 = vunpack.c.l.b16 %v2254
    %v2289 = vunpack.c.l.b16 %v2255
    %v2290 = vunpack.c.l.b16 %v2256
    %v2291 = vunpack.c.l.b16 %v2257
    %v2292 = vunpack.c.l.b16 %v2258
    %v2293 = vunpack.c.l.b16 %v2259
    %v2294 = vunpack.c.l.b16 %v2260
    %v2295 = vpack.c.b16 %v2280, %v2279
    %v2296 = vpack.c.b16 %v2282, %v2281
    %v2297 = vpack.c.b16 %v2284, %v2283
    %v2298 = vpack.c.b16 %v2286, %v2285
    %v2299 = vpack.c.b16 %v2288, %v2287
    %v2300 = vpack.c.b16 %v2290, %v2289
    %v2301 = vpack.c.b16 %v2292, %v2291
    %v2302 = vpack.c.b16 %v2294, %v2293
    %2311 = vmatprep.subr.bf16.mxu0 0
    %2312 = vmatpush1.bf16.msra.mxu0 %v2295
    %2313 = vmatprep.subr.bf16.mxu0 0
    %2314 = vmatpush1.bf16.msra.mxu0 %v2296
    %2315 = vmatprep.subr.bf16.mxu0 0
    %2316 = vmatpush1.bf16.msra.mxu0 %v2297
    %2317 = vmatprep.subr.bf16.mxu0 0
    %2318 = vmatpush1.bf16.msra.mxu0 %v2298
    %2319 = vmatprep.subr.bf16.mxu0 0
    %2320 = vmatpush1.bf16.msra.mxu0 %v2299
    %2321 = vmatprep.subr.bf16.mxu0 0
    %2322 = vmatpush1.bf16.msra.mxu0 %v2300
    %2323 = vmatprep.subr.bf16.mxu0 0
    %2324 = vmatpush1.bf16.msra.mxu0 %v2301
    %2325 = vmatprep.subr.bf16.mxu0 0
    %2326 = vmatpush1.bf16.msra.mxu0 %v2302
    %2327 = vmatprep.subr.bf16.mxu0 0
    %2328 = vmatpush1.bf16.msra.mxu0 0
    %2329 = vmatprep.subr.bf16.mxu0 0
    %2330 = vmatpush1.bf16.msra.mxu0 0
    %2331 = vmatprep.subr.bf16.mxu0 0
    %2332 = vmatpush1.bf16.msra.mxu0 0
    %2333 = vmatprep.subr.bf16.mxu0 0
    %2334 = vmatpush1.bf16.msra.mxu0 0
    %2335 = vmatprep.subr.bf16.mxu0 0
    %2336 = vmatpush1.bf16.msra.mxu0 0
    %2337 = vmatprep.subr.bf16.mxu0 0
    %2338 = vmatpush1.bf16.msra.mxu0 0
    %2339 = vmatprep.subr.bf16.mxu0 0
    %2340 = vmatpush1.bf16.msra.mxu0 0
    %2341 = vmatprep.subr.bf16.mxu0 0
    %2342 = vmatpush1.bf16.msra.mxu0 0
    %2343 = vmatprep.mubr.bf16.mxu0 0
    %2344 = vmatmul.mubr.bf16.gmra.mrb[0].mxu0 %v2261
    %v2345 = vpop.f32.mrb[0].mxu0
    %v2346 = vadd.f32 0.0, %v2345
    %v2347 = vpop.f32.mrb[0].mxu0
    %v2348 = vpop.f32.mrb[0].mxu0
    %v2349 = vadd.f32 0.0, %v2348
    %v2350 = vpop.f32.mrb[0].mxu0
    %2351 = vmatprep.mubr.bf16.mxu0 0
    %2352 = vmatmul.mubr.bf16.gmra.mrb[0].mxu0 %v2262
    %v2353 = vpop.f32.mrb[0].mxu0
    %v2354 = vadd.f32 0.0, %v2353
    %v2355 = vpop.f32.mrb[0].mxu0
    %v2356 = vpop.f32.mrb[0].mxu0
    %v2357 = vadd.f32 0.0, %v2356
    %v2358 = vpop.f32.mrb[0].mxu0
    %2359 = vdwg.mxu0
    %v2360 = vadd.f32 %v2237, %v2346
    %v2361 = vadd.f32 %v2238, %v2349
    %v2362 = vadd.f32 %v2239, %v2354
    %v2363 = vadd.f32 %v2240, %v2357
    %v2364 = vld [vmem:[#allocation2 + $0x8] sm:$0xff]
    %v2365 = vld [vmem:[#allocation2 + $0x10] sm:$0xff]
    %v2366 = vld [vmem:[#allocation2 + $0x28] sm:$0xff]
    %v2367 = vld [vmem:[#allocation2 + $0x30] sm:$0xff]
    %v2368 = vld [vmem:[#allocation7 + $0x200] sm:$0xf]
    %v2369 = vld [vmem:[#allocation7 + $0x204] sm:$0xf]
    %v2370 = vld [vmem:[#allocation7 + $0x208] sm:$0xf]
    %v2371 = vld [vmem:[#allocation7 + $0x20c] sm:$0xf]
    %v2372 = vld [vmem:[#allocation7 + $0x210] sm:$0xf]
    %v2373 = vld [vmem:[#allocation7 + $0x214] sm:$0xf]
    %v2374 = vld [vmem:[#allocation7 + $0x218] sm:$0xf]
    %v2375 = vld [vmem:[#allocation7 + $0x21c] sm:$0xf]
    %v2376 = vld [vmem:[#allocation7 + $0x220] sm:$0xf]
    %v2377 = vld [vmem:[#allocation7 + $0x224] sm:$0xf]
    %v2378 = vld [vmem:[#allocation7 + $0x228] sm:$0xf]
    %v2379 = vld [vmem:[#allocation7 + $0x22c] sm:$0xf]
    %v2380 = vld [vmem:[#allocation7 + $0x230] sm:$0xf]
    %v2381 = vld [vmem:[#allocation7 + $0x234] sm:$0xf]
    %v2382 = vld [vmem:[#allocation7 + $0x238] sm:$0xf]
    %v2383 = vld [vmem:[#allocation7 + $0x23c] sm:$0xf]
    %v2384 = vpack.c.bf16 %v2365, %v2364
    %v2385 = vpack.c.bf16 %v2367, %v2366
    %v2402 = vunpack.c.l.b16 %v2368
    %v2403 = vunpack.c.l.b16 %v2369
    %v2404 = vunpack.c.l.b16 %v2370
    %v2405 = vunpack.c.l.b16 %v2371
    %v2406 = vunpack.c.l.b16 %v2372
    %v2407 = vunpack.c.l.b16 %v2373
    %v2408 = vunpack.c.l.b16 %v2374
    %v2409 = vunpack.c.l.b16 %v2375
    %v2410 = vunpack.c.l.b16 %v2376
    %v2411 = vunpack.c.l.b16 %v2377
    %v2412 = vunpack.c.l.b16 %v2378
    %v2413 = vunpack.c.l.b16 %v2379
    %v2414 = vunpack.c.l.b16 %v2380
    %v2415 = vunpack.c.l.b16 %v2381
    %v2416 = vunpack.c.l.b16 %v2382
    %v2417 = vunpack.c.l.b16 %v2383
    %v2418 = vpack.c.b16 %v2403, %v2402
    %v2419 = vpack.c.b16 %v2405, %v2404
    %v2420 = vpack.c.b16 %v2407, %v2406
    %v2421 = vpack.c.b16 %v2409, %v2408
    %v2422 = vpack.c.b16 %v2411, %v2410
    %v2423 = vpack.c.b16 %v2413, %v2412
    %v2424 = vpack.c.b16 %v2415, %v2414
    %v2425 = vpack.c.b16 %v2417, %v2416
    %2434 = vmatprep.subr.bf16.mxu0 0
    %2435 = vmatpush1.bf16.msra.mxu0 %v2418
    %2436 = vmatprep.subr.bf16.mxu0 0
    %2437 = vmatpush1.bf16.msra.mxu0 %v2419
    %2438 = vmatprep.subr.bf16.mxu0 0
    %2439 = vmatpush1.bf16.msra.mxu0 %v2420
    %2440 = vmatprep.subr.bf16.mxu0 0
    %2441 = vmatpush1.bf16.msra.mxu0 %v2421
    %2442 = vmatprep.subr.bf16.mxu0 0
    %2443 = vmatpush1.bf16.msra.mxu0 %v2422
    %2444 = vmatprep.subr.bf16.mxu0 0
    %2445 = vmatpush1.bf16.msra.mxu0 %v2423
    %2446 = vmatprep.subr.bf16.mxu0 0
    %2447 = vmatpush1.bf16.msra.mxu0 %v2424
    %2448 = vmatprep.subr.bf16.mxu0 0
    %2449 = vmatpush1.bf16.msra.mxu0 %v2425
    %2450 = vmatprep.subr.bf16.mxu0 0
    %2451 = vmatpush1.bf16.msra.mxu0 0
    %2452 = vmatprep.subr.bf16.mxu0 0
    %2453 = vmatpush1.bf16.msra.mxu0 0
    %2454 = vmatprep.subr.bf16.mxu0 0
    %2455 = vmatpush1.bf16.msra.mxu0 0
    %2456 = vmatprep.subr.bf16.mxu0 0
    %2457 = vmatpush1.bf16.msra.mxu0 0
    %2458 = vmatprep.subr.bf16.mxu0 0
    %2459 = vmatpush1.bf16.msra.mxu0 0
    %2460 = vmatprep.subr.bf16.mxu0 0
    %2461 = vmatpush1.bf16.msra.mxu0 0
    %2462 = vmatprep.subr.bf16.mxu0 0
    %2463 = vmatpush1.bf16.msra.mxu0 0
    %2464 = vmatprep.subr.bf16.mxu0 0
    %2465 = vmatpush1.bf16.msra.mxu0 0
    %2466 = vmatprep.mubr.bf16.mxu0 0
    %2467 = vmatmul.mubr.bf16.gmra.mrb[0].mxu0 %v2384
    %v2468 = vpop.f32.mrb[0].mxu0
    %v2469 = vadd.f32 0.0, %v2468
    %v2470 = vpop.f32.mrb[0].mxu0
    %v2471 = vpop.f32.mrb[0].mxu0
    %v2472 = vadd.f32 0.0, %v2471
    %v2473 = vpop.f32.mrb[0].mxu0
    %2474 = vmatprep.mubr.bf16.mxu0 0
    %2475 = vmatmul.mubr.bf16.gmra.mrb[0].mxu0 %v2385
    %v2476 = vpop.f32.mrb[0].mxu0
    %v2477 = vadd.f32 0.0, %v2476
    %v2478 = vpop.f32.mrb[0].mxu0
    %v2479 = vpop.f32.mrb[0].mxu0
    %v2480 = vadd.f32 0.0, %v2479
    %v2481 = vpop.f32.mrb[0].mxu0
    %2482 = vdwg.mxu0
    %v2483 = vadd.f32 %v2360, %v2469
    %v2484 = vadd.f32 %v2361, %v2472
    %v2485 = vadd.f32 %v2362, %v2477
    %v2486 = vadd.f32 %v2363, %v2480
    %v2487 = vld [vmem:[#allocation2 + $0x9] sm:$0xff]
    %v2488 = vld [vmem:[#allocation2 + $0x11] sm:$0xff]
    %v2489 = vld [vmem:[#allocation2 + $0x29] sm:$0xff]
    %v2490 = vld [vmem:[#allocation2 + $0x31] sm:$0xff]
    %v2491 = vld [vmem:[#allocation7 + $0x240] sm:$0xf]
    %v2492 = vld [vmem:[#allocation7 + $0x244] sm:$0xf]
    %v2493 = vld [vmem:[#allocation7 + $0x248] sm:$0xf]
    %v2494 = vld [vmem:[#allocation7 + $0x24c] sm:$0xf]
    %v2495 = vld [vmem:[#allocation7 + $0x250] sm:$0xf]
    %v2496 = vld [vmem:[#allocation7 + $0x254] sm:$0xf]
    %v2497 = vld [vmem:[#allocation7 + $0x258] sm:$0xf]
    %v2498 = vld [vmem:[#allocation7 + $0x25c] sm:$0xf]
    %v2499 = vld [vmem:[#allocation7 + $0x260] sm:$0xf]
    %v2500 = vld [vmem:[#allocation7 + $0x264] sm:$0xf]
    %v2501 = vld [vmem:[#allocation7 + $0x268] sm:$0xf]
    %v2502 = vld [vmem:[#allocation7 + $0x26c] sm:$0xf]
    %v2503 = vld [vmem:[#allocation7 + $0x270] sm:$0xf]
    %v2504 = vld [vmem:[#allocation7 + $0x274] sm:$0xf]
    %v2505 = vld [vmem:[#allocation7 + $0x278] sm:$0xf]
    %v2506 = vld [vmem:[#allocation7 + $0x27c] sm:$0xf]
    %v2507 = vpack.c.bf16 %v2488, %v2487
    %v2508 = vpack.c.bf16 %v2490, %v2489
    %v2525 = vunpack.c.l.b16 %v2491
    %v2526 = vunpack.c.l.b16 %v2492
    %v2527 = vunpack.c.l.b16 %v2493
    %v2528 = vunpack.c.l.b16 %v2494
    %v2529 = vunpack.c.l.b16 %v2495
    %v2530 = vunpack.c.l.b16 %v2496
    %v2531 = vunpack.c.l.b16 %v2497
    %v2532 = vunpack.c.l.b16 %v2498
    %v2533 = vunpack.c.l.b16 %v2499
    %v2534 = vunpack.c.l.b16 %v2500
    %v2535 = vunpack.c.l.b16 %v2501
    %v2536 = vunpack.c.l.b16 %v2502
    %v2537 = vunpack.c.l.b16 %v2503
    %v2538 = vunpack.c.l.b16 %v2504
    %v2539 = vunpack.c.l.b16 %v2505
    %v2540 = vunpack.c.l.b16 %v2506
    %v2541 = vpack.c.b16 %v2526, %v2525
    %v2542 = vpack.c.b16 %v2528, %v2527
    %v2543 = vpack.c.b16 %v2530, %v2529
    %v2544 = vpack.c.b16 %v2532, %v2531
    %v2545 = vpack.c.b16 %v2534, %v2533
    %v2546 = vpack.c.b16 %v2536, %v2535
    %v2547 = vpack.c.b16 %v2538, %v2537
    %v2548 = vpack.c.b16 %v2540, %v2539
    %2557 = vmatprep.subr.bf16.mxu0 0
    %2558 = vmatpush1.bf16.msra.mxu0 %v2541
    %2559 = vmatprep.subr.bf16.mxu0 0
    %2560 = vmatpush1.bf16.msra.mxu0 %v2542
    %2561 = vmatprep.subr.bf16.mxu0 0
    %2562 = vmatpush1.bf16.msra.mxu0 %v2543
    %2563 = vmatprep.subr.bf16.mxu0 0
    %2564 = vmatpush1.bf16.msra.mxu0 %v2544
    %2565 = vmatprep.subr.bf16.mxu0 0
    %2566 = vmatpush1.bf16.msra.mxu0 %v2545
    %2567 = vmatprep.subr.bf16.mxu0 0
    %2568 = vmatpush1.bf16.msra.mxu0 %v2546
    %2569 = vmatprep.subr.bf16.mxu0 0
    %2570 = vmatpush1.bf16.msra.mxu0 %v2547
    %2571 = vmatprep.subr.bf16.mxu0 0
    %2572 = vmatpush1.bf16.msra.mxu0 %v2548
    %2573 = vmatprep.subr.bf16.mxu0 0
    %2574 = vmatpush1.bf16.msra.mxu0 0
    %2575 = vmatprep.subr.bf16.mxu0 0
    %2576 = vmatpush1.bf16.msra.mxu0 0
    %2577 = vmatprep.subr.bf16.mxu0 0
    %2578 = vmatpush1.bf16.msra.mxu0 0
    %2579 = vmatprep.subr.bf16.mxu0 0
    %2580 = vmatpush1.bf16.msra.mxu0 0
    %2581 = vmatprep.subr.bf16.mxu0 0
    %2582 = vmatpush1.bf16.msra.mxu0 0
    %2583 = vmatprep.subr.bf16.mxu0 0
    %2584 = vmatpush1.bf16.msra.mxu0 0
    %2585 = vmatprep.subr.bf16.mxu0 0
    %2586 = vmatpush1.bf16.msra.mxu0 0
    %2587 = vmatprep.subr.bf16.mxu0 0
    %2588 = vmatpush1.bf16.msra.mxu0 0
    %2589 = vmatprep.mubr.bf16.mxu0 0
    %2590 = vmatmul.mubr.bf16.gmra.mrb[0].mxu0 %v2507
    %v2591 = vpop.f32.mrb[0].mxu0
    %v2592 = vadd.f32 0.0, %v2591
    %v2593 = vpop.f32.mrb[0].mxu0
    %v2594 = vpop.f32.mrb[0].mxu0
    %v2595 = vadd.f32 0.0, %v2594
    %v2596 = vpop.f32.mrb[0].mxu0
    %2597 = vmatprep.mubr.bf16.mxu0 0
    %2598 = vmatmul.mubr.bf16.gmra.mrb[0].mxu0 %v2508
    %v2599 = vpop.f32.mrb[0].mxu0
    %v2600 = vadd.f32 0.0, %v2599
    %v2601 = vpop.f32.mrb[0].mxu0
    %v2602 = vpop.f32.mrb[0].mxu0
    %v2603 = vadd.f32 0.0, %v2602
    %v2604 = vpop.f32.mrb[0].mxu0
    %2605 = vdwg.mxu0
    %v2606 = vadd.f32 %v2483, %v2592
    %v2607 = vadd.f32 %v2484, %v2595
    %v2608 = vadd.f32 %v2485, %v2600
    %v2609 = vadd.f32 %v2486, %v2603
    %v2610 = vld [vmem:[#allocation2 + $0xa] sm:$0xff]
    %v2611 = vld [vmem:[#allocation2 + $0x12] sm:$0xff]
    %v2612 = vld [vmem:[#allocation2 + $0x2a] sm:$0xff]
    %v2613 = vld [vmem:[#allocation2 + $0x32] sm:$0xff]
    %v2614 = vld [vmem:[#allocation7 + $0x280] sm:$0xf]
    %v2615 = vld [vmem:[#allocation7 + $0x284] sm:$0xf]
    %v2616 = vld [vmem:[#allocation7 + $0x288] sm:$0xf]
    %v2617 = vld [vmem:[#allocation7 + $0x28c] sm:$0xf]
    %v2618 = vld [vmem:[#allocation7 + $0x290] sm:$0xf]
    %v2619 = vld [vmem:[#allocation7 + $0x294] sm:$0xf]
    %v2620 = vld [vmem:[#allocation7 + $0x298] sm:$0xf]
    %v2621 = vld [vmem:[#allocation7 + $0x29c] sm:$0xf]
    %v2622 = vld [vmem:[#allocation7 + $0x2a0] sm:$0xf]
    %v2623 = vld [vmem:[#allocation7 + $0x2a4] sm:$0xf]
    %v2624 = vld [vmem:[#allocation7 + $0x2a8] sm:$0xf]
    %v2625 = vld [vmem:[#allocation7 + $0x2ac] sm:$0xf]
    %v2626 = vld [vmem:[#allocation7 + $0x2b0] sm:$0xf]
    %v2627 = vld [vmem:[#allocation7 + $0x2b4] sm:$0xf]
    %v2628 = vld [vmem:[#allocation7 + $0x2b8] sm:$0xf]
    %v2629 = vld [vmem:[#allocation7 + $0x2bc] sm:$0xf]
    %v2630 = vpack.c.bf16 %v2611, %v2610
    %v2631 = vpack.c.bf16 %v2613, %v2612
    %v2648 = vunpack.c.l.b16 %v2614
    %v2649 = vunpack.c.l.b16 %v2615
    %v2650 = vunpack.c.l.b16 %v2616
    %v2651 = vunpack.c.l.b16 %v2617
    %v2652 = vunpack.c.l.b16 %v2618
    %v2653 = vunpack.c.l.b16 %v2619
    %v2654 = vunpack.c.l.b16 %v2620
    %v2655 = vunpack.c.l.b16 %v2621
    %v2656 = vunpack.c.l.b16 %v2622
    %v2657 = vunpack.c.l.b16 %v2623
    %v2658 = vunpack.c.l.b16 %v2624
    %v2659 = vunpack.c.l.b16 %v2625
    %v2660 = vunpack.c.l.b16 %v2626
    %v2661 = vunpack.c.l.b16 %v2627
    %v2662 = vunpack.c.l.b16 %v2628
    %v2663 = vunpack.c.l.b16 %v2629
    %v2664 = vpack.c.b16 %v2649, %v2648
    %v2665 = vpack.c.b16 %v2651, %v2650
    %v2666 = vpack.c.b16 %v2653, %v2652
    %v2667 = vpack.c.b16 %v2655, %v2654
    %v2668 = vpack.c.b16 %v2657, %v2656
    %v2669 = vpack.c.b16 %v2659, %v2658
    %v2670 = vpack.c.b16 %v2661, %v2660
    %v2671 = vpack.c.b16 %v2663, %v2662
    %2680 = vmatprep.subr.bf16.mxu0 0
    %2681 = vmatpush1.bf16.msra.mxu0 %v2664
    %2682 = vmatprep.subr.bf16.mxu0 0
    %2683 = vmatpush1.bf16.msra.mxu0 %v2665
    %2684 = vmatprep.subr.bf16.mxu0 0
    %2685 = vmatpush1.bf16.msra.mxu0 %v2666
    %2686 = vmatprep.subr.bf16.mxu0 0
    %2687 = vmatpush1.bf16.msra.mxu0 %v2667
    %2688 = vmatprep.subr.bf16.mxu0 0
    %2689 = vmatpush1.bf16.msra.mxu0 %v2668
    %2690 = vmatprep.subr.bf16.mxu0 0
    %2691 = vmatpush1.bf16.msra.mxu0 %v2669
    %2692 = vmatprep.subr.bf16.mxu0 0
    %2693 = vmatpush1.bf16.msra.mxu0 %v2670
    %2694 = vmatprep.subr.bf16.mxu0 0
    %2695 = vmatpush1.bf16.msra.mxu0 %v2671
    %2696 = vmatprep.subr.bf16.mxu0 0
    %2697 = vmatpush1.bf16.msra.mxu0 0
    %2698 = vmatprep.subr.bf16.mxu0 0
    %2699 = vmatpush1.bf16.msra.mxu0 0
    %2700 = vmatprep.subr.bf16.mxu0 0
    %2701 = vmatpush1.bf16.msra.mxu0 0
    %2702 = vmatprep.subr.bf16.mxu0 0
    %2703 = vmatpush1.bf16.msra.mxu0 0
    %2704 = vmatprep.subr.bf16.mxu0 0
    %2705 = vmatpush1.bf16.msra.mxu0 0
    %2706 = vmatprep.subr.bf16.mxu0 0
    %2707 = vmatpush1.bf16.msra.mxu0 0
    %2708 = vmatprep.subr.bf16.mxu0 0
    %2709 = vmatpush1.bf16.msra.mxu0 0
    %2710 = vmatprep.subr.bf16.mxu0 0
    %2711 = vmatpush1.bf16.msra.mxu0 0
    %2712 = vmatprep.mubr.bf16.mxu0 0
    %2713 = vmatmul.mubr.bf16.gmra.mrb[0].mxu0 %v2630
    %v2714 = vpop.f32.mrb[0].mxu0
    %v2715 = vadd.f32 0.0, %v2714
    %v2716 = vpop.f32.mrb[0].mxu0
    %v2717 = vpop.f32.mrb[0].mxu0
    %v2718 = vadd.f32 0.0, %v2717
    %v2719 = vpop.f32.mrb[0].mxu0
    %2720 = vmatprep.mubr.bf16.mxu0 0
    %2721 = vmatmul.mubr.bf16.gmra.mrb[0].mxu0 %v2631
    %v2722 = vpop.f32.mrb[0].mxu0
    %v2723 = vadd.f32 0.0, %v2722
    %v2724 = vpop.f32.mrb[0].mxu0
    %v2725 = vpop.f32.mrb[0].mxu0
    %v2726 = vadd.f32 0.0, %v2725
    %v2727 = vpop.f32.mrb[0].mxu0
    %2728 = vdwg.mxu0
    %v2729 = vadd.f32 %v2606, %v2715
    %v2730 = vadd.f32 %v2607, %v2718
    %v2731 = vadd.f32 %v2608, %v2723
    %v2732 = vadd.f32 %v2609, %v2726
    %v2733 = vadd.f32 %v2729, %v2730
    %v2734 = vadd.f32 %v2733, %v2731
    %v2735 = vadd.f32 %v2734, %v2732
    %v2736 = vrot.slane %v2735, 4
    %v2737 = vadd.f32 %v2735, %v2736
    %v2738 = vrot.slane %v2737, 2
    %v2739 = vadd.f32 %v2737, %v2738
    %v2740 = vrot.slane %v2739, 1
    %v2741 = vadd.f32 %v2739, %v2740
    %v2742 = vmul.f32 %v2741, 0.03125
    %v2743 = vmul.f32 %v2729, %v2729
    %v2744 = vmul.f32 %v2730, %v2730
    %v2745 = vmul.f32 %v2731, %v2731
    %v2746 = vmul.f32 %v2732, %v2732
    %v2747 = vadd.f32 %v2743, %v2744
    %v2748 = vadd.f32 %v2747, %v2745
    %v2749 = vadd.f32 %v2748, %v2746
    %v2750 = vrot.slane %v2749, 4
    %v2751 = vadd.f32 %v2749, %v2750
    %v2752 = vrot.slane %v2751, 2
    %v2753 = vadd.f32 %v2751, %v2752
    %v2754 = vrot.slane %v2753, 1
    %v2755 = vadd.f32 %v2753, %v2754
    %v2756 = vmul.f32 %v2755, 0.03125
    %v2757 = vmul.f32 %v2742, %v2742
    %v2758 = vsub.f32 %v2756, %v2757
    %v2759 = vmax.f32 %v2758, 0.0
    %v2760 = vadd.f32 %v2759, 1e-05
    %v2761 = vrsqrt.pop %v2760
    %v2762 = vmul.f32 %v71, %v2761
    %v2763 = vlaneseq
    %v2764 = vshrl.u32 %v2763, 7
    %v2765 = vsub.s32 2, %v2764
    %v2766 = vrot.slane %v2762, %v2765
    %v2767 = vmul.f32 %v2729, %v2766
    %v2768 = vmul.f32 %v2730, %v2766
    %v2769 = vmul.f32 %v2731, %v2766
    %v2770 = vmul.f32 %v2732, %v2766
    %v2771 = vmul.f32 %v2742, %v2762
    %v2773 = vrot.slane %v2771, 7
    %v2775 = vsub.f32 %v71, %v2773
    %v2776 = vlaneseq
    %v2777 = vshrl.u32 %v2776, 7
    %v2778 = vsub.s32 3, %v2777
    %v2779 = vrot.slane %v2775, %v2778
    %v2780 = vadd.f32 %v2767, %v2779
    %v2781 = vadd.f32 %v2768, %v2779
    %v2782 = vadd.f32 %v2769, %v2779
    %v2783 = vadd.f32 %v2770, %v2779
    %v2784 = vmax.f32 %v2780, 0.0
    %v2785 = vmax.f32 %v2781, 0.0
    %v2786 = vmax.f32 %v2782, 0.0
    %v2787 = vmax.f32 %v2783, 0.0
    %2788 = vst [vmem:[#allocation2 + $0x5] sm:$0xff] %v2784
    %2789 = vst [vmem:[#allocation2 + $0xd] sm:$0xff] %v2785
    %2790 = vst [vmem:[#allocation2 + $0x25] sm:$0xff] %v2786
    %2791 = vst [vmem:[#allocation2 + $0x2d] sm:$0xff] %v2787
    %v2792 = vld [vmem:[#allocation2 + $0x2] sm:$0xff]
    %v2793 = vld [vmem:[#allocation2 + $0xa] sm:$0xff]
    %v2794 = vld [vmem:[#allocation2 + $0x22] sm:$0xff]
    %v2795 = vld [vmem:[#allocation2 + $0x2a] sm:$0xff]
    %v2796 = vld [vmem:[#allocation7 + $0x2c0] sm:$0xf]
    %v2797 = vld [vmem:[#allocation7 + $0x2c4] sm:$0xf]
    %v2798 = vld [vmem:[#allocation7 + $0x2c8] sm:$0xf]
    %v2799 = vld [vmem:[#allocation7 + $0x2cc] sm:$0xf]
    %v2800 = vld [vmem:[#allocation7 + $0x2d0] sm:$0xf]
    %v2801 = vld [vmem:[#allocation7 + $0x2d4] sm:$0xf]
    %v2802 = vld [vmem:[#allocation7 + $0x2d8] sm:$0xf]
    %v2803 = vld [vmem:[#allocation7 + $0x2dc] sm:$0xf]
    %v2804 = vld [vmem:[#allocation7 + $0x2e0] sm:$0xf]
    %v2805 = vld [vmem:[#allocation7 + $0x2e4] sm:$0xf]
    %v2806 = vld [vmem:[#allocation7 + $0x2e8] sm:$0xf]
    %v2807 = vld [vmem:[#allocation7 + $0x2ec] sm:$0xf]
    %v2808 = vld [vmem:[#allocation7 + $0x2f0] sm:$0xf]
    %v2809 = vld [vmem:[#allocation7 + $0x2f4] sm:$0xf]
    %v2810 = vld [vmem:[#allocation7 + $0x2f8] sm:$0xf]
    %v2811 = vld [vmem:[#allocation7 + $0x2fc] sm:$0xf]
    %v2812 = vpack.c.bf16 %v2793, %v2792
    %v2813 = vpack.c.bf16 %v2795, %v2794
    %v2814 = vld [vmem:[#allocation2 + $0x3] sm:$0xff]
    %v2815 = vld [vmem:[#allocation2 + $0xb] sm:$0xff]
    %v2816 = vld [vmem:[#allocation2 + $0x23] sm:$0xff]
    %v2817 = vld [vmem:[#allocation2 + $0x2b] sm:$0xff]
    %v2818 = vld [vmem:[#allocation7 + $0x300] sm:$0xf]
    %v2819 = vld [vmem:[#allocation7 + $0x304] sm:$0xf]
    %v2820 = vld [vmem:[#allocation7 + $0x308] sm:$0xf]
    %v2821 = vld [vmem:[#allocation7 + $0x30c] sm:$0xf]
    %v2822 = vld [vmem:[#allocation7 + $0x310] sm:$0xf]
    %v2823 = vld [vmem:[#allocation7 + $0x314] sm:$0xf]
    %v2824 = vld [vmem:[#allocation7 + $0x318] sm:$0xf]
    %v2825 = vld [vmem:[#allocation7 + $0x31c] sm:$0xf]
    %v2826 = vld [vmem:[#allocation7 + $0x320] sm:$0xf]
    %v2827 = vld [vmem:[#allocation7 + $0x324] sm:$0xf]
    %v2828 = vld [vmem:[#allocation7 + $0x328] sm:$0xf]
    %v2829 = vld [vmem:[#allocation7 + $0x32c] sm:$0xf]
    %v2830 = vld [vmem:[#allocation7 + $0x330] sm:$0xf]
    %v2831 = vld [vmem:[#allocation7 + $0x334] sm:$0xf]
    %v2832 = vld [vmem:[#allocation7 + $0x338] sm:$0xf]
    %v2833 = vld [vmem:[#allocation7 + $0x33c] sm:$0xf]
    %v2834 = vpack.c.bf16 %v2815, %v2814
    %v2835 = vpack.c.bf16 %v2817, %v2816
    %v2852 = vunpack.c.l.b16 %v2818
    %v2853 = vunpack.c.l.b16 %v2819
    %v2854 = vunpack.c.l.b16 %v2820
    %v2855 = vunpack.c.l.b16 %v2821
    %v2856 = vunpack.c.l.b16 %v2822
    %v2857 = vunpack.c.l.b16 %v2823
    %v2858 = vunpack.c.l.b16 %v2824
    %v2859 = vunpack.c.l.b16 %v2825
    %v2860 = vunpack.c.l.b16 %v2826
    %v2861 = vunpack.c.l.b16 %v2827
    %v2862 = vunpack.c.l.b16 %v2828
    %v2863 = vunpack.c.l.b16 %v2829
    %v2864 = vunpack.c.l.b16 %v2830
    %v2865 = vunpack.c.l.b16 %v2831
    %v2866 = vunpack.c.l.b16 %v2832
    %v2867 = vunpack.c.l.b16 %v2833
    %v2868 = vpack.c.b16 %v2853, %v2852
    %v2869 = vpack.c.b16 %v2855, %v2854
    %v2870 = vpack.c.b16 %v2857, %v2856
    %v2871 = vpack.c.b16 %v2859, %v2858
    %v2872 = vpack.c.b16 %v2861, %v2860
    %v2873 = vpack.c.b16 %v2863, %v2862
    %v2874 = vpack.c.b16 %v2865, %v2864
    %v2875 = vpack.c.b16 %v2867, %v2866
    %2884 = vmatprep.subr.bf16.mxu0 0
    %2885 = vmatpush1.bf16.msra.mxu0 %v2868
    %2886 = vmatprep.subr.bf16.mxu0 0
    %2887 = vmatpush1.bf16.msra.mxu0 %v2869
    %2888 = vmatprep.subr.bf16.mxu0 0
    %2889 = vmatpush1.bf16.msra.mxu0 %v2870
    %2890 = vmatprep.subr.bf16.mxu0 0
    %2891 = vmatpush1.bf16.msra.mxu0 %v2871
    %2892 = vmatprep.subr.bf16.mxu0 0
    %2893 = vmatpush1.bf16.msra.mxu0 %v2872
    %2894 = vmatprep.subr.bf16.mxu0 0
    %2895 = vmatpush1.bf16.msra.mxu0 %v2873
    %2896 = vmatprep.subr.bf16.mxu0 0
    %2897 = vmatpush1.bf16.msra.mxu0 %v2874
    %2898 = vmatprep.subr.bf16.mxu0 0
    %2899 = vmatpush1.bf16.msra.mxu0 %v2875
    %2900 = vmatprep.subr.bf16.mxu0 0
    %2901 = vmatpush1.bf16.msra.mxu0 0
    %2902 = vmatprep.subr.bf16.mxu0 0
    %2903 = vmatpush1.bf16.msra.mxu0 0
    %2904 = vmatprep.subr.bf16.mxu0 0
    %2905 = vmatpush1.bf16.msra.mxu0 0
    %2906 = vmatprep.subr.bf16.mxu0 0
    %2907 = vmatpush1.bf16.msra.mxu0 0
    %2908 = vmatprep.subr.bf16.mxu0 0
    %2909 = vmatpush1.bf16.msra.mxu0 0
    %2910 = vmatprep.subr.bf16.mxu0 0
    %2911 = vmatpush1.bf16.msra.mxu0 0
    %2912 = vmatprep.subr.bf16.mxu0 0
    %2913 = vmatpush1.bf16.msra.mxu0 0
    %2914 = vmatprep.subr.bf16.mxu0 0
    %2915 = vmatpush1.bf16.msra.mxu0 0
    %2916 = vmatprep.mubr.bf16.mxu0 0
    %2917 = vmatmul.mubr.bf16.gmra.mrb[0].mxu0 %v2834
    %v2918 = vpop.f32.mrb[0].mxu0
    %v2919 = vadd.f32 0.0, %v2918
    %v2920 = vpop.f32.mrb[0].mxu0
    %v2921 = vpop.f32.mrb[0].mxu0
    %v2922 = vadd.f32 0.0, %v2921
    %v2923 = vpop.f32.mrb[0].mxu0
    %2924 = vmatprep.mubr.bf16.mxu0 0
    %2925 = vmatmul.mubr.bf16.gmra.mrb[0].mxu0 %v2835
    %v2926 = vpop.f32.mrb[0].mxu0
    %v2927 = vadd.f32 0.0, %v2926
    %v2928 = vpop.f32.mrb[0].mxu0
    %v2929 = vpop.f32.mrb[0].mxu0
    %v2930 = vadd.f32 0.0, %v2929
    %v2931 = vpop.f32.mrb[0].mxu0
    %2932 = vdwg.mxu0
    %v2949 = vunpack.c.l.b16 %v2796
    %v2950 = vunpack.c.l.b16 %v2797
    %v2951 = vunpack.c.l.b16 %v2798
    %v2952 = vunpack.c.l.b16 %v2799
    %v2953 = vunpack.c.l.b16 %v2800
    %v2954 = vunpack.c.l.b16 %v2801
    %v2955 = vunpack.c.l.b16 %v2802
    %v2956 = vunpack.c.l.b16 %v2803
    %v2957 = vunpack.c.l.b16 %v2804
    %v2958 = vunpack.c.l.b16 %v2805
    %v2959 = vunpack.c.l.b16 %v2806
    %v2960 = vunpack.c.l.b16 %v2807
    %v2961 = vunpack.c.l.b16 %v2808
    %v2962 = vunpack.c.l.b16 %v2809
    %v2963 = vunpack.c.l.b16 %v2810
    %v2964 = vunpack.c.l.b16 %v2811
    %v2965 = vpack.c.b16 %v2950, %v2949
    %v2966 = vpack.c.b16 %v2952, %v2951
    %v2967 = vpack.c.b16 %v2954, %v2953
    %v2968 = vpack.c.b16 %v2956, %v2955
    %v2969 = vpack.c.b16 %v2958, %v2957
    %v2970 = vpack.c.b16 %v2960, %v2959
    %v2971 = vpack.c.b16 %v2962, %v2961
    %v2972 = vpack.c.b16 %v2964, %v2963
    %2981 = vmatprep.subr.bf16.mxu0 0
    %2982 = vmatpush1.bf16.msra.mxu0 %v2965
    %2983 = vmatprep.subr.bf16.mxu0 0
    %2984 = vmatpush1.bf16.msra.mxu0 %v2966
    %2985 = vmatprep.subr.bf16.mxu0 0
    %2986 = vmatpush1.bf16.msra.mxu0 %v2967
    %2987 = vmatprep.subr.bf16.mxu0 0
    %2988 = vmatpush1.bf16.msra.mxu0 %v2968
    %2989 = vmatprep.subr.bf16.mxu0 0
    %2990 = vmatpush1.bf16.msra.mxu0 %v2969
    %2991 = vmatprep.subr.bf16.mxu0 0
    %2992 = vmatpush1.bf16.msra.mxu0 %v2970
    %2993 = vmatprep.subr.bf16.mxu0 0
    %2994 = vmatpush1.bf16.msra.mxu0 %v2971
    %2995 = vmatprep.subr.bf16.mxu0 0
    %2996 = vmatpush1.bf16.msra.mxu0 %v2972
    %2997 = vmatprep.subr.bf16.mxu0 0
    %2998 = vmatpush1.bf16.msra.mxu0 0
    %2999 = vmatprep.subr.bf16.mxu0 0
    %3000 = vmatpush1.bf16.msra.mxu0 0
    %3001 = vmatprep.subr.bf16.mxu0 0
    %3002 = vmatpush1.bf16.msra.mxu0 0
    %3003 = vmatprep.subr.bf16.mxu0 0
    %3004 = vmatpush1.bf16.msra.mxu0 0
    %3005 = vmatprep.subr.bf16.mxu0 0
    %3006 = vmatpush1.bf16.msra.mxu0 0
    %3007 = vmatprep.subr.bf16.mxu0 0
    %3008 = vmatpush1.bf16.msra.mxu0 0
    %3009 = vmatprep.subr.bf16.mxu0 0
    %3010 = vmatpush1.bf16.msra.mxu0 0
    %3011 = vmatprep.subr.bf16.mxu0 0
    %3012 = vmatpush1.bf16.msra.mxu0 0
    %3013 = vmatprep.mubr.bf16.mxu0 0
    %3014 = vmatmul.mubr.bf16.gmra.mrb[0].mxu0 %v2812
    %v3015 = vpop.f32.mrb[0].mxu0
    %v3016 = vadd.f32 %v2919, %v3015
    %v3017 = vpop.f32.mrb[0].mxu0
    %v3018 = vpop.f32.mrb[0].mxu0
    %v3019 = vadd.f32 %v2922, %v3018
    %v3020 = vpop.f32.mrb[0].mxu0
    %3021 = vmatprep.mubr.bf16.mxu0 0
    %3022 = vmatmul.mubr.bf16.gmra.mrb[0].mxu0 %v2813
    %v3023 = vpop.f32.mrb[0].mxu0
    %v3024 = vadd.f32 %v2927, %v3023
    %v3025 = vpop.f32.mrb[0].mxu0
    %v3026 = vpop.f32.mrb[0].mxu0
    %v3027 = vadd.f32 %v2930, %v3026
    %v3028 = vpop.f32.mrb[0].mxu0
    %3029 = vdwg.mxu0
    %v3030 = vld [vmem:[#allocation2 + $0x4] sm:$0xff]
    %v3031 = vld [vmem:[#allocation2 + $0xc] sm:$0xff]
    %v3032 = vld [vmem:[#allocation2 + $0x24] sm:$0xff]
    %v3033 = vld [vmem:[#allocation2 + $0x2c] sm:$0xff]
    %v3034 = vld [vmem:[#allocation7 + $0x340] sm:$0xf]
    %v3035 = vld [vmem:[#allocation7 + $0x344] sm:$0xf]
    %v3036 = vld [vmem:[#allocation7 + $0x348] sm:$0xf]
    %v3037 = vld [vmem:[#allocation7 + $0x34c] sm:$0xf]
    %v3038 = vld [vmem:[#allocation7 + $0x350] sm:$0xf]
    %v3039 = vld [vmem:[#allocation7 + $0x354] sm:$0xf]
    %v3040 = vld [vmem:[#allocation7 + $0x358] sm:$0xf]
    %v3041 = vld [vmem:[#allocation7 + $0x35c] sm:$0xf]
    %v3042 = vld [vmem:[#allocation7 + $0x360] sm:$0xf]
    %v3043 = vld [vmem:[#allocation7 + $0x364] sm:$0xf]
    %v3044 = vld [vmem:[#allocation7 + $0x368] sm:$0xf]
    %v3045 = vld [vmem:[#allocation7 + $0x36c] sm:$0xf]
    %v3046 = vld [vmem:[#allocation7 + $0x370] sm:$0xf]
    %v3047 = vld [vmem:[#allocation7 + $0x374] sm:$0xf]
    %v3048 = vld [vmem:[#allocation7 + $0x378] sm:$0xf]
    %v3049 = vld [vmem:[#allocation7 + $0x37c] sm:$0xf]
    %v3050 = vpack.c.bf16 %v3031, %v3030
    %v3051 = vpack.c.bf16 %v3033, %v3032
    %v3068 = vunpack.c.l.b16 %v3034
    %v3069 = vunpack.c.l.b16 %v3035
    %v3070 = vunpack.c.l.b16 %v3036
    %v3071 = vunpack.c.l.b16 %v3037
    %v3072 = vunpack.c.l.b16 %v3038
    %v3073 = vunpack.c.l.b16 %v3039
    %v3074 = vunpack.c.l.b16 %v3040
    %v3075 = vunpack.c.l.b16 %v3041
    %v3076 = vunpack.c.l.b16 %v3042
    %v3077 = vunpack.c.l.b16 %v3043
    %v3078 = vunpack.c.l.b16 %v3044
    %v3079 = vunpack.c.l.b16 %v3045
    %v3080 = vunpack.c.l.b16 %v3046
    %v3081 = vunpack.c.l.b16 %v3047
    %v3082 = vunpack.c.l.b16 %v3048
    %v3083 = vunpack.c.l.b16 %v3049
    %v3084 = vpack.c.b16 %v3069, %v3068
    %v3085 = vpack.c.b16 %v3071, %v3070
    %v3086 = vpack.c.b16 %v3073, %v3072
    %v3087 = vpack.c.b16 %v3075, %v3074
    %v3088 = vpack.c.b16 %v3077, %v3076
    %v3089 = vpack.c.b16 %v3079, %v3078
    %v3090 = vpack.c.b16 %v3081, %v3080
    %v3091 = vpack.c.b16 %v3083, %v3082
    %3100 = vmatprep.subr.bf16.mxu0 0
    %3101 = vmatpush1.bf16.msra.mxu0 %v3084
    %3102 = vmatprep.subr.bf16.mxu0 0
    %3103 = vmatpush1.bf16.msra.mxu0 %v3085
    %3104 = vmatprep.subr.bf16.mxu0 0
    %3105 = vmatpush1.bf16.msra.mxu0 %v3086
    %3106 = vmatprep.subr.bf16.mxu0 0
    %3107 = vmatpush1.bf16.msra.mxu0 %v3087
    %3108 = vmatprep.subr.bf16.mxu0 0
    %3109 = vmatpush1.bf16.msra.mxu0 %v3088
    %3110 = vmatprep.subr.bf16.mxu0 0
    %3111 = vmatpush1.bf16.msra.mxu0 %v3089
    %3112 = vmatprep.subr.bf16.mxu0 0
    %3113 = vmatpush1.bf16.msra.mxu0 %v3090
    %3114 = vmatprep.subr.bf16.mxu0 0
    %3115 = vmatpush1.bf16.msra.mxu0 %v3091
    %3116 = vmatprep.subr.bf16.mxu0 0
    %3117 = vmatpush1.bf16.msra.mxu0 0
    %3118 = vmatprep.subr.bf16.mxu0 0
    %3119 = vmatpush1.bf16.msra.mxu0 0
    %3120 = vmatprep.subr.bf16.mxu0 0
    %3121 = vmatpush1.bf16.msra.mxu0 0
    %3122 = vmatprep.subr.bf16.mxu0 0
    %3123 = vmatpush1.bf16.msra.mxu0 0
    %3124 = vmatprep.subr.bf16.mxu0 0
    %3125 = vmatpush1.bf16.msra.mxu0 0
    %3126 = vmatprep.subr.bf16.mxu0 0
    %3127 = vmatpush1.bf16.msra.mxu0 0
    %3128 = vmatprep.subr.bf16.mxu0 0
    %3129 = vmatpush1.bf16.msra.mxu0 0
    %3130 = vmatprep.subr.bf16.mxu0 0
    %3131 = vmatpush1.bf16.msra.mxu0 0
    %3132 = vmatprep.mubr.bf16.mxu0 0
    %3133 = vmatmul.mubr.bf16.gmra.mrb[0].mxu0 %v3050
    %v3134 = vpop.f32.mrb[0].mxu0
    %v3135 = vadd.f32 0.0, %v3134
    %v3136 = vpop.f32.mrb[0].mxu0
    %v3137 = vpop.f32.mrb[0].mxu0
    %v3138 = vadd.f32 0.0, %v3137
    %v3139 = vpop.f32.mrb[0].mxu0
    %3140 = vmatprep.mubr.bf16.mxu0 0
    %3141 = vmatmul.mubr.bf16.gmra.mrb[0].mxu0 %v3051
    %v3142 = vpop.f32.mrb[0].mxu0
    %v3143 = vadd.f32 0.0, %v3142
    %v3144 = vpop.f32.mrb[0].mxu0
    %v3145 = vpop.f32.mrb[0].mxu0
    %v3146 = vadd.f32 0.0, %v3145
    %v3147 = vpop.f32.mrb[0].mxu0
    %3148 = vdwg.mxu0
    %v3149 = vadd.f32 %v3016, %v3135
    %v3150 = vadd.f32 %v3019, %v3138
    %v3151 = vadd.f32 %v3024, %v3143
    %v3152 = vadd.f32 %v3027, %v3146
    %v3153 = vld [vmem:[#allocation2 + $0x5] sm:$0xff]
    %v3154 = vld [vmem:[#allocation2 + $0xd] sm:$0xff]
    %v3155 = vld [vmem:[#allocation2 + $0x25] sm:$0xff]
    %v3156 = vld [vmem:[#allocation2 + $0x2d] sm:$0xff]
    %v3157 = vld [vmem:[#allocation7 + $0x380] sm:$0xf]
    %v3158 = vld [vmem:[#allocation7 + $0x384] sm:$0xf]
    %v3159 = vld [vmem:[#allocation7 + $0x388] sm:$0xf]
    %v3160 = vld [vmem:[#allocation7 + $0x38c] sm:$0xf]
    %v3161 = vld [vmem:[#allocation7 + $0x390] sm:$0xf]
    %v3162 = vld [vmem:[#allocation7 + $0x394] sm:$0xf]
    %v3163 = vld [vmem:[#allocation7 + $0x398] sm:$0xf]
    %v3164 = vld [vmem:[#allocation7 + $0x39c] sm:$0xf]
    %v3165 = vld [vmem:[#allocation7 + $0x3a0] sm:$0xf]
    %v3166 = vld [vmem:[#allocation7 + $0x3a4] sm:$0xf]
    %v3167 = vld [vmem:[#allocation7 + $0x3a8] sm:$0xf]
    %v3168 = vld [vmem:[#allocation7 + $0x3ac] sm:$0xf]
    %v3169 = vld [vmem:[#allocation7 + $0x3b0] sm:$0xf]
    %v3170 = vld [vmem:[#allocation7 + $0x3b4] sm:$0xf]
    %v3171 = vld [vmem:[#allocation7 + $0x3b8] sm:$0xf]
    %v3172 = vld [vmem:[#allocation7 + $0x3bc] sm:$0xf]
    %v3173 = vpack.c.bf16 %v3154, %v3153
    %v3174 = vpack.c.bf16 %v3156, %v3155
    %v3191 = vunpack.c.l.b16 %v3157
    %v3192 = vunpack.c.l.b16 %v3158
    %v3193 = vunpack.c.l.b16 %v3159
    %v3194 = vunpack.c.l.b16 %v3160
    %v3195 = vunpack.c.l.b16 %v3161
    %v3196 = vunpack.c.l.b16 %v3162
    %v3197 = vunpack.c.l.b16 %v3163
    %v3198 = vunpack.c.l.b16 %v3164
    %v3199 = vunpack.c.l.b16 %v3165
    %v3200 = vunpack.c.l.b16 %v3166
    %v3201 = vunpack.c.l.b16 %v3167
    %v3202 = vunpack.c.l.b16 %v3168
    %v3203 = vunpack.c.l.b16 %v3169
    %v3204 = vunpack.c.l.b16 %v3170
    %v3205 = vunpack.c.l.b16 %v3171
    %v3206 = vunpack.c.l.b16 %v3172
    %v3207 = vpack.c.b16 %v3192, %v3191
    %v3208 = vpack.c.b16 %v3194, %v3193
    %v3209 = vpack.c.b16 %v3196, %v3195
    %v3210 = vpack.c.b16 %v3198, %v3197
    %v3211 = vpack.c.b16 %v3200, %v3199
    %v3212 = vpack.c.b16 %v3202, %v3201
    %v3213 = vpack.c.b16 %v3204, %v3203
    %v3214 = vpack.c.b16 %v3206, %v3205
    %3223 = vmatprep.subr.bf16.mxu0 0
    %3224 = vmatpush1.bf16.msra.mxu0 %v3207
    %3225 = vmatprep.subr.bf16.mxu0 0
    %3226 = vmatpush1.bf16.msra.mxu0 %v3208
    %3227 = vmatprep.subr.bf16.mxu0 0
    %3228 = vmatpush1.bf16.msra.mxu0 %v3209
    %3229 = vmatprep.subr.bf16.mxu0 0
    %3230 = vmatpush1.bf16.msra.mxu0 %v3210
    %3231 = vmatprep.subr.bf16.mxu0 0
    %3232 = vmatpush1.bf16.msra.mxu0 %v3211
    %3233 = vmatprep.subr.bf16.mxu0 0
    %3234 = vmatpush1.bf16.msra.mxu0 %v3212
    %3235 = vmatprep.subr.bf16.mxu0 0
    %3236 = vmatpush1.bf16.msra.mxu0 %v3213
    %3237 = vmatprep.subr.bf16.mxu0 0
    %3238 = vmatpush1.bf16.msra.mxu0 %v3214
    %3239 = vmatprep.subr.bf16.mxu0 0
    %3240 = vmatpush1.bf16.msra.mxu0 0
    %3241 = vmatprep.subr.bf16.mxu0 0
    %3242 = vmatpush1.bf16.msra.mxu0 0
    %3243 = vmatprep.subr.bf16.mxu0 0
    %3244 = vmatpush1.bf16.msra.mxu0 0
    %3245 = vmatprep.subr.bf16.mxu0 0
    %3246 = vmatpush1.bf16.msra.mxu0 0
    %3247 = vmatprep.subr.bf16.mxu0 0
    %3248 = vmatpush1.bf16.msra.mxu0 0
    %3249 = vmatprep.subr.bf16.mxu0 0
    %3250 = vmatpush1.bf16.msra.mxu0 0
    %3251 = vmatprep.subr.bf16.mxu0 0
    %3252 = vmatpush1.bf16.msra.mxu0 0
    %3253 = vmatprep.subr.bf16.mxu0 0
    %3254 = vmatpush1.bf16.msra.mxu0 0
    %3255 = vmatprep.mubr.bf16.mxu0 0
    %3256 = vmatmul.mubr.bf16.gmra.mrb[0].mxu0 %v3173
    %v3257 = vpop.f32.mrb[0].mxu0
    %v3258 = vadd.f32 0.0, %v3257
    %v3259 = vpop.f32.mrb[0].mxu0
    %v3260 = vpop.f32.mrb[0].mxu0
    %v3261 = vadd.f32 0.0, %v3260
    %v3262 = vpop.f32.mrb[0].mxu0
    %3263 = vmatprep.mubr.bf16.mxu0 0
    %3264 = vmatmul.mubr.bf16.gmra.mrb[0].mxu0 %v3174
    %v3265 = vpop.f32.mrb[0].mxu0
    %v3266 = vadd.f32 0.0, %v3265
    %v3267 = vpop.f32.mrb[0].mxu0
    %v3268 = vpop.f32.mrb[0].mxu0
    %v3269 = vadd.f32 0.0, %v3268
    %v3270 = vpop.f32.mrb[0].mxu0
    %3271 = vdwg.mxu0
    %v3272 = vadd.f32 %v3149, %v3258
    %v3273 = vadd.f32 %v3150, %v3261
    %v3274 = vadd.f32 %v3151, %v3266
    %v3275 = vadd.f32 %v3152, %v3269
    %v3276 = vld [vmem:[#allocation2 + $0x6] sm:$0xff]
    %v3277 = vld [vmem:[#allocation2 + $0xe] sm:$0xff]
    %v3278 = vld [vmem:[#allocation2 + $0x26] sm:$0xff]
    %v3279 = vld [vmem:[#allocation2 + $0x2e] sm:$0xff]
    %v3280 = vld [vmem:[#allocation7 + $0x3c0] sm:$0xf]
    %v3281 = vld [vmem:[#allocation7 + $0x3c4] sm:$0xf]
    %v3282 = vld [vmem:[#allocation7 + $0x3c8] sm:$0xf]
    %v3283 = vld [vmem:[#allocation7 + $0x3cc] sm:$0xf]
    %v3284 = vld [vmem:[#allocation7 + $0x3d0] sm:$0xf]
    %v3285 = vld [vmem:[#allocation7 + $0x3d4] sm:$0xf]
    %v3286 = vld [vmem:[#allocation7 + $0x3d8] sm:$0xf]
    %v3287 = vld [vmem:[#allocation7 + $0x3dc] sm:$0xf]
    %v3288 = vld [vmem:[#allocation7 + $0x3e0] sm:$0xf]
    %v3289 = vld [vmem:[#allocation7 + $0x3e4] sm:$0xf]
    %v3290 = vld [vmem:[#allocation7 + $0x3e8] sm:$0xf]
    %v3291 = vld [vmem:[#allocation7 + $0x3ec] sm:$0xf]
    %v3292 = vld [vmem:[#allocation7 + $0x3f0] sm:$0xf]
    %v3293 = vld [vmem:[#allocation7 + $0x3f4] sm:$0xf]
    %v3294 = vld [vmem:[#allocation7 + $0x3f8] sm:$0xf]
    %v3295 = vld [vmem:[#allocation7 + $0x3fc] sm:$0xf]
    %v3296 = vpack.c.bf16 %v3277, %v3276
    %v3297 = vpack.c.bf16 %v3279, %v3278
    %v3314 = vunpack.c.l.b16 %v3280
    %v3315 = vunpack.c.l.b16 %v3281
    %v3316 = vunpack.c.l.b16 %v3282
    %v3317 = vunpack.c.l.b16 %v3283
    %v3318 = vunpack.c.l.b16 %v3284
    %v3319 = vunpack.c.l.b16 %v3285
    %v3320 = vunpack.c.l.b16 %v3286
    %v3321 = vunpack.c.l.b16 %v3287
    %v3322 = vunpack.c.l.b16 %v3288
    %v3323 = vunpack.c.l.b16 %v3289
    %v3324 = vunpack.c.l.b16 %v3290
    %v3325 = vunpack.c.l.b16 %v3291
    %v3326 = vunpack.c.l.b16 %v3292
    %v3327 = vunpack.c.l.b16 %v3293
    %v3328 = vunpack.c.l.b16 %v3294
    %v3329 = vunpack.c.l.b16 %v3295
    %v3330 = vpack.c.b16 %v3315, %v3314
    %v3331 = vpack.c.b16 %v3317, %v3316
    %v3332 = vpack.c.b16 %v3319, %v3318
    %v3333 = vpack.c.b16 %v3321, %v3320
    %v3334 = vpack.c.b16 %v3323, %v3322
    %v3335 = vpack.c.b16 %v3325, %v3324
    %v3336 = vpack.c.b16 %v3327, %v3326
    %v3337 = vpack.c.b16 %v3329, %v3328
    %3346 = vmatprep.subr.bf16.mxu0 0
    %3347 = vmatpush1.bf16.msra.mxu0 %v3330
    %3348 = vmatprep.subr.bf16.mxu0 0
    %3349 = vmatpush1.bf16.msra.mxu0 %v3331
    %3350 = vmatprep.subr.bf16.mxu0 0
    %3351 = vmatpush1.bf16.msra.mxu0 %v3332
    %3352 = vmatprep.subr.bf16.mxu0 0
    %3353 = vmatpush1.bf16.msra.mxu0 %v3333
    %3354 = vmatprep.subr.bf16.mxu0 0
    %3355 = vmatpush1.bf16.msra.mxu0 %v3334
    %3356 = vmatprep.subr.bf16.mxu0 0
    %3357 = vmatpush1.bf16.msra.mxu0 %v3335
    %3358 = vmatprep.subr.bf16.mxu0 0
    %3359 = vmatpush1.bf16.msra.mxu0 %v3336
    %3360 = vmatprep.subr.bf16.mxu0 0
    %3361 = vmatpush1.bf16.msra.mxu0 %v3337
    %3362 = vmatprep.subr.bf16.mxu0 0
    %3363 = vmatpush1.bf16.msra.mxu0 0
    %3364 = vmatprep.subr.bf16.mxu0 0
    %3365 = vmatpush1.bf16.msra.mxu0 0
    %3366 = vmatprep.subr.bf16.mxu0 0
    %3367 = vmatpush1.bf16.msra.mxu0 0
    %3368 = vmatprep.subr.bf16.mxu0 0
    %3369 = vmatpush1.bf16.msra.mxu0 0
    %3370 = vmatprep.subr.bf16.mxu0 0
    %3371 = vmatpush1.bf16.msra.mxu0 0
    %3372 = vmatprep.subr.bf16.mxu0 0
    %3373 = vmatpush1.bf16.msra.mxu0 0
    %3374 = vmatprep.subr.bf16.mxu0 0
    %3375 = vmatpush1.bf16.msra.mxu0 0
    %3376 = vmatprep.subr.bf16.mxu0 0
    %3377 = vmatpush1.bf16.msra.mxu0 0
    %3378 = vmatprep.mubr.bf16.mxu0 0
    %3379 = vmatmul.mubr.bf16.gmra.mrb[0].mxu0 %v3296
    %v3380 = vpop.f32.mrb[0].mxu0
    %v3381 = vadd.f32 0.0, %v3380
    %v3382 = vpop.f32.mrb[0].mxu0
    %v3383 = vpop.f32.mrb[0].mxu0
    %v3384 = vadd.f32 0.0, %v3383
    %v3385 = vpop.f32.mrb[0].mxu0
    %3386 = vmatprep.mubr.bf16.mxu0 0
    %3387 = vmatmul.mubr.bf16.gmra.mrb[0].mxu0 %v3297
    %v3388 = vpop.f32.mrb[0].mxu0
    %v3389 = vadd.f32 0.0, %v3388
    %v3390 = vpop.f32.mrb[0].mxu0
    %v3391 = vpop.f32.mrb[0].mxu0
    %v3392 = vadd.f32 0.0, %v3391
    %v3393 = vpop.f32.mrb[0].mxu0
    %3394 = vdwg.mxu0
    %v3395 = vadd.f32 %v3272, %v3381
    %v3396 = vadd.f32 %v3273, %v3384
    %v3397 = vadd.f32 %v3274, %v3389
    %v3398 = vadd.f32 %v3275, %v3392
    %v3399 = vld [vmem:[#allocation2 + $0x7] sm:$0xff]
    %v3400 = vld [vmem:[#allocation2 + $0xf] sm:$0xff]
    %v3401 = vld [vmem:[#allocation2 + $0x27] sm:$0xff]
    %v3402 = vld [vmem:[#allocation2 + $0x2f] sm:$0xff]
    %v3403 = vld [vmem:[#allocation7 + $0x400] sm:$0xf]
    %v3404 = vld [vmem:[#allocation7 + $0x404] sm:$0xf]
    %v3405 = vld [vmem:[#allocation7 + $0x408] sm:$0xf]
    %v3406 = vld [vmem:[#allocation7 + $0x40c] sm:$0xf]
    %v3407 = vld [vmem:[#allocation7 + $0x410] sm:$0xf]
    %v3408 = vld [vmem:[#allocation7 + $0x414] sm:$0xf]
    %v3409 = vld [vmem:[#allocation7 + $0x418] sm:$0xf]
    %v3410 = vld [vmem:[#allocation7 + $0x41c] sm:$0xf]
    %v3411 = vld [vmem:[#allocation7 + $0x420] sm:$0xf]
    %v3412 = vld [vmem:[#allocation7 + $0x424] sm:$0xf]
    %v3413 = vld [vmem:[#allocation7 + $0x428] sm:$0xf]
    %v3414 = vld [vmem:[#allocation7 + $0x42c] sm:$0xf]
    %v3415 = vld [vmem:[#allocation7 + $0x430] sm:$0xf]
    %v3416 = vld [vmem:[#allocation7 + $0x434] sm:$0xf]
    %v3417 = vld [vmem:[#allocation7 + $0x438] sm:$0xf]
    %v3418 = vld [vmem:[#allocation7 + $0x43c] sm:$0xf]
    %v3419 = vpack.c.bf16 %v3400, %v3399
    %v3420 = vpack.c.bf16 %v3402, %v3401
    %v3437 = vunpack.c.l.b16 %v3403
    %v3438 = vunpack.c.l.b16 %v3404
    %v3439 = vunpack.c.l.b16 %v3405
    %v3440 = vunpack.c.l.b16 %v3406
    %v3441 = vunpack.c.l.b16 %v3407
    %v3442 = vunpack.c.l.b16 %v3408
    %v3443 = vunpack.c.l.b16 %v3409
    %v3444 = vunpack.c.l.b16 %v3410
    %v3445 = vunpack.c.l.b16 %v3411
    %v3446 = vunpack.c.l.b16 %v3412
    %v3447 = vunpack.c.l.b16 %v3413
    %v3448 = vunpack.c.l.b16 %v3414
    %v3449 = vunpack.c.l.b16 %v3415
    %v3450 = vunpack.c.l.b16 %v3416
    %v3451 = vunpack.c.l.b16 %v3417
    %v3452 = vunpack.c.l.b16 %v3418
    %v3453 = vpack.c.b16 %v3438, %v3437
    %v3454 = vpack.c.b16 %v3440, %v3439
    %v3455 = vpack.c.b16 %v3442, %v3441
    %v3456 = vpack.c.b16 %v3444, %v3443
    %v3457 = vpack.c.b16 %v3446, %v3445
    %v3458 = vpack.c.b16 %v3448, %v3447
    %v3459 = vpack.c.b16 %v3450, %v3449
    %v3460 = vpack.c.b16 %v3452, %v3451
    %3469 = vmatprep.subr.bf16.mxu0 0
    %3470 = vmatpush1.bf16.msra.mxu0 %v3453
    %3471 = vmatprep.subr.bf16.mxu0 0
    %3472 = vmatpush1.bf16.msra.mxu0 %v3454
    %3473 = vmatprep.subr.bf16.mxu0 0
    %3474 = vmatpush1.bf16.msra.mxu0 %v3455
    %3475 = vmatprep.subr.bf16.mxu0 0
    %3476 = vmatpush1.bf16.msra.mxu0 %v3456
    %3477 = vmatprep.subr.bf16.mxu0 0
    %3478 = vmatpush1.bf16.msra.mxu0 %v3457
    %3479 = vmatprep.subr.bf16.mxu0 0
    %3480 = vmatpush1.bf16.msra.mxu0 %v3458
    %3481 = vmatprep.subr.bf16.mxu0 0
    %3482 = vmatpush1.bf16.msra.mxu0 %v3459
    %3483 = vmatprep.subr.bf16.mxu0 0
    %3484 = vmatpush1.bf16.msra.mxu0 %v3460
    %3485 = vmatprep.subr.bf16.mxu0 0
    %3486 = vmatpush1.bf16.msra.mxu0 0
    %3487 = vmatprep.subr.bf16.mxu0 0
    %3488 = vmatpush1.bf16.msra.mxu0 0
    %3489 = vmatprep.subr.bf16.mxu0 0
    %3490 = vmatpush1.bf16.msra.mxu0 0
    %3491 = vmatprep.subr.bf16.mxu0 0
    %3492 = vmatpush1.bf16.msra.mxu0 0
    %3493 = vmatprep.subr.bf16.mxu0 0
    %3494 = vmatpush1.bf16.msra.mxu0 0
    %3495 = vmatprep.subr.bf16.mxu0 0
    %3496 = vmatpush1.bf16.msra.mxu0 0
    %3497 = vmatprep.subr.bf16.mxu0 0
    %3498 = vmatpush1.bf16.msra.mxu0 0
    %3499 = vmatprep.subr.bf16.mxu0 0
    %3500 = vmatpush1.bf16.msra.mxu0 0
    %3501 = vmatprep.mubr.bf16.mxu0 0
    %3502 = vmatmul.mubr.bf16.gmra.mrb[0].mxu0 %v3419
    %v3503 = vpop.f32.mrb[0].mxu0
    %v3504 = vadd.f32 0.0, %v3503
    %v3505 = vpop.f32.mrb[0].mxu0
    %v3506 = vpop.f32.mrb[0].mxu0
    %v3507 = vadd.f32 0.0, %v3506
    %v3508 = vpop.f32.mrb[0].mxu0
    %3509 = vmatprep.mubr.bf16.mxu0 0
    %3510 = vmatmul.mubr.bf16.gmra.mrb[0].mxu0 %v3420
    %v3511 = vpop.f32.mrb[0].mxu0
    %v3512 = vadd.f32 0.0, %v3511
    %v3513 = vpop.f32.mrb[0].mxu0
    %v3514 = vpop.f32.mrb[0].mxu0
    %v3515 = vadd.f32 0.0, %v3514
    %v3516 = vpop.f32.mrb[0].mxu0
    %3517 = vdwg.mxu0
    %v3518 = vadd.f32 %v3395, %v3504
    %v3519 = vadd.f32 %v3396, %v3507
    %v3520 = vadd.f32 %v3397, %v3512
    %v3521 = vadd.f32 %v3398, %v3515
    %v3522 = vld [vmem:[#allocation2 + $0x8] sm:$0xff]
    %v3523 = vld [vmem:[#allocation2 + $0x10] sm:$0xff]
    %v3524 = vld [vmem:[#allocation2 + $0x28] sm:$0xff]
    %v3525 = vld [vmem:[#allocation2 + $0x30] sm:$0xff]
    %v3526 = vld [vmem:[#allocation7 + $0x440] sm:$0xf]
    %v3527 = vld [vmem:[#allocation7 + $0x444] sm:$0xf]
    %v3528 = vld [vmem:[#allocation7 + $0x448] sm:$0xf]
    %v3529 = vld [vmem:[#allocation7 + $0x44c] sm:$0xf]
    %v3530 = vld [vmem:[#allocation7 + $0x450] sm:$0xf]
    %v3531 = vld [vmem:[#allocation7 + $0x454] sm:$0xf]
    %v3532 = vld [vmem:[#allocation7 + $0x458] sm:$0xf]
    %v3533 = vld [vmem:[#allocation7 + $0x45c] sm:$0xf]
    %v3534 = vld [vmem:[#allocation7 + $0x460] sm:$0xf]
    %v3535 = vld [vmem:[#allocation7 + $0x464] sm:$0xf]
    %v3536 = vld [vmem:[#allocation7 + $0x468] sm:$0xf]
    %v3537 = vld [vmem:[#allocation7 + $0x46c] sm:$0xf]
    %v3538 = vld [vmem:[#allocation7 + $0x470] sm:$0xf]
    %v3539 = vld [vmem:[#allocation7 + $0x474] sm:$0xf]
    %v3540 = vld [vmem:[#allocation7 + $0x478] sm:$0xf]
    %v3541 = vld [vmem:[#allocation7 + $0x47c] sm:$0xf]
    %v3542 = vpack.c.bf16 %v3523, %v3522
    %v3543 = vpack.c.bf16 %v3525, %v3524
    %v3560 = vunpack.c.l.b16 %v3526
    %v3561 = vunpack.c.l.b16 %v3527
    %v3562 = vunpack.c.l.b16 %v3528
    %v3563 = vunpack.c.l.b16 %v3529
    %v3564 = vunpack.c.l.b16 %v3530
    %v3565 = vunpack.c.l.b16 %v3531
    %v3566 = vunpack.c.l.b16 %v3532
    %v3567 = vunpack.c.l.b16 %v3533
    %v3568 = vunpack.c.l.b16 %v3534
    %v3569 = vunpack.c.l.b16 %v3535
    %v3570 = vunpack.c.l.b16 %v3536
    %v3571 = vunpack.c.l.b16 %v3537
    %v3572 = vunpack.c.l.b16 %v3538
    %v3573 = vunpack.c.l.b16 %v3539
    %v3574 = vunpack.c.l.b16 %v3540
    %v3575 = vunpack.c.l.b16 %v3541
    %v3576 = vpack.c.b16 %v3561, %v3560
    %v3577 = vpack.c.b16 %v3563, %v3562
    %v3578 = vpack.c.b16 %v3565, %v3564
    %v3579 = vpack.c.b16 %v3567, %v3566
    %v3580 = vpack.c.b16 %v3569, %v3568
    %v3581 = vpack.c.b16 %v3571, %v3570
    %v3582 = vpack.c.b16 %v3573, %v3572
    %v3583 = vpack.c.b16 %v3575, %v3574
    %3592 = vmatprep.subr.bf16.mxu0 0
    %3593 = vmatpush1.bf16.msra.mxu0 %v3576
    %3594 = vmatprep.subr.bf16.mxu0 0
    %3595 = vmatpush1.bf16.msra.mxu0 %v3577
    %3596 = vmatprep.subr.bf16.mxu0 0
    %3597 = vmatpush1.bf16.msra.mxu0 %v3578
    %3598 = vmatprep.subr.bf16.mxu0 0
    %3599 = vmatpush1.bf16.msra.mxu0 %v3579
    %3600 = vmatprep.subr.bf16.mxu0 0
    %3601 = vmatpush1.bf16.msra.mxu0 %v3580
    %3602 = vmatprep.subr.bf16.mxu0 0
    %3603 = vmatpush1.bf16.msra.mxu0 %v3581
    %3604 = vmatprep.subr.bf16.mxu0 0
    %3605 = vmatpush1.bf16.msra.mxu0 %v3582
    %3606 = vmatprep.subr.bf16.mxu0 0
    %3607 = vmatpush1.bf16.msra.mxu0 %v3583
    %3608 = vmatprep.subr.bf16.mxu0 0
    %3609 = vmatpush1.bf16.msra.mxu0 0
    %3610 = vmatprep.subr.bf16.mxu0 0
    %3611 = vmatpush1.bf16.msra.mxu0 0
    %3612 = vmatprep.subr.bf16.mxu0 0
    %3613 = vmatpush1.bf16.msra.mxu0 0
    %3614 = vmatprep.subr.bf16.mxu0 0
    %3615 = vmatpush1.bf16.msra.mxu0 0
    %3616 = vmatprep.subr.bf16.mxu0 0
    %3617 = vmatpush1.bf16.msra.mxu0 0
    %3618 = vmatprep.subr.bf16.mxu0 0
    %3619 = vmatpush1.bf16.msra.mxu0 0
    %3620 = vmatprep.subr.bf16.mxu0 0
    %3621 = vmatpush1.bf16.msra.mxu0 0
    %3622 = vmatprep.subr.bf16.mxu0 0
    %3623 = vmatpush1.bf16.msra.mxu0 0
    %3624 = vmatprep.mubr.bf16.mxu0 0
    %3625 = vmatmul.mubr.bf16.gmra.mrb[0].mxu0 %v3542
    %v3626 = vpop.f32.mrb[0].mxu0
    %v3627 = vadd.f32 0.0, %v3626
    %v3628 = vpop.f32.mrb[0].mxu0
    %v3629 = vpop.f32.mrb[0].mxu0
    %v3630 = vadd.f32 0.0, %v3629
    %v3631 = vpop.f32.mrb[0].mxu0
    %3632 = vmatprep.mubr.bf16.mxu0 0
    %3633 = vmatmul.mubr.bf16.gmra.mrb[0].mxu0 %v3543
    %v3634 = vpop.f32.mrb[0].mxu0
    %v3635 = vadd.f32 0.0, %v3634
    %v3636 = vpop.f32.mrb[0].mxu0
    %v3637 = vpop.f32.mrb[0].mxu0
    %v3638 = vadd.f32 0.0, %v3637
    %v3639 = vpop.f32.mrb[0].mxu0
    %3640 = vdwg.mxu0
    %v3641 = vadd.f32 %v3518, %v3627
    %v3642 = vadd.f32 %v3519, %v3630
    %v3643 = vadd.f32 %v3520, %v3635
    %v3644 = vadd.f32 %v3521, %v3638
    %v3645 = vadd.f32 %v3641, %v3642
    %v3646 = vadd.f32 %v3645, %v3643
    %v3647 = vadd.f32 %v3646, %v3644
    %v3648 = vrot.slane %v3647, 4
    %v3649 = vadd.f32 %v3647, %v3648
    %v3650 = vrot.slane %v3649, 2
    %v3651 = vadd.f32 %v3649, %v3650
    %v3652 = vrot.slane %v3651, 1
    %v3653 = vadd.f32 %v3651, %v3652
    %v3654 = vmul.f32 %v3653, 0.03125
    %v3655 = vmul.f32 %v3641, %v3641
    %v3656 = vmul.f32 %v3642, %v3642
    %v3657 = vmul.f32 %v3643, %v3643
    %v3658 = vmul.f32 %v3644, %v3644
    %v3659 = vadd.f32 %v3655, %v3656
    %v3660 = vadd.f32 %v3659, %v3657
    %v3661 = vadd.f32 %v3660, %v3658
    %v3662 = vrot.slane %v3661, 4
    %v3663 = vadd.f32 %v3661, %v3662
    %v3664 = vrot.slane %v3663, 2
    %v3665 = vadd.f32 %v3663, %v3664
    %v3666 = vrot.slane %v3665, 1
    %v3667 = vadd.f32 %v3665, %v3666
    %v3668 = vmul.f32 %v3667, 0.03125
    %v3669 = vmul.f32 %v3654, %v3654
    %v3670 = vsub.f32 %v3668, %v3669
    %v3671 = vmax.f32 %v3670, 0.0
    %v3672 = vadd.f32 %v3671, 1e-05
    %v3673 = vrsqrt.pop %v3672
    %v3674 = vmul.f32 %v71, %v3673
    %v3675 = vlaneseq
    %v3676 = vshrl.u32 %v3675, 7
    %v3677 = vsub.s32 4, %v3676
    %v3678 = vrot.slane %v3674, %v3677
    %v3679 = vmul.f32 %v3641, %v3678
    %v3680 = vmul.f32 %v3642, %v3678
    %v3681 = vmul.f32 %v3643, %v3678
    %v3682 = vmul.f32 %v3644, %v3678
    %v3683 = vmul.f32 %v3654, %v3674
    %v3685 = vrot.slane %v3683, 7
    %v3687 = vsub.f32 %v71, %v3685
    %v3688 = vlaneseq
    %v3689 = vshrl.u32 %v3688, 7
    %v3690 = vsub.s32 5, %v3689
    %v3691 = vrot.slane %v3687, %v3690
    %v3692 = vadd.f32 %v3679, %v3691
    %v3693 = vadd.f32 %v3680, %v3691
    %v3694 = vadd.f32 %v3681, %v3691
    %v3695 = vadd.f32 %v3682, %v3691
    %v3696 = vadd.f32 %v3692, %v1380
    %v3697 = vadd.f32 %v3693, %v1381
    %v3698 = vadd.f32 %v3694, %v1382
    %v3699 = vadd.f32 %v3695, %v1383
    %v3700 = vmax.f32 %v3696, 0.0
    %v3701 = vmax.f32 %v3697, 0.0
    %v3702 = vmax.f32 %v3698, 0.0
    %v3703 = vmax.f32 %v3699, 0.0
    %3704 = vxpose.xlu0.b32.start [1/16] %v3700, 128
    %3705 = vxpose.xlu0.b32.cont [2/16] %v3701, 128
    %3706 = vxpose.xlu0.b32.cont [3/16] 0.0, 128
    %3707 = vxpose.xlu0.b32.cont [4/16] 0.0, 128
    %3708 = vxpose.xlu0.b32.cont [5/16] 0.0, 128
    %3709 = vxpose.xlu0.b32.cont [6/16] 0.0, 128
    %3710 = vxpose.xlu0.b32.cont [7/16] 0.0, 128
    %3711 = vxpose.xlu0.b32.cont [8/16] 0.0, 128
    %3712 = vxpose.xlu0.b32.cont [9/16] 0.0, 128
    %3713 = vxpose.xlu0.b32.cont [10/16] 0.0, 128
    %3714 = vxpose.xlu0.b32.cont [11/16] 0.0, 128
    %3715 = vxpose.xlu0.b32.cont [12/16] 0.0, 128
    %3716 = vxpose.xlu0.b32.cont [13/16] 0.0, 128
    %3717 = vxpose.xlu0.b32.cont [14/16] 0.0, 128
    %3718 = vxpose.xlu0.b32.cont [15/16] 0.0, 128
    %3719 = vxpose.xlu0.b32.end [16/16] 0.0, 128
    %v3720 = vpop.trf.xlu0
    %v3721 = vpop.trf.xlu0
    %v3722 = vpop.trf.xlu0
    %v3723 = vpop.trf.xlu0
    %v3724 = vpop.trf.xlu0
    %v3725 = vpop.trf.xlu0
    %v3726 = vpop.trf.xlu0
    %v3727 = vpop.trf.xlu0
    %v3728 = vpop.trf.xlu0
    %v3729 = vpop.trf.xlu0
    %v3730 = vpop.trf.xlu0
    %v3731 = vpop.trf.xlu0
    %v3732 = vpop.trf.xlu0
    %v3733 = vpop.trf.xlu0
    %v3734 = vpop.trf.xlu0
    %v3735 = vpop.trf.xlu0
    %vm3736 = vcmask 130048
    %3737 = vst.msk [vmem:[%s4] sm:$0xff] %vm3736, %v3720
    %3738 = vst.msk [vmem:[%s4 + $0x8] sm:$0xff] %vm3736, %v3721
    %3739 = vst.msk [vmem:[%s4 + $0x10] sm:$0xff] %vm3736, %v3722
    %3740 = vst.msk [vmem:[%s4 + $0x18] sm:$0xff] %vm3736, %v3723
    %3741 = vxpose.xlu0.b32.start [1/16] %v3702, 128
    %3742 = vxpose.xlu0.b32.cont [2/16] %v3703, 128
    %3743 = vxpose.xlu0.b32.cont [3/16] 0.0, 128
    %3744 = vxpose.xlu0.b32.cont [4/16] 0.0, 128
    %3745 = vxpose.xlu0.b32.cont [5/16] 0.0, 128
    %3746 = vxpose.xlu0.b32.cont [6/16] 0.0, 128
    %3747 = vxpose.xlu0.b32.cont [7/16] 0.0, 128
    %3748 = vxpose.xlu0.b32.cont [8/16] 0.0, 128
    %3749 = vxpose.xlu0.b32.cont [9/16] 0.0, 128
    %3750 = vxpose.xlu0.b32.cont [10/16] 0.0, 128
    %3751 = vxpose.xlu0.b32.cont [11/16] 0.0, 128
    %3752 = vxpose.xlu0.b32.cont [12/16] 0.0, 128
    %3753 = vxpose.xlu0.b32.cont [13/16] 0.0, 128
    %3754 = vxpose.xlu0.b32.cont [14/16] 0.0, 128
    %3755 = vxpose.xlu0.b32.cont [15/16] 0.0, 128
    %3756 = vxpose.xlu0.b32.end [16/16] 0.0, 128
    %v3757 = vpop.trf.xlu0
    %v3758 = vpop.trf.xlu0
    %v3759 = vpop.trf.xlu0
    %v3760 = vpop.trf.xlu0
    %v3761 = vpop.trf.xlu0
    %v3762 = vpop.trf.xlu0
    %v3763 = vpop.trf.xlu0
    %v3764 = vpop.trf.xlu0
    %v3765 = vpop.trf.xlu0
    %v3766 = vpop.trf.xlu0
    %v3767 = vpop.trf.xlu0
    %v3768 = vpop.trf.xlu0
    %v3769 = vpop.trf.xlu0
    %v3770 = vpop.trf.xlu0
    %v3771 = vpop.trf.xlu0
    %v3772 = vpop.trf.xlu0
    %s3773 = scalar_lea.vmem %s4, 32
    %3774 = vst.msk [vmem:[%s3773] sm:$0xff] %vm3736, %v3757
    %3775 = vst.msk [vmem:[%s3773 + $0x8] sm:$0xff] %vm3736, %v3758
    %3776 = vst.msk [vmem:[%s3773 + $0x10] sm:$0xff] %vm3736, %v3759
    %3777 = vst.msk [vmem:[%s3773 + $0x18] sm:$0xff] %vm3736, %v3760
    // Predicated region
    $region34: #{block_forward.1} parent=1 // pred_check
      _
    $region35: #{block_forward.1} parent=1 // pred_check_branch
      %3779 = sbr.rel (0) target = $region37
    $region36: #{block_forward.1} parent=1 // pred_region
      _
    $region37: #{block_forward.1} parent=1 // pred_fallthru
      _
    // Predicated region
    $region38: #{block_forward.1} parent=1 // pred_check
      _
    $region39: #{block_forward.1} parent=1 // pred_check_branch
      %3781 = sbr.rel (0) target = $region41
    $region40: #{block_forward.1} parent=1 // pred_region
      _
    $region41: #{block_forward.1} parent=1 // pred_fallthru
      _
    %3782 = vsyncpa [#allocation4], 1
    %3783 = vsyncpa [#allocation6], 1
    %3784 = vsyncpa [#allocation9], 1

</llo_original>
